<compile_context>
chip_gen: v5e
topology: v5e:2x2
jax: 0.10.0
libtpu: 0.0.40
codegen_flags: <defaults>
</compile_context>

<pallas_src>
import math

import jax
import jax.numpy as jnp
from jax.experimental import pallas as pl
from jax.experimental.pallas import tpu as pltpu

# ----------------------------- config (small, deterministic) -----------------
HIDDEN = 32              # config.hidden_size
FFN = 64                 # config.intermediate_size (MLP)
MAMBA_EXPAND = 2         # config.mamba_expand
INTER = MAMBA_EXPAND * HIDDEN            # mamba/attn latent size = 64
N_HEADS = 4              # config.num_attention_heads
N_KV_HEADS = 2           # config.num_key_value_heads
HEAD_DIM = INTER // N_HEADS              # 16
KV_DIM = N_KV_HEADS * HEAD_DIM           # 32
REP = N_HEADS // N_KV_HEADS              # GQA group size = 2
CONV_K = 4               # config.conv_kernel_size
DT_RANK = 8              # config.time_step_rank
SSM_STATE = 16           # config.ssm_state_size
WINDOW = 8               # config.attention_window_size
NUM_META = 4             # config.num_meta_tokens
SEQ = 8                  # input sequence length (before meta tokens)
SEQ_TOT = SEQ + NUM_META                 # 12 tokens inside the block
NUM_LAYERS = 2           # config.num_layers
GLOBAL_LAYERS = (1,)     # config.global_layer_list
MODIFY_MASK = True       # config.modify_attention_mask
USE_POS_EMB = True       # config.use_positional_embedding
ROPE_BASE = 10000.0      # config.rope_base
EPS = 1e-6
PROJ_DIM = INTER + 2 * KV_DIM + INTER    # fused in-proj width = 192


# ----------------------------- in-kernel helpers ------------------------------
def _rms(x, w, eps=EPS):
    var = jnp.mean(x * x, axis=-1, keepdims=True)
    return x * jax.lax.rsqrt(var + eps) * w


def _silu(x):
    return x * jax.lax.logistic(x)


# ----------------------------- fused model kernel -----------------------------
def _fused_hymba_kernel(
    # inputs
    meta_ref, x_ref, mask_ref,
    cos_q_ref, sin_q_ref, cos_k_ref, sin_k_ref, rot_q_ref, rot_k_ref,
    w_in_ref, w_conv_ref, w_x_dt_ref, w_bc_ref, w_dt_ref,
    a_logt_ref, w_out_ref, w_gu_ref, w_down_ref, vec_ref,
    # output
    out_ref,
):
    L = SEQ_TOT
    scale = 1.0 / math.sqrt(HEAD_DIM)

    # [meta ; x_b] -> carried hidden state (register value, no scratch needed).
    x = jnp.concatenate([meta_ref[...], x_ref[0]], axis=0)          # (L, H)

    cos_q = cos_q_ref[...]
    sin_q = sin_q_ref[...]
    cos_k = cos_k_ref[...]
    sin_k = sin_k_ref[...]
    rot_q = rot_q_ref[...]
    rot_k = rot_k_ref[...]

    for li in range(NUM_LAYERS):                                    # static unroll
        vecs = vec_ref[li]                                          # (8, INTER)
        in_ln = vecs[0:1, :HIDDEN]
        pre_mlp_ln = vecs[1:2, :HIDDEN]
        b_conv = vecs[2:3, :]
        b_dt = vecs[3:4, :]
        d_skip = vecs[4:5, :]
        ln_attn = vecs[5:6, :]
        ln_ssm = vecs[6:7, :]

        # ============ Hymba fused block (attention + SSM in parallel) =========
        h = _rms(x, in_ln)                                          # input RMSNorm
        proj = jnp.dot(h, w_in_ref[li], preferred_element_type=jnp.float32)  # (L,192)
        xl = proj[:, :INTER]                                        # shared latent
        k_proj = proj[:, INTER:INTER + KV_DIM]
        v_proj = proj[:, INTER + KV_DIM:INTER + 2 * KV_DIM]
        z_gate = proj[:, INTER + 2 * KV_DIM:]

        # ---- attention branch: RoPE on whole slabs, GQA groups stacked ----
        if USE_POS_EMB:
            q = xl * cos_q + jnp.dot(xl, rot_q,
                                     preferred_element_type=jnp.float32) * sin_q
            k = k_proj * cos_k + jnp.dot(k_proj, rot_k,
                                         preferred_element_type=jnp.float32) * sin_k
        else:
            q, k = xl, k_proj

        mask = mask_ref[li]                                         # (L, L) additive
        mask2 = jnp.concatenate([mask, mask], axis=0)               # (2L, L)

        head_outs = [None] * N_HEADS
        for g in range(N_KV_HEADS):
            kg = k[:, g * HEAD_DIM:(g + 1) * HEAD_DIM]              # (L, 16)
            vg = v_proj[:, g * HEAD_DIM:(g + 1) * HEAD_DIM]         # (L, 16)
            qg = jnp.concatenate(
                [q[:, (2 * g) * HEAD_DIM:(2 * g + 1) * HEAD_DIM],
                 q[:, (2 * g + 1) * HEAD_DIM:(2 * g + 2) * HEAD_DIM]], axis=0)  # (2L,16)
            s = jax.lax.dot_general(qg, kg, (((1,), (1,)), ((), ())),
                                    preferred_element_type=jnp.float32) * scale + mask2
            m = jnp.max(s, axis=-1, keepdims=True)
            p = jnp.exp(s - m)
            p = p * pl.reciprocal(jnp.sum(p, axis=-1, keepdims=True), approx=True)
            og = jnp.dot(p, vg, preferred_element_type=jnp.float32)  # (2L, 16)
            head_outs[2 * g] = og[:L, :]
            head_outs[2 * g + 1] = og[L:, :]
        attn = jnp.concatenate(head_outs, axis=1)                   # (L, INTER)

        # ---- Mamba/SSM branch: causal depthwise conv (shifted adds) ----
        w_conv = w_conv_ref[li]                                     # (K, INTER)
        acc = xl * w_conv[CONV_K - 1:CONV_K, :]
        for sft in range(1, CONV_K):
            shifted = jnp.concatenate(
                [jnp.zeros((sft, INTER), jnp.float32), xl[:L - sft, :]], axis=0)
            acc = acc + shifted * w_conv[CONV_K - 1 - sft:CONV_K - sft, :]
        xc = _silu(acc + b_conv)                                    # (L, INTER)

        dt_r = jnp.dot(xc, w_x_dt_ref[li], preferred_element_type=jnp.float32)  # (L,R)
        delta = jax.nn.softplus(
            jnp.dot(dt_r, w_dt_ref[li], preferred_element_type=jnp.float32) + b_dt)
        # B/C projections produced directly as (2N, L) -> no in-kernel transpose.
        bc = jax.lax.dot_general(w_bc_ref[li], xc, (((1,), (1,)), ((), ())),
                                 preferred_element_type=jnp.float32)           # (2N, L)
        bt = bc[:SSM_STATE, :]
        ct = bc[SSM_STATE:, :]
        a_t = -jnp.exp(a_logt_ref[li])                              # (N, INTER)
        du = delta * xc                                             # (L, INTER)

        # Hoisted off the recurrence chain: transcendentals + B*u products.
        dA = [jnp.exp(delta[t:t + 1, :] * a_t) for t in range(L)]   # (N, INTER) each
        dBu = [du[t:t + 1, :] * bt[:, t:t + 1] for t in range(L)]   # (N, INTER) each

        state = jnp.zeros((SSM_STATE, INTER), jnp.float32)
        y_rows = []
        for t in range(L):                                          # 12-step FMA chain
            state = state * dA[t] + dBu[t]
            # C contraction is off the serial chain (state -> state only via FMA).
            y_rows.append(jnp.sum(state * ct[:, t:t + 1], axis=0, keepdims=True))
        y = jnp.concatenate(y_rows, axis=0) + d_skip * xc           # (L, INTER)
        y = y * _silu(z_gate)                                       # silu(z) output gate

        # ---- per-branch RMSNorm, average, output projection ----
        avg = 0.5 * (_rms(attn, ln_attn) + _rms(y, ln_ssm))
        x = x + jnp.dot(avg, w_out_ref[li], preferred_element_type=jnp.float32)

        # ============ MLP (gated SiLU), fused gate/up matmul ====================
        h2 = _rms(x, pre_mlp_ln)
        gu = jnp.dot(h2, w_gu_ref[li], preferred_element_type=jnp.float32)  # (L, 2*FFN)
        x = x + jnp.dot(_silu(gu[:, :FFN]) * gu[:, FFN:], w_down_ref[li],
                        preferred_element_type=jnp.float32)

    out_ref[0] = x[NUM_META:, :]                                    # strip meta tokens


# ----------------------------- host-side constants ----------------------------
def rope_cos_sin(L, dim, base):
    inv_freq = 1.0 / (base ** (jnp.arange(0, dim, 2, dtype=jnp.float32) / dim))
    t = jnp.arange(L, dtype=jnp.float32)
    freqs = jnp.outer(t, inv_freq)
    emb = jnp.concatenate([freqs, freqs], axis=-1)
    return jnp.cos(emb), jnp.sin(emb)                               # (L, dim)


def rotate_half_matrix(n_heads, head_dim):
    # y = x @ R  ==  per-head rotate_half(x) = [-x2, x1]
    half = head_dim // 2
    r = jnp.zeros((head_dim, head_dim), jnp.float32)
    r = r.at[jnp.arange(half) + half, jnp.arange(half)].set(-1.0)
    r = r.at[jnp.arange(half), jnp.arange(half) + half].set(1.0)
    return jnp.kron(jnp.eye(n_heads, dtype=jnp.float32), r)


def build_mask(L, window, modify, num_meta):
    i = jnp.arange(L)[:, None]
    j = jnp.arange(L)[None, :]
    allowed = j <= i
    if window is not None:
        win = (i - j) < window
        if modify:
            win = win | (j < num_meta)                              # meta tokens always visible
        allowed = allowed & win
    return jnp.where(allowed, 0.0, -1e30).astype(jnp.float32)


# ----------------------------- wrapper ----------------------------------------
def simplified_hymba(x, params):
    B = x.shape[0]
    L = SEQ_TOT
    p = params

    cos, sin = rope_cos_sin(L, HEAD_DIM, ROPE_BASE)
    cos_q = jnp.tile(cos, (1, N_HEADS))                             # (L, INTER)
    sin_q = jnp.tile(sin, (1, N_HEADS))
    cos_k = jnp.tile(cos, (1, N_KV_HEADS))                          # (L, KV_DIM)
    sin_k = jnp.tile(sin, (1, N_KV_HEADS))
    rot_q = rotate_half_matrix(N_HEADS, HEAD_DIM)                   # (INTER, INTER)
    rot_k = rotate_half_matrix(N_KV_HEADS, HEAD_DIM)                # (KV_DIM, KV_DIM)

    masks = []
    for li in range(NUM_LAYERS):
        is_global = li in GLOBAL_LAYERS
        window = None if is_global else WINDOW
        modify = MODIFY_MASK and not is_global
        masks.append(build_mask(L, window, modify, NUM_META))
    mask = jnp.stack(masks, axis=0)                                 # (nl, L, L)

    pad_h = INTER - HIDDEN
    vecs = jnp.concatenate([
        jnp.pad(p["in_ln"], ((0, 0), (0, 0), (0, pad_h))),
        jnp.pad(p["pre_mlp_ln"], ((0, 0), (0, 0), (0, pad_h))),
        p["b_conv"], p["b_dt"], p["D"], p["ln_attn"], p["ln_ssm"],
        jnp.zeros((NUM_LAYERS, 1, INTER), jnp.float32),
    ], axis=1)                                                      # (nl, 8, INTER)
    w_bc = jnp.concatenate([p["W_x_bt"], p["W_x_ct"]], axis=1)      # (nl, 2N, INTER)
    w_gu = jnp.concatenate([p["W_gate"], p["W_up"]], axis=-1)       # (nl, H, 2*FFN)

    in_arrays = (p["meta"], x, mask,
                 cos_q, sin_q, cos_k, sin_k, rot_q, rot_k,
                 p["W_in"], p["W_conv"], p["W_x_dt"], w_bc, p["W_dt"],
                 p["A_logT"], p["W_out"], w_gu, p["W_down"], vecs)

    def const_full(arr):
        nd = arr.ndim
        return pl.BlockSpec(arr.shape, lambda b, _n=nd: (0,) * _n)

    in_specs = [const_full(in_arrays[0]),
                pl.BlockSpec((1, SEQ, HIDDEN), lambda b: (b, 0, 0))]
    in_specs += [const_full(a) for a in in_arrays[2:]]

    return pl.pallas_call(
        _fused_hymba_kernel,
        out_shape=jax.ShapeDtypeStruct((B, SEQ, HIDDEN), jnp.float32),
        grid=(B,),
        in_specs=in_specs,
        out_specs=pl.BlockSpec((1, SEQ, HIDDEN), lambda b: (b, 0, 0)),
        compiler_params=pltpu.CompilerParams(
            dimension_semantics=("parallel",)),
    )(*in_arrays)


# ----------------------------- deterministic parameter init ------------------
def init_params(key):
    keys = iter(jax.random.split(key, 64))

    def nrm(shape, scale=0.02):
        return (scale * jax.random.normal(next(keys), shape)).astype(jnp.float32)

    nl = NUM_LAYERS
    a_logt = jnp.broadcast_to(
        jnp.log(jnp.arange(1, SSM_STATE + 1, dtype=jnp.float32))[None, :, None],
        (nl, SSM_STATE, INTER)).astype(jnp.float32)
    return dict(
        meta=jax.random.normal(next(keys), (NUM_META, HIDDEN)).astype(jnp.float32),
        in_ln=jnp.ones((nl, 1, HIDDEN), jnp.float32),
        W_in=nrm((nl, HIDDEN, PROJ_DIM)),
        W_conv=nrm((nl, CONV_K, INTER), 0.1),
        b_conv=jnp.zeros((nl, 1, INTER), jnp.float32),
        W_x_dt=nrm((nl, INTER, DT_RANK)),
        W_x_bt=nrm((nl, SSM_STATE, INTER)),        # stored transposed: (N, INTER)
        W_x_ct=nrm((nl, SSM_STATE, INTER)),        # stored transposed: (N, INTER)
        W_dt=nrm((nl, DT_RANK, INTER), 0.1),
        b_dt=jnp.zeros((nl, 1, INTER), jnp.float32),
        A_logT=a_logt,                             # stored transposed: (N, INTER)
        D=jnp.ones((nl, 1, INTER), jnp.float32),
        ln_attn=jnp.ones((nl, 1, INTER), jnp.float32),
        ln_ssm=jnp.ones((nl, 1, INTER), jnp.float32),
        W_out=nrm((nl, INTER, HIDDEN)),
        pre_mlp_ln=jnp.ones((nl, 1, HIDDEN), jnp.float32),
        W_gate=nrm((nl, HIDDEN, FFN)),
        W_up=nrm((nl, HIDDEN, FFN)),
        W_down=nrm((nl, FFN, HIDDEN)),
    )


# ----------------------------- main -------------------------------------------
if __name__ == "__main__":
    root = jax.random.PRNGKey(0)
    pkey, xkey = jax.random.split(root)
    params = init_params(pkey)
    x = jax.random.normal(xkey, (2, SEQ, HIDDEN), dtype=jnp.float32)

    out = jax.jit(simplified_hymba)(x, params)
    out = jax.block_until_ready(out)

    assert out.shape == (2, SEQ, HIDDEN), out.shape
    assert bool(jnp.all(jnp.isfinite(out)))
    print("KERNEL_OK")
</pallas_src>

<mosaic_0001>
module attributes {stable_mosaic.version = 11 : i64} {
  func.func @_fused_hymba_kernel(%arg0: i32, %arg1: memref<4x32xf32, #tpu.memory_space<vmem>>, %arg2: memref<1x8x32xf32, #tpu.memory_space<vmem>>, %arg3: memref<2x12x12xf32, #tpu.memory_space<vmem>>, %arg4: memref<12x64xf32, #tpu.memory_space<vmem>>, %arg5: memref<12x64xf32, #tpu.memory_space<vmem>>, %arg6: memref<12x32xf32, #tpu.memory_space<vmem>>, %arg7: memref<12x32xf32, #tpu.memory_space<vmem>>, %arg8: memref<64x64xf32, #tpu.memory_space<vmem>>, %arg9: memref<32x32xf32, #tpu.memory_space<vmem>>, %arg10: memref<2x32x192xf32, #tpu.memory_space<vmem>>, %arg11: memref<2x4x64xf32, #tpu.memory_space<vmem>>, %arg12: memref<2x64x8xf32, #tpu.memory_space<vmem>>, %arg13: memref<2x32x64xf32, #tpu.memory_space<vmem>>, %arg14: memref<2x8x64xf32, #tpu.memory_space<vmem>>, %arg15: memref<2x16x64xf32, #tpu.memory_space<vmem>>, %arg16: memref<2x64x32xf32, #tpu.memory_space<vmem>>, %arg17: memref<2x32x128xf32, #tpu.memory_space<vmem>>, %arg18: memref<2x64x32xf32, #tpu.memory_space<vmem>>, %arg19: memref<2x8x64xf32, #tpu.memory_space<vmem>>, %arg20: memref<1x8x32xf32, #tpu.memory_space<vmem>>) attributes {dimension_semantics = [#tpu.dimension_semantics<parallel>], iteration_bounds = array<i64: 2>, scalar_prefetch = 0 : i64, scratch_operands = 0 : i64, tpu.core_type = #tpu.core_type<tc>, window_params = [{pipeline_mode = #tpu.pipeline_mode<synchronous>, transform_indices = @transform_0, window_bounds = array<i64: 4, 32>}, {transform_indices = @transform_1, window_bounds = array<i64: 1, 8, 32>}, {pipeline_mode = #tpu.pipeline_mode<synchronous>, transform_indices = @transform_2, window_bounds = array<i64: 2, 12, 12>}, {pipeline_mode = #tpu.pipeline_mode<synchronous>, transform_indices = @transform_3, window_bounds = array<i64: 12, 64>}, {pipeline_mode = #tpu.pipeline_mode<synchronous>, transform_indices = @transform_4, window_bounds = array<i64: 12, 64>}, {pipeline_mode = #tpu.pipeline_mode<synchronous>, transform_indices = @transform_5, window_bounds = array<i64: 12, 32>}, {pipeline_mode = #tpu.pipeline_mode<synchronous>, transform_indices = @transform_6, window_bounds = array<i64: 12, 32>}, {pipeline_mode = #tpu.pipeline_mode<synchronous>, transform_indices = @transform_7, window_bounds = array<i64: 64, 64>}, {pipeline_mode = #tpu.pipeline_mode<synchronous>, transform_indices = @transform_8, window_bounds = array<i64: 32, 32>}, {pipeline_mode = #tpu.pipeline_mode<synchronous>, transform_indices = @transform_9, window_bounds = array<i64: 2, 32, 192>}, {pipeline_mode = #tpu.pipeline_mode<synchronous>, transform_indices = @transform_10, window_bounds = array<i64: 2, 4, 64>}, {pipeline_mode = #tpu.pipeline_mode<synchronous>, transform_indices = @transform_11, window_bounds = array<i64: 2, 64, 8>}, {pipeline_mode = #tpu.pipeline_mode<synchronous>, transform_indices = @transform_12, window_bounds = array<i64: 2, 32, 64>}, {pipeline_mode = #tpu.pipeline_mode<synchronous>, transform_indices = @transform_13, window_bounds = array<i64: 2, 8, 64>}, {pipeline_mode = #tpu.pipeline_mode<synchronous>, transform_indices = @transform_14, window_bounds = array<i64: 2, 16, 64>}, {pipeline_mode = #tpu.pipeline_mode<synchronous>, transform_indices = @transform_15, window_bounds = array<i64: 2, 64, 32>}, {pipeline_mode = #tpu.pipeline_mode<synchronous>, transform_indices = @transform_16, window_bounds = array<i64: 2, 32, 128>}, {pipeline_mode = #tpu.pipeline_mode<synchronous>, transform_indices = @transform_17, window_bounds = array<i64: 2, 64, 32>}, {pipeline_mode = #tpu.pipeline_mode<synchronous>, transform_indices = @transform_18, window_bounds = array<i64: 2, 8, 64>}, {transform_indices = @transform_19, window_bounds = array<i64: 1, 8, 32>}]} {
    %c0 = arith.constant 0 : index
    %c0_0 = arith.constant 0 : index
    %0 = vector.load %arg1[%c0, %c0_0] : memref<4x32xf32, #tpu.memory_space<vmem>>, vector<4x32xf32>
    %c0_1 = arith.constant 0 : index
    %c0_2 = arith.constant 0 : index
    %c0_3 = arith.constant 0 : index
    %1 = vector.load %arg2[%c0_1, %c0_2, %c0_3] : memref<1x8x32xf32, #tpu.memory_space<vmem>>, vector<1x8x32xf32>
    %2 = vector.shape_cast %1 : vector<1x8x32xf32> to vector<8x32xf32>
    %3 = tpu.concatenate %0, %2 in 0 : vector<4x32xf32>, vector<8x32xf32> -> vector<12x32xf32>
    %c0_4 = arith.constant 0 : index
    %c0_5 = arith.constant 0 : index
    %4 = vector.load %arg4[%c0_4, %c0_5] : memref<12x64xf32, #tpu.memory_space<vmem>>, vector<12x64xf32>
    %c0_6 = arith.constant 0 : index
    %c0_7 = arith.constant 0 : index
    %5 = vector.load %arg5[%c0_6, %c0_7] : memref<12x64xf32, #tpu.memory_space<vmem>>, vector<12x64xf32>
    %c0_8 = arith.constant 0 : index
    %c0_9 = arith.constant 0 : index
    %6 = vector.load %arg6[%c0_8, %c0_9] : memref<12x32xf32, #tpu.memory_space<vmem>>, vector<12x32xf32>
    %c0_10 = arith.constant 0 : index
    %c0_11 = arith.constant 0 : index
    %7 = vector.load %arg7[%c0_10, %c0_11] : memref<12x32xf32, #tpu.memory_space<vmem>>, vector<12x32xf32>
    %c0_12 = arith.constant 0 : index
    %c0_13 = arith.constant 0 : index
    %8 = vector.load %arg8[%c0_12, %c0_13] : memref<64x64xf32, #tpu.memory_space<vmem>>, vector<64x64xf32>
    %c0_14 = arith.constant 0 : index
    %c0_15 = arith.constant 0 : index
    %9 = vector.load %arg9[%c0_14, %c0_15] : memref<32x32xf32, #tpu.memory_space<vmem>>, vector<32x32xf32>
    %c0_16 = arith.constant 0 : index
    %c0_17 = arith.constant 0 : index
    %c0_18 = arith.constant 0 : index
    %10 = vector.load %arg19[%c0_16, %c0_17, %c0_18] : memref<2x8x64xf32, #tpu.memory_space<vmem>>, vector<1x8x64xf32>
    %11 = vector.shape_cast %10 : vector<1x8x64xf32> to vector<8x64xf32>
    %12 = vector.extract_strided_slice %11 {offsets = [0, 0], sizes = [1, 32], strides = [1, 1]} : vector<8x64xf32> to vector<1x32xf32>
    %13 = vector.extract_strided_slice %11 {offsets = [1, 0], sizes = [1, 32], strides = [1, 1]} : vector<8x64xf32> to vector<1x32xf32>
    %14 = vector.extract_strided_slice %11 {offsets = [2, 0], sizes = [1, 64], strides = [1, 1]} : vector<8x64xf32> to vector<1x64xf32>
    %15 = vector.extract_strided_slice %11 {offsets = [3, 0], sizes = [1, 64], strides = [1, 1]} : vector<8x64xf32> to vector<1x64xf32>
    %16 = vector.extract_strided_slice %11 {offsets = [4, 0], sizes = [1, 64], strides = [1, 1]} : vector<8x64xf32> to vector<1x64xf32>
    %17 = vector.extract_strided_slice %11 {offsets = [5, 0], sizes = [1, 64], strides = [1, 1]} : vector<8x64xf32> to vector<1x64xf32>
    %18 = vector.extract_strided_slice %11 {offsets = [6, 0], sizes = [1, 64], strides = [1, 1]} : vector<8x64xf32> to vector<1x64xf32>
    %19 = arith.mulf %3, %3 : vector<12x32xf32>
    %cst = arith.constant dense<0.000000e+00> : vector<12xf32>
    %20 = vector.multi_reduction <add>, %19, %cst [1] : vector<12x32xf32> to vector<12xf32>
    %21 = vector.shape_cast %20 : vector<12xf32> to vector<12x1xf32>
    %cst_19 = arith.constant 3.200000e+01 : f32
    %22 = vector.broadcast %cst_19 : f32 to vector<12x1xf32>
    %23 = arith.divf %21, %22 : vector<12x1xf32>
    %cst_20 = arith.constant 9.99999997E-7 : f32
    %24 = vector.broadcast %cst_20 : f32 to vector<12x1xf32>
    %25 = arith.addf %23, %24 : vector<12x1xf32>
    %26 = math.rsqrt %25 : vector<12x1xf32>
    %27 = vector.broadcast %26 : vector<12x1xf32> to vector<12x32xf32>
    %28 = arith.mulf %3, %27 : vector<12x32xf32>
    %29 = vector.broadcast %12 : vector<1x32xf32> to vector<12x32xf32>
    %30 = arith.mulf %28, %29 : vector<12x32xf32>
    %c0_21 = arith.constant 0 : index
    %c0_22 = arith.constant 0 : index
    %c0_23 = arith.constant 0 : index
    %31 = vector.load %arg10[%c0_21, %c0_22, %c0_23] : memref<2x32x192xf32, #tpu.memory_space<vmem>>, vector<1x32x192xf32>
    %32 = vector.shape_cast %31 : vector<1x32x192xf32> to vector<32x192xf32>
    %cst_24 = arith.constant dense<0.000000e+00> : vector<12x192xf32>
    %33 = tpu.matmul %30, %32, %cst_24 {dimension_numbers = #tpu.dot_dimension_numbers<[1], [0], [0], [1], [0, 0, 1, 1], [], []>} : vector<12x32xf32>, vector<32x192xf32>, vector<12x192xf32> -> vector<12x192xf32>
    %34 = vector.extract_strided_slice %33 {offsets = [0, 0], sizes = [12, 64], strides = [1, 1]} : vector<12x192xf32> to vector<12x64xf32>
    %35 = vector.extract_strided_slice %33 {offsets = [0, 64], sizes = [12, 32], strides = [1, 1]} : vector<12x192xf32> to vector<12x32xf32>
    %36 = vector.extract_strided_slice %33 {offsets = [0, 96], sizes = [12, 32], strides = [1, 1]} : vector<12x192xf32> to vector<12x32xf32>
    %37 = vector.extract_strided_slice %33 {offsets = [0, 128], sizes = [12, 64], strides = [1, 1]} : vector<12x192xf32> to vector<12x64xf32>
    %38 = arith.mulf %34, %4 : vector<12x64xf32>
    %cst_25 = arith.constant dense<0.000000e+00> : vector<12x64xf32>
    %39 = tpu.matmul %34, %8, %cst_25 {dimension_numbers = #tpu.dot_dimension_numbers<[1], [0], [0], [1], [0, 0, 1, 1], [], []>} : vector<12x64xf32>, vector<64x64xf32>, vector<12x64xf32> -> vector<12x64xf32>
    %40 = arith.mulf %39, %5 : vector<12x64xf32>
    %41 = arith.addf %38, %40 : vector<12x64xf32>
    %42 = arith.mulf %35, %6 : vector<12x32xf32>
    %cst_26 = arith.constant dense<0.000000e+00> : vector<12x32xf32>
    %43 = tpu.matmul %35, %9, %cst_26 {dimension_numbers = #tpu.dot_dimension_numbers<[1], [0], [0], [1], [0, 0, 1, 1], [], []>} : vector<12x32xf32>, vector<32x32xf32>, vector<12x32xf32> -> vector<12x32xf32>
    %44 = arith.mulf %43, %7 : vector<12x32xf32>
    %45 = arith.addf %42, %44 : vector<12x32xf32>
    %c0_27 = arith.constant 0 : index
    %c0_28 = arith.constant 0 : index
    %c0_29 = arith.constant 0 : index
    %46 = vector.load %arg3[%c0_27, %c0_28, %c0_29] : memref<2x12x12xf32, #tpu.memory_space<vmem>>, vector<1x12x12xf32>
    %47 = vector.shape_cast %46 : vector<1x12x12xf32> to vector<12x12xf32>
    %48 = tpu.concatenate %47, %47 in 0 : vector<12x12xf32>, vector<12x12xf32> -> vector<24x12xf32>
    %49 = vector.extract_strided_slice %45 {offsets = [0, 0], sizes = [12, 16], strides = [1, 1]} : vector<12x32xf32> to vector<12x16xf32>
    %50 = vector.extract_strided_slice %36 {offsets = [0, 0], sizes = [12, 16], strides = [1, 1]} : vector<12x32xf32> to vector<12x16xf32>
    %51 = vector.extract_strided_slice %41 {offsets = [0, 0], sizes = [12, 16], strides = [1, 1]} : vector<12x64xf32> to vector<12x16xf32>
    %52 = vector.extract_strided_slice %41 {offsets = [0, 16], sizes = [12, 16], strides = [1, 1]} : vector<12x64xf32> to vector<12x16xf32>
    %53 = tpu.concatenate %51, %52 in 0 : vector<12x16xf32>, vector<12x16xf32> -> vector<24x16xf32>
    %cst_30 = arith.constant dense<0.000000e+00> : vector<24x12xf32>
    %54 = tpu.matmul %53, %49, %cst_30 {dimension_numbers = #tpu.dot_dimension_numbers<[1], [1], [0], [0], [0, 0, 1, 0], [], []>} : vector<24x16xf32>, vector<12x16xf32>, vector<24x12xf32> -> vector<24x12xf32>
    %cst_31 = arith.constant 2.500000e-01 : f32
    %55 = vector.broadcast %cst_31 : f32 to vector<24x12xf32>
    %56 = arith.mulf %54, %55 : vector<24x12xf32>
    %57 = arith.addf %56, %48 : vector<24x12xf32>
    %cst_32 = arith.constant dense<0xFF800000> : vector<24xf32>
    %58 = vector.multi_reduction <maximumf>, %57, %cst_32 [1] : vector<24x12xf32> to vector<24xf32>
    %59 = vector.shape_cast %58 : vector<24xf32> to vector<24x1xf32>
    %60 = vector.broadcast %59 : vector<24x1xf32> to vector<24x12xf32>
    %61 = arith.subf %57, %60 : vector<24x12xf32>
    %62 = math.exp %61 : vector<24x12xf32>
    %cst_33 = arith.constant dense<0.000000e+00> : vector<24xf32>
    %63 = vector.multi_reduction <add>, %62, %cst_33 [1] : vector<24x12xf32> to vector<24xf32>
    %64 = vector.shape_cast %63 : vector<24xf32> to vector<24x1xf32>
    %65 = tpu.reciprocal %64 {approx = true} : vector<24x1xf32> -> vector<24x1xf32>
    %66 = vector.broadcast %65 : vector<24x1xf32> to vector<24x12xf32>
    %67 = arith.mulf %62, %66 : vector<24x12xf32>
    %cst_34 = arith.constant dense<0.000000e+00> : vector<24x16xf32>
    %68 = tpu.matmul %67, %50, %cst_34 {dimension_numbers = #tpu.dot_dimension_numbers<[1], [0], [0], [1], [0, 0, 1, 1], [], []>} : vector<24x12xf32>, vector<12x16xf32>, vector<24x16xf32> -> vector<24x16xf32>
    %69 = vector.extract_strided_slice %68 {offsets = [0, 0], sizes = [12, 16], strides = [1, 1]} : vector<24x16xf32> to vector<12x16xf32>
    %70 = vector.extract_strided_slice %68 {offsets = [12, 0], sizes = [12, 16], strides = [1, 1]} : vector<24x16xf32> to vector<12x16xf32>
    %71 = vector.extract_strided_slice %45 {offsets = [0, 16], sizes = [12, 16], strides = [1, 1]} : vector<12x32xf32> to vector<12x16xf32>
    %72 = vector.extract_strided_slice %36 {offsets = [0, 16], sizes = [12, 16], strides = [1, 1]} : vector<12x32xf32> to vector<12x16xf32>
    %73 = vector.extract_strided_slice %41 {offsets = [0, 32], sizes = [12, 16], strides = [1, 1]} : vector<12x64xf32> to vector<12x16xf32>
    %74 = vector.extract_strided_slice %41 {offsets = [0, 48], sizes = [12, 16], strides = [1, 1]} : vector<12x64xf32> to vector<12x16xf32>
    %75 = tpu.concatenate %73, %74 in 0 : vector<12x16xf32>, vector<12x16xf32> -> vector<24x16xf32>
    %cst_35 = arith.constant dense<0.000000e+00> : vector<24x12xf32>
    %76 = tpu.matmul %75, %71, %cst_35 {dimension_numbers = #tpu.dot_dimension_numbers<[1], [1], [0], [0], [0, 0, 1, 0], [], []>} : vector<24x16xf32>, vector<12x16xf32>, vector<24x12xf32> -> vector<24x12xf32>
    %cst_36 = arith.constant 2.500000e-01 : f32
    %77 = vector.broadcast %cst_36 : f32 to vector<24x12xf32>
    %78 = arith.mulf %76, %77 : vector<24x12xf32>
    %79 = arith.addf %78, %48 : vector<24x12xf32>
    %cst_37 = arith.constant dense<0xFF800000> : vector<24xf32>
    %80 = vector.multi_reduction <maximumf>, %79, %cst_37 [1] : vector<24x12xf32> to vector<24xf32>
    %81 = vector.shape_cast %80 : vector<24xf32> to vector<24x1xf32>
    %82 = vector.broadcast %81 : vector<24x1xf32> to vector<24x12xf32>
    %83 = arith.subf %79, %82 : vector<24x12xf32>
    %84 = math.exp %83 : vector<24x12xf32>
    %cst_38 = arith.constant dense<0.000000e+00> : vector<24xf32>
    %85 = vector.multi_reduction <add>, %84, %cst_38 [1] : vector<24x12xf32> to vector<24xf32>
    %86 = vector.shape_cast %85 : vector<24xf32> to vector<24x1xf32>
    %87 = tpu.reciprocal %86 {approx = true} : vector<24x1xf32> -> vector<24x1xf32>
    %88 = vector.broadcast %87 : vector<24x1xf32> to vector<24x12xf32>
    %89 = arith.mulf %84, %88 : vector<24x12xf32>
    %cst_39 = arith.constant dense<0.000000e+00> : vector<24x16xf32>
    %90 = tpu.matmul %89, %72, %cst_39 {dimension_numbers = #tpu.dot_dimension_numbers<[1], [0], [0], [1], [0, 0, 1, 1], [], []>} : vector<24x12xf32>, vector<12x16xf32>, vector<24x16xf32> -> vector<24x16xf32>
    %91 = vector.extract_strided_slice %90 {offsets = [0, 0], sizes = [12, 16], strides = [1, 1]} : vector<24x16xf32> to vector<12x16xf32>
    %92 = vector.extract_strided_slice %90 {offsets = [12, 0], sizes = [12, 16], strides = [1, 1]} : vector<24x16xf32> to vector<12x16xf32>
    %93 = tpu.concatenate %69, %70, %91, %92 in 1 : vector<12x16xf32>, vector<12x16xf32>, vector<12x16xf32>, vector<12x16xf32> -> vector<12x64xf32>
    %c0_40 = arith.constant 0 : index
    %c0_41 = arith.constant 0 : index
    %c0_42 = arith.constant 0 : index
    %94 = vector.load %arg11[%c0_40, %c0_41, %c0_42] : memref<2x4x64xf32, #tpu.memory_space<vmem>>, vector<1x4x64xf32>
    %95 = vector.shape_cast %94 : vector<1x4x64xf32> to vector<4x64xf32>
    %96 = vector.extract_strided_slice %95 {offsets = [3, 0], sizes = [1, 64], strides = [1, 1]} : vector<4x64xf32> to vector<1x64xf32>
    %97 = vector.broadcast %96 : vector<1x64xf32> to vector<12x64xf32>
    %98 = arith.mulf %34, %97 : vector<12x64xf32>
    %cst_43 = arith.constant 0.000000e+00 : f32
    %99 = vector.broadcast %cst_43 : f32 to vector<1x64xf32>
    %100 = vector.extract_strided_slice %34 {offsets = [0, 0], sizes = [11, 64], strides = [1, 1]} : vector<12x64xf32> to vector<11x64xf32>
    %101 = tpu.concatenate %99, %100 in 0 : vector<1x64xf32>, vector<11x64xf32> -> vector<12x64xf32>
    %102 = vector.extract_strided_slice %95 {offsets = [2, 0], sizes = [1, 64], strides = [1, 1]} : vector<4x64xf32> to vector<1x64xf32>
    %103 = vector.broadcast %102 : vector<1x64xf32> to vector<12x64xf32>
    %104 = arith.mulf %101, %103 : vector<12x64xf32>
    %105 = arith.addf %98, %104 : vector<12x64xf32>
    %cst_44 = arith.constant 0.000000e+00 : f32
    %106 = vector.broadcast %cst_44 : f32 to vector<2x64xf32>
    %107 = vector.extract_strided_slice %34 {offsets = [0, 0], sizes = [10, 64], strides = [1, 1]} : vector<12x64xf32> to vector<10x64xf32>
    %108 = tpu.concatenate %106, %107 in 0 : vector<2x64xf32>, vector<10x64xf32> -> vector<12x64xf32>
    %109 = vector.extract_strided_slice %95 {offsets = [1, 0], sizes = [1, 64], strides = [1, 1]} : vector<4x64xf32> to vector<1x64xf32>
    %110 = vector.broadcast %109 : vector<1x64xf32> to vector<12x64xf32>
    %111 = arith.mulf %108, %110 : vector<12x64xf32>
    %112 = arith.addf %105, %111 : vector<12x64xf32>
    %cst_45 = arith.constant 0.000000e+00 : f32
    %113 = vector.broadcast %cst_45 : f32 to vector<3x64xf32>
    %114 = vector.extract_strided_slice %34 {offsets = [0, 0], sizes = [9, 64], strides = [1, 1]} : vector<12x64xf32> to vector<9x64xf32>
    %115 = tpu.concatenate %113, %114 in 0 : vector<3x64xf32>, vector<9x64xf32> -> vector<12x64xf32>
    %116 = vector.extract_strided_slice %95 {offsets = [0, 0], sizes = [1, 64], strides = [1, 1]} : vector<4x64xf32> to vector<1x64xf32>
    %117 = vector.broadcast %116 : vector<1x64xf32> to vector<12x64xf32>
    %118 = arith.mulf %115, %117 : vector<12x64xf32>
    %119 = arith.addf %112, %118 : vector<12x64xf32>
    %120 = vector.broadcast %14 : vector<1x64xf32> to vector<12x64xf32>
    %121 = arith.addf %119, %120 : vector<12x64xf32>
    %122 = arith.negf %121 : vector<12x64xf32>
    %123 = math.exp %122 : vector<12x64xf32>
    %cst_46 = arith.constant 1.000000e+00 : f32
    %124 = vector.broadcast %cst_46 : f32 to vector<12x64xf32>
    %125 = arith.addf %124, %123 : vector<12x64xf32>
    %126 = arith.divf %124, %125 : vector<12x64xf32>
    %127 = arith.mulf %121, %126 : vector<12x64xf32>
    %c0_47 = arith.constant 0 : index
    %c0_48 = arith.constant 0 : index
    %c0_49 = arith.constant 0 : index
    %128 = vector.load %arg12[%c0_47, %c0_48, %c0_49] : memref<2x64x8xf32, #tpu.memory_space<vmem>>, vector<1x64x8xf32>
    %129 = vector.shape_cast %128 : vector<1x64x8xf32> to vector<64x8xf32>
    %cst_50 = arith.constant dense<0.000000e+00> : vector<12x8xf32>
    %130 = tpu.matmul %127, %129, %cst_50 {dimension_numbers = #tpu.dot_dimension_numbers<[1], [0], [0], [1], [0, 0, 1, 1], [], []>} : vector<12x64xf32>, vector<64x8xf32>, vector<12x8xf32> -> vector<12x8xf32>
    %c0_51 = arith.constant 0 : index
    %c0_52 = arith.constant 0 : index
    %c0_53 = arith.constant 0 : index
    %131 = vector.load %arg14[%c0_51, %c0_52, %c0_53] : memref<2x8x64xf32, #tpu.memory_space<vmem>>, vector<1x8x64xf32>
    %132 = vector.shape_cast %131 : vector<1x8x64xf32> to vector<8x64xf32>
    %cst_54 = arith.constant dense<0.000000e+00> : vector<12x64xf32>
    %133 = tpu.matmul %130, %132, %cst_54 {dimension_numbers = #tpu.dot_dimension_numbers<[1], [0], [0], [1], [0, 0, 1, 1], [], []>} : vector<12x8xf32>, vector<8x64xf32>, vector<12x64xf32> -> vector<12x64xf32>
    %134 = vector.broadcast %15 : vector<1x64xf32> to vector<12x64xf32>
    %135 = arith.addf %133, %134 : vector<12x64xf32>
    %cst_55 = arith.constant 0.000000e+00 : f32
    %136 = vector.broadcast %cst_55 : f32 to vector<12x64xf32>
    %137 = arith.maximumf %135, %136 : vector<12x64xf32>
    %138 = vector.broadcast %cst_55 : f32 to vector<12x64xf32>
    %139 = arith.subf %135, %138 : vector<12x64xf32>
    %140 = arith.cmpf one, %139, %139 : vector<12x64xf32>
    %141 = vector.broadcast %cst_55 : f32 to vector<12x64xf32>
    %142 = arith.addf %135, %141 : vector<12x64xf32>
    %143 = math.absf %139 : vector<12x64xf32>
    %cst_56 = arith.constant 0.000000e+00 : f32
    %144 = vector.broadcast %cst_56 : f32 to vector<12x64xf32>
    %145 = arith.subf %144, %143 : vector<12x64xf32>
    %146 = math.exp %145 : vector<12x64xf32>
    %147 = math.log1p %146 : vector<12x64xf32>
    %148 = arith.addf %137, %147 : vector<12x64xf32>
    %149 = arith.select %140, %142, %148 : vector<12x64xi1>, vector<12x64xf32>
    %c0_57 = arith.constant 0 : index
    %c0_58 = arith.constant 0 : index
    %c0_59 = arith.constant 0 : index
    %150 = vector.load %arg13[%c0_57, %c0_58, %c0_59] : memref<2x32x64xf32, #tpu.memory_space<vmem>>, vector<1x32x64xf32>
    %151 = vector.shape_cast %150 : vector<1x32x64xf32> to vector<32x64xf32>
    %cst_60 = arith.constant dense<0.000000e+00> : vector<32x12xf32>
    %152 = tpu.matmul %151, %127, %cst_60 {dimension_numbers = #tpu.dot_dimension_numbers<[1], [1], [0], [0], [0, 0, 1, 0], [], []>} : vector<32x64xf32>, vector<12x64xf32>, vector<32x12xf32> -> vector<32x12xf32>
    %153 = vector.extract_strided_slice %152 {offsets = [0, 0], sizes = [16, 12], strides = [1, 1]} : vector<32x12xf32> to vector<16x12xf32>
    %154 = vector.extract_strided_slice %152 {offsets = [16, 0], sizes = [16, 12], strides = [1, 1]} : vector<32x12xf32> to vector<16x12xf32>
    %c0_61 = arith.constant 0 : index
    %c0_62 = arith.constant 0 : index
    %c0_63 = arith.constant 0 : index
    %155 = vector.load %arg15[%c0_61, %c0_62, %c0_63] : memref<2x16x64xf32, #tpu.memory_space<vmem>>, vector<1x16x64xf32>
    %156 = vector.shape_cast %155 : vector<1x16x64xf32> to vector<16x64xf32>
    %157 = math.exp %156 : vector<16x64xf32>
    %cst_64 = arith.constant 0.000000e+00 : f32
    %158 = vector.broadcast %cst_64 : f32 to vector<16x64xf32>
    %159 = arith.subf %158, %157 : vector<16x64xf32>
    %160 = arith.mulf %149, %127 : vector<12x64xf32>
    %161 = vector.extract_strided_slice %149 {offsets = [0, 0], sizes = [1, 64], strides = [1, 1]} : vector<12x64xf32> to vector<1x64xf32>
    %162 = vector.broadcast %161 : vector<1x64xf32> to vector<16x64xf32>
    %163 = arith.mulf %162, %159 : vector<16x64xf32>
    %164 = math.exp %163 : vector<16x64xf32>
    %165 = vector.extract_strided_slice %149 {offsets = [1, 0], sizes = [1, 64], strides = [1, 1]} : vector<12x64xf32> to vector<1x64xf32>
    %166 = vector.broadcast %165 : vector<1x64xf32> to vector<16x64xf32>
    %167 = arith.mulf %166, %159 : vector<16x64xf32>
    %168 = math.exp %167 : vector<16x64xf32>
    %169 = vector.extract_strided_slice %149 {offsets = [2, 0], sizes = [1, 64], strides = [1, 1]} : vector<12x64xf32> to vector<1x64xf32>
    %170 = vector.broadcast %169 : vector<1x64xf32> to vector<16x64xf32>
    %171 = arith.mulf %170, %159 : vector<16x64xf32>
    %172 = math.exp %171 : vector<16x64xf32>
    %173 = vector.extract_strided_slice %149 {offsets = [3, 0], sizes = [1, 64], strides = [1, 1]} : vector<12x64xf32> to vector<1x64xf32>
    %174 = vector.broadcast %173 : vector<1x64xf32> to vector<16x64xf32>
    %175 = arith.mulf %174, %159 : vector<16x64xf32>
    %176 = math.exp %175 : vector<16x64xf32>
    %177 = vector.extract_strided_slice %149 {offsets = [4, 0], sizes = [1, 64], strides = [1, 1]} : vector<12x64xf32> to vector<1x64xf32>
    %178 = vector.broadcast %177 : vector<1x64xf32> to vector<16x64xf32>
    %179 = arith.mulf %178, %159 : vector<16x64xf32>
    %180 = math.exp %179 : vector<16x64xf32>
    %181 = vector.extract_strided_slice %149 {offsets = [5, 0], sizes = [1, 64], strides = [1, 1]} : vector<12x64xf32> to vector<1x64xf32>
    %182 = vector.broadcast %181 : vector<1x64xf32> to vector<16x64xf32>
    %183 = arith.mulf %182, %159 : vector<16x64xf32>
    %184 = math.exp %183 : vector<16x64xf32>
    %185 = vector.extract_strided_slice %149 {offsets = [6, 0], sizes = [1, 64], strides = [1, 1]} : vector<12x64xf32> to vector<1x64xf32>
    %186 = vector.broadcast %185 : vector<1x64xf32> to vector<16x64xf32>
    %187 = arith.mulf %186, %159 : vector<16x64xf32>
    %188 = math.exp %187 : vector<16x64xf32>
    %189 = vector.extract_strided_slice %149 {offsets = [7, 0], sizes = [1, 64], strides = [1, 1]} : vector<12x64xf32> to vector<1x64xf32>
    %190 = vector.broadcast %189 : vector<1x64xf32> to vector<16x64xf32>
    %191 = arith.mulf %190, %159 : vector<16x64xf32>
    %192 = math.exp %191 : vector<16x64xf32>
    %193 = vector.extract_strided_slice %149 {offsets = [8, 0], sizes = [1, 64], strides = [1, 1]} : vector<12x64xf32> to vector<1x64xf32>
    %194 = vector.broadcast %193 : vector<1x64xf32> to vector<16x64xf32>
    %195 = arith.mulf %194, %159 : vector<16x64xf32>
    %196 = math.exp %195 : vector<16x64xf32>
    %197 = vector.extract_strided_slice %149 {offsets = [9, 0], sizes = [1, 64], strides = [1, 1]} : vector<12x64xf32> to vector<1x64xf32>
    %198 = vector.broadcast %197 : vector<1x64xf32> to vector<16x64xf32>
    %199 = arith.mulf %198, %159 : vector<16x64xf32>
    %200 = math.exp %199 : vector<16x64xf32>
    %201 = vector.extract_strided_slice %149 {offsets = [10, 0], sizes = [1, 64], strides = [1, 1]} : vector<12x64xf32> to vector<1x64xf32>
    %202 = vector.broadcast %201 : vector<1x64xf32> to vector<16x64xf32>
    %203 = arith.mulf %202, %159 : vector<16x64xf32>
    %204 = math.exp %203 : vector<16x64xf32>
    %205 = vector.extract_strided_slice %149 {offsets = [11, 0], sizes = [1, 64], strides = [1, 1]} : vector<12x64xf32> to vector<1x64xf32>
    %206 = vector.broadcast %205 : vector<1x64xf32> to vector<16x64xf32>
    %207 = arith.mulf %206, %159 : vector<16x64xf32>
    %208 = math.exp %207 : vector<16x64xf32>
    %209 = vector.extract_strided_slice %160 {offsets = [0, 0], sizes = [1, 64], strides = [1, 1]} : vector<12x64xf32> to vector<1x64xf32>
    %210 = vector.extract_strided_slice %153 {offsets = [0, 0], sizes = [16, 1], strides = [1, 1]} : vector<16x12xf32> to vector<16x1xf32>
    %211 = vector.broadcast %209 : vector<1x64xf32> to vector<16x64xf32>
    %212 = vector.broadcast %210 : vector<16x1xf32> to vector<16x64xf32>
    %213 = arith.mulf %211, %212 : vector<16x64xf32>
    %214 = vector.extract_strided_slice %160 {offsets = [1, 0], sizes = [1, 64], strides = [1, 1]} : vector<12x64xf32> to vector<1x64xf32>
    %215 = vector.extract_strided_slice %153 {offsets = [0, 1], sizes = [16, 1], strides = [1, 1]} : vector<16x12xf32> to vector<16x1xf32>
    %216 = vector.broadcast %214 : vector<1x64xf32> to vector<16x64xf32>
    %217 = vector.broadcast %215 : vector<16x1xf32> to vector<16x64xf32>
    %218 = arith.mulf %216, %217 : vector<16x64xf32>
    %219 = vector.extract_strided_slice %160 {offsets = [2, 0], sizes = [1, 64], strides = [1, 1]} : vector<12x64xf32> to vector<1x64xf32>
    %220 = vector.extract_strided_slice %153 {offsets = [0, 2], sizes = [16, 1], strides = [1, 1]} : vector<16x12xf32> to vector<16x1xf32>
    %221 = vector.broadcast %219 : vector<1x64xf32> to vector<16x64xf32>
    %222 = vector.broadcast %220 : vector<16x1xf32> to vector<16x64xf32>
    %223 = arith.mulf %221, %222 : vector<16x64xf32>
    %224 = vector.extract_strided_slice %160 {offsets = [3, 0], sizes = [1, 64], strides = [1, 1]} : vector<12x64xf32> to vector<1x64xf32>
    %225 = vector.extract_strided_slice %153 {offsets = [0, 3], sizes = [16, 1], strides = [1, 1]} : vector<16x12xf32> to vector<16x1xf32>
    %226 = vector.broadcast %224 : vector<1x64xf32> to vector<16x64xf32>
    %227 = vector.broadcast %225 : vector<16x1xf32> to vector<16x64xf32>
    %228 = arith.mulf %226, %227 : vector<16x64xf32>
    %229 = vector.extract_strided_slice %160 {offsets = [4, 0], sizes = [1, 64], strides = [1, 1]} : vector<12x64xf32> to vector<1x64xf32>
    %230 = vector.extract_strided_slice %153 {offsets = [0, 4], sizes = [16, 1], strides = [1, 1]} : vector<16x12xf32> to vector<16x1xf32>
    %231 = vector.broadcast %229 : vector<1x64xf32> to vector<16x64xf32>
    %232 = vector.broadcast %230 : vector<16x1xf32> to vector<16x64xf32>
    %233 = arith.mulf %231, %232 : vector<16x64xf32>
    %234 = vector.extract_strided_slice %160 {offsets = [5, 0], sizes = [1, 64], strides = [1, 1]} : vector<12x64xf32> to vector<1x64xf32>
    %235 = vector.extract_strided_slice %153 {offsets = [0, 5], sizes = [16, 1], strides = [1, 1]} : vector<16x12xf32> to vector<16x1xf32>
    %236 = vector.broadcast %234 : vector<1x64xf32> to vector<16x64xf32>
    %237 = vector.broadcast %235 : vector<16x1xf32> to vector<16x64xf32>
    %238 = arith.mulf %236, %237 : vector<16x64xf32>
    %239 = vector.extract_strided_slice %160 {offsets = [6, 0], sizes = [1, 64], strides = [1, 1]} : vector<12x64xf32> to vector<1x64xf32>
    %240 = vector.extract_strided_slice %153 {offsets = [0, 6], sizes = [16, 1], strides = [1, 1]} : vector<16x12xf32> to vector<16x1xf32>
    %241 = vector.broadcast %239 : vector<1x64xf32> to vector<16x64xf32>
    %242 = vector.broadcast %240 : vector<16x1xf32> to vector<16x64xf32>
    %243 = arith.mulf %241, %242 : vector<16x64xf32>
    %244 = vector.extract_strided_slice %160 {offsets = [7, 0], sizes = [1, 64], strides = [1, 1]} : vector<12x64xf32> to vector<1x64xf32>
    %245 = vector.extract_strided_slice %153 {offsets = [0, 7], sizes = [16, 1], strides = [1, 1]} : vector<16x12xf32> to vector<16x1xf32>
    %246 = vector.broadcast %244 : vector<1x64xf32> to vector<16x64xf32>
    %247 = vector.broadcast %245 : vector<16x1xf32> to vector<16x64xf32>
    %248 = arith.mulf %246, %247 : vector<16x64xf32>
    %249 = vector.extract_strided_slice %160 {offsets = [8, 0], sizes = [1, 64], strides = [1, 1]} : vector<12x64xf32> to vector<1x64xf32>
    %250 = vector.extract_strided_slice %153 {offsets = [0, 8], sizes = [16, 1], strides = [1, 1]} : vector<16x12xf32> to vector<16x1xf32>
    %251 = vector.broadcast %249 : vector<1x64xf32> to vector<16x64xf32>
    %252 = vector.broadcast %250 : vector<16x1xf32> to vector<16x64xf32>
    %253 = arith.mulf %251, %252 : vector<16x64xf32>
    %254 = vector.extract_strided_slice %160 {offsets = [9, 0], sizes = [1, 64], strides = [1, 1]} : vector<12x64xf32> to vector<1x64xf32>
    %255 = vector.extract_strided_slice %153 {offsets = [0, 9], sizes = [16, 1], strides = [1, 1]} : vector<16x12xf32> to vector<16x1xf32>
    %256 = vector.broadcast %254 : vector<1x64xf32> to vector<16x64xf32>
    %257 = vector.broadcast %255 : vector<16x1xf32> to vector<16x64xf32>
    %258 = arith.mulf %256, %257 : vector<16x64xf32>
    %259 = vector.extract_strided_slice %160 {offsets = [10, 0], sizes = [1, 64], strides = [1, 1]} : vector<12x64xf32> to vector<1x64xf32>
    %260 = vector.extract_strided_slice %153 {offsets = [0, 10], sizes = [16, 1], strides = [1, 1]} : vector<16x12xf32> to vector<16x1xf32>
    %261 = vector.broadcast %259 : vector<1x64xf32> to vector<16x64xf32>
    %262 = vector.broadcast %260 : vector<16x1xf32> to vector<16x64xf32>
    %263 = arith.mulf %261, %262 : vector<16x64xf32>
    %264 = vector.extract_strided_slice %160 {offsets = [11, 0], sizes = [1, 64], strides = [1, 1]} : vector<12x64xf32> to vector<1x64xf32>
    %265 = vector.extract_strided_slice %153 {offsets = [0, 11], sizes = [16, 1], strides = [1, 1]} : vector<16x12xf32> to vector<16x1xf32>
    %266 = vector.broadcast %264 : vector<1x64xf32> to vector<16x64xf32>
    %267 = vector.broadcast %265 : vector<16x1xf32> to vector<16x64xf32>
    %268 = arith.mulf %266, %267 : vector<16x64xf32>
    %cst_65 = arith.constant 0.000000e+00 : f32
    %269 = vector.broadcast %cst_65 : f32 to vector<16x64xf32>
    %270 = arith.mulf %269, %164 : vector<16x64xf32>
    %271 = arith.addf %270, %213 : vector<16x64xf32>
    %272 = vector.extract_strided_slice %154 {offsets = [0, 0], sizes = [16, 1], strides = [1, 1]} : vector<16x12xf32> to vector<16x1xf32>
    %273 = vector.broadcast %272 : vector<16x1xf32> to vector<16x64xf32>
    %274 = arith.mulf %271, %273 : vector<16x64xf32>
    %cst_66 = arith.constant dense<0.000000e+00> : vector<64xf32>
    %275 = vector.multi_reduction <add>, %274, %cst_66 [0] : vector<16x64xf32> to vector<64xf32>
    %276 = vector.shape_cast %275 : vector<64xf32> to vector<1x64xf32>
    %277 = arith.mulf %271, %168 : vector<16x64xf32>
    %278 = arith.addf %277, %218 : vector<16x64xf32>
    %279 = vector.extract_strided_slice %154 {offsets = [0, 1], sizes = [16, 1], strides = [1, 1]} : vector<16x12xf32> to vector<16x1xf32>
    %280 = vector.broadcast %279 : vector<16x1xf32> to vector<16x64xf32>
    %281 = arith.mulf %278, %280 : vector<16x64xf32>
    %cst_67 = arith.constant dense<0.000000e+00> : vector<64xf32>
    %282 = vector.multi_reduction <add>, %281, %cst_67 [0] : vector<16x64xf32> to vector<64xf32>
    %283 = vector.shape_cast %282 : vector<64xf32> to vector<1x64xf32>
    %284 = arith.mulf %278, %172 : vector<16x64xf32>
    %285 = arith.addf %284, %223 : vector<16x64xf32>
    %286 = vector.extract_strided_slice %154 {offsets = [0, 2], sizes = [16, 1], strides = [1, 1]} : vector<16x12xf32> to vector<16x1xf32>
    %287 = vector.broadcast %286 : vector<16x1xf32> to vector<16x64xf32>
    %288 = arith.mulf %285, %287 : vector<16x64xf32>
    %cst_68 = arith.constant dense<0.000000e+00> : vector<64xf32>
    %289 = vector.multi_reduction <add>, %288, %cst_68 [0] : vector<16x64xf32> to vector<64xf32>
    %290 = vector.shape_cast %289 : vector<64xf32> to vector<1x64xf32>
    %291 = arith.mulf %285, %176 : vector<16x64xf32>
    %292 = arith.addf %291, %228 : vector<16x64xf32>
    %293 = vector.extract_strided_slice %154 {offsets = [0, 3], sizes = [16, 1], strides = [1, 1]} : vector<16x12xf32> to vector<16x1xf32>
    %294 = vector.broadcast %293 : vector<16x1xf32> to vector<16x64xf32>
    %295 = arith.mulf %292, %294 : vector<16x64xf32>
    %cst_69 = arith.constant dense<0.000000e+00> : vector<64xf32>
    %296 = vector.multi_reduction <add>, %295, %cst_69 [0] : vector<16x64xf32> to vector<64xf32>
    %297 = vector.shape_cast %296 : vector<64xf32> to vector<1x64xf32>
    %298 = arith.mulf %292, %180 : vector<16x64xf32>
    %299 = arith.addf %298, %233 : vector<16x64xf32>
    %300 = vector.extract_strided_slice %154 {offsets = [0, 4], sizes = [16, 1], strides = [1, 1]} : vector<16x12xf32> to vector<16x1xf32>
    %301 = vector.broadcast %300 : vector<16x1xf32> to vector<16x64xf32>
    %302 = arith.mulf %299, %301 : vector<16x64xf32>
    %cst_70 = arith.constant dense<0.000000e+00> : vector<64xf32>
    %303 = vector.multi_reduction <add>, %302, %cst_70 [0] : vector<16x64xf32> to vector<64xf32>
    %304 = vector.shape_cast %303 : vector<64xf32> to vector<1x64xf32>
    %305 = arith.mulf %299, %184 : vector<16x64xf32>
    %306 = arith.addf %305, %238 : vector<16x64xf32>
    %307 = vector.extract_strided_slice %154 {offsets = [0, 5], sizes = [16, 1], strides = [1, 1]} : vector<16x12xf32> to vector<16x1xf32>
    %308 = vector.broadcast %307 : vector<16x1xf32> to vector<16x64xf32>
    %309 = arith.mulf %306, %308 : vector<16x64xf32>
    %cst_71 = arith.constant dense<0.000000e+00> : vector<64xf32>
    %310 = vector.multi_reduction <add>, %309, %cst_71 [0] : vector<16x64xf32> to vector<64xf32>
    %311 = vector.shape_cast %310 : vector<64xf32> to vector<1x64xf32>
    %312 = arith.mulf %306, %188 : vector<16x64xf32>
    %313 = arith.addf %312, %243 : vector<16x64xf32>
    %314 = vector.extract_strided_slice %154 {offsets = [0, 6], sizes = [16, 1], strides = [1, 1]} : vector<16x12xf32> to vector<16x1xf32>
    %315 = vector.broadcast %314 : vector<16x1xf32> to vector<16x64xf32>
    %316 = arith.mulf %313, %315 : vector<16x64xf32>
    %cst_72 = arith.constant dense<0.000000e+00> : vector<64xf32>
    %317 = vector.multi_reduction <add>, %316, %cst_72 [0] : vector<16x64xf32> to vector<64xf32>
    %318 = vector.shape_cast %317 : vector<64xf32> to vector<1x64xf32>
    %319 = arith.mulf %313, %192 : vector<16x64xf32>
    %320 = arith.addf %319, %248 : vector<16x64xf32>
    %321 = vector.extract_strided_slice %154 {offsets = [0, 7], sizes = [16, 1], strides = [1, 1]} : vector<16x12xf32> to vector<16x1xf32>
    %322 = vector.broadcast %321 : vector<16x1xf32> to vector<16x64xf32>
    %323 = arith.mulf %320, %322 : vector<16x64xf32>
    %cst_73 = arith.constant dense<0.000000e+00> : vector<64xf32>
    %324 = vector.multi_reduction <add>, %323, %cst_73 [0] : vector<16x64xf32> to vector<64xf32>
    %325 = vector.shape_cast %324 : vector<64xf32> to vector<1x64xf32>
    %326 = arith.mulf %320, %196 : vector<16x64xf32>
    %327 = arith.addf %326, %253 : vector<16x64xf32>
    %328 = vector.extract_strided_slice %154 {offsets = [0, 8], sizes = [16, 1], strides = [1, 1]} : vector<16x12xf32> to vector<16x1xf32>
    %329 = vector.broadcast %328 : vector<16x1xf32> to vector<16x64xf32>
    %330 = arith.mulf %327, %329 : vector<16x64xf32>
    %cst_74 = arith.constant dense<0.000000e+00> : vector<64xf32>
    %331 = vector.multi_reduction <add>, %330, %cst_74 [0] : vector<16x64xf32> to vector<64xf32>
    %332 = vector.shape_cast %331 : vector<64xf32> to vector<1x64xf32>
    %333 = arith.mulf %327, %200 : vector<16x64xf32>
    %334 = arith.addf %333, %258 : vector<16x64xf32>
    %335 = vector.extract_strided_slice %154 {offsets = [0, 9], sizes = [16, 1], strides = [1, 1]} : vector<16x12xf32> to vector<16x1xf32>
    %336 = vector.broadcast %335 : vector<16x1xf32> to vector<16x64xf32>
    %337 = arith.mulf %334, %336 : vector<16x64xf32>
    %cst_75 = arith.constant dense<0.000000e+00> : vector<64xf32>
    %338 = vector.multi_reduction <add>, %337, %cst_75 [0] : vector<16x64xf32> to vector<64xf32>
    %339 = vector.shape_cast %338 : vector<64xf32> to vector<1x64xf32>
    %340 = arith.mulf %334, %204 : vector<16x64xf32>
    %341 = arith.addf %340, %263 : vector<16x64xf32>
    %342 = vector.extract_strided_slice %154 {offsets = [0, 10], sizes = [16, 1], strides = [1, 1]} : vector<16x12xf32> to vector<16x1xf32>
    %343 = vector.broadcast %342 : vector<16x1xf32> to vector<16x64xf32>
    %344 = arith.mulf %341, %343 : vector<16x64xf32>
    %cst_76 = arith.constant dense<0.000000e+00> : vector<64xf32>
    %345 = vector.multi_reduction <add>, %344, %cst_76 [0] : vector<16x64xf32> to vector<64xf32>
    %346 = vector.shape_cast %345 : vector<64xf32> to vector<1x64xf32>
    %347 = arith.mulf %341, %208 : vector<16x64xf32>
    %348 = arith.addf %347, %268 : vector<16x64xf32>
    %349 = vector.extract_strided_slice %154 {offsets = [0, 11], sizes = [16, 1], strides = [1, 1]} : vector<16x12xf32> to vector<16x1xf32>
    %350 = vector.broadcast %349 : vector<16x1xf32> to vector<16x64xf32>
    %351 = arith.mulf %348, %350 : vector<16x64xf32>
    %cst_77 = arith.constant dense<0.000000e+00> : vector<64xf32>
    %352 = vector.multi_reduction <add>, %351, %cst_77 [0] : vector<16x64xf32> to vector<64xf32>
    %353 = vector.shape_cast %352 : vector<64xf32> to vector<1x64xf32>
    %354 = tpu.concatenate %276, %283, %290, %297, %304, %311, %318, %325, %332, %339, %346, %353 in 0 : vector<1x64xf32>, vector<1x64xf32>, vector<1x64xf32>, vector<1x64xf32>, vector<1x64xf32>, vector<1x64xf32>, vector<1x64xf32>, vector<1x64xf32>, vector<1x64xf32>, vector<1x64xf32>, vector<1x64xf32>, vector<1x64xf32> -> vector<12x64xf32>
    %355 = vector.broadcast %16 : vector<1x64xf32> to vector<12x64xf32>
    %356 = arith.mulf %355, %127 : vector<12x64xf32>
    %357 = arith.addf %354, %356 : vector<12x64xf32>
    %358 = arith.negf %37 : vector<12x64xf32>
    %359 = math.exp %358 : vector<12x64xf32>
    %cst_78 = arith.constant 1.000000e+00 : f32
    %360 = vector.broadcast %cst_78 : f32 to vector<12x64xf32>
    %361 = arith.addf %360, %359 : vector<12x64xf32>
    %362 = arith.divf %360, %361 : vector<12x64xf32>
    %363 = arith.mulf %37, %362 : vector<12x64xf32>
    %364 = arith.mulf %357, %363 : vector<12x64xf32>
    %365 = arith.mulf %93, %93 : vector<12x64xf32>
    %cst_79 = arith.constant dense<0.000000e+00> : vector<12xf32>
    %366 = vector.multi_reduction <add>, %365, %cst_79 [1] : vector<12x64xf32> to vector<12xf32>
    %367 = vector.shape_cast %366 : vector<12xf32> to vector<12x1xf32>
    %cst_80 = arith.constant 6.400000e+01 : f32
    %368 = vector.broadcast %cst_80 : f32 to vector<12x1xf32>
    %369 = arith.divf %367, %368 : vector<12x1xf32>
    %cst_81 = arith.constant 9.99999997E-7 : f32
    %370 = vector.broadcast %cst_81 : f32 to vector<12x1xf32>
    %371 = arith.addf %369, %370 : vector<12x1xf32>
    %372 = math.rsqrt %371 : vector<12x1xf32>
    %373 = vector.broadcast %372 : vector<12x1xf32> to vector<12x64xf32>
    %374 = arith.mulf %93, %373 : vector<12x64xf32>
    %375 = vector.broadcast %17 : vector<1x64xf32> to vector<12x64xf32>
    %376 = arith.mulf %374, %375 : vector<12x64xf32>
    %377 = arith.mulf %364, %364 : vector<12x64xf32>
    %cst_82 = arith.constant dense<0.000000e+00> : vector<12xf32>
    %378 = vector.multi_reduction <add>, %377, %cst_82 [1] : vector<12x64xf32> to vector<12xf32>
    %379 = vector.shape_cast %378 : vector<12xf32> to vector<12x1xf32>
    %cst_83 = arith.constant 6.400000e+01 : f32
    %380 = vector.broadcast %cst_83 : f32 to vector<12x1xf32>
    %381 = arith.divf %379, %380 : vector<12x1xf32>
    %cst_84 = arith.constant 9.99999997E-7 : f32
    %382 = vector.broadcast %cst_84 : f32 to vector<12x1xf32>
    %383 = arith.addf %381, %382 : vector<12x1xf32>
    %384 = math.rsqrt %383 : vector<12x1xf32>
    %385 = vector.broadcast %384 : vector<12x1xf32> to vector<12x64xf32>
    %386 = arith.mulf %364, %385 : vector<12x64xf32>
    %387 = vector.broadcast %18 : vector<1x64xf32> to vector<12x64xf32>
    %388 = arith.mulf %386, %387 : vector<12x64xf32>
    %389 = arith.addf %376, %388 : vector<12x64xf32>
    %cst_85 = arith.constant 5.000000e-01 : f32
    %390 = vector.broadcast %cst_85 : f32 to vector<12x64xf32>
    %391 = arith.mulf %390, %389 : vector<12x64xf32>
    %c0_86 = arith.constant 0 : index
    %c0_87 = arith.constant 0 : index
    %c0_88 = arith.constant 0 : index
    %392 = vector.load %arg16[%c0_86, %c0_87, %c0_88] : memref<2x64x32xf32, #tpu.memory_space<vmem>>, vector<1x64x32xf32>
    %393 = vector.shape_cast %392 : vector<1x64x32xf32> to vector<64x32xf32>
    %cst_89 = arith.constant dense<0.000000e+00> : vector<12x32xf32>
    %394 = tpu.matmul %391, %393, %cst_89 {dimension_numbers = #tpu.dot_dimension_numbers<[1], [0], [0], [1], [0, 0, 1, 1], [], []>} : vector<12x64xf32>, vector<64x32xf32>, vector<12x32xf32> -> vector<12x32xf32>
    %395 = arith.addf %3, %394 : vector<12x32xf32>
    %396 = arith.mulf %395, %395 : vector<12x32xf32>
    %cst_90 = arith.constant dense<0.000000e+00> : vector<12xf32>
    %397 = vector.multi_reduction <add>, %396, %cst_90 [1] : vector<12x32xf32> to vector<12xf32>
    %398 = vector.shape_cast %397 : vector<12xf32> to vector<12x1xf32>
    %cst_91 = arith.constant 3.200000e+01 : f32
    %399 = vector.broadcast %cst_91 : f32 to vector<12x1xf32>
    %400 = arith.divf %398, %399 : vector<12x1xf32>
    %cst_92 = arith.constant 9.99999997E-7 : f32
    %401 = vector.broadcast %cst_92 : f32 to vector<12x1xf32>
    %402 = arith.addf %400, %401 : vector<12x1xf32>
    %403 = math.rsqrt %402 : vector<12x1xf32>
    %404 = vector.broadcast %403 : vector<12x1xf32> to vector<12x32xf32>
    %405 = arith.mulf %395, %404 : vector<12x32xf32>
    %406 = vector.broadcast %13 : vector<1x32xf32> to vector<12x32xf32>
    %407 = arith.mulf %405, %406 : vector<12x32xf32>
    %c0_93 = arith.constant 0 : index
    %c0_94 = arith.constant 0 : index
    %c0_95 = arith.constant 0 : index
    %408 = vector.load %arg17[%c0_93, %c0_94, %c0_95] : memref<2x32x128xf32, #tpu.memory_space<vmem>>, vector<1x32x128xf32>
    %409 = vector.shape_cast %408 : vector<1x32x128xf32> to vector<32x128xf32>
    %cst_96 = arith.constant dense<0.000000e+00> : vector<12x128xf32>
    %410 = tpu.matmul %407, %409, %cst_96 {dimension_numbers = #tpu.dot_dimension_numbers<[1], [0], [0], [1], [0, 0, 1, 1], [], []>} : vector<12x32xf32>, vector<32x128xf32>, vector<12x128xf32> -> vector<12x128xf32>
    %411 = vector.extract_strided_slice %410 {offsets = [0, 0], sizes = [12, 64], strides = [1, 1]} : vector<12x128xf32> to vector<12x64xf32>
    %412 = arith.negf %411 : vector<12x64xf32>
    %413 = math.exp %412 : vector<12x64xf32>
    %cst_97 = arith.constant 1.000000e+00 : f32
    %414 = vector.broadcast %cst_97 : f32 to vector<12x64xf32>
    %415 = arith.addf %414, %413 : vector<12x64xf32>
    %416 = arith.divf %414, %415 : vector<12x64xf32>
    %417 = arith.mulf %411, %416 : vector<12x64xf32>
    %418 = vector.extract_strided_slice %410 {offsets = [0, 64], sizes = [12, 64], strides = [1, 1]} : vector<12x128xf32> to vector<12x64xf32>
    %419 = arith.mulf %417, %418 : vector<12x64xf32>
    %c0_98 = arith.constant 0 : index
    %c0_99 = arith.constant 0 : index
    %c0_100 = arith.constant 0 : index
    %420 = vector.load %arg18[%c0_98, %c0_99, %c0_100] : memref<2x64x32xf32, #tpu.memory_space<vmem>>, vector<1x64x32xf32>
    %421 = vector.shape_cast %420 : vector<1x64x32xf32> to vector<64x32xf32>
    %cst_101 = arith.constant dense<0.000000e+00> : vector<12x32xf32>
    %422 = tpu.matmul %419, %421, %cst_101 {dimension_numbers = #tpu.dot_dimension_numbers<[1], [0], [0], [1], [0, 0, 1, 1], [], []>} : vector<12x64xf32>, vector<64x32xf32>, vector<12x32xf32> -> vector<12x32xf32>
    %423 = arith.addf %395, %422 : vector<12x32xf32>
    %c1 = arith.constant 1 : index
    %c0_102 = arith.constant 0 : index
    %c0_103 = arith.constant 0 : index
    %424 = vector.load %arg19[%c1, %c0_102, %c0_103] : memref<2x8x64xf32, #tpu.memory_space<vmem>>, vector<1x8x64xf32>
    %425 = vector.shape_cast %424 : vector<1x8x64xf32> to vector<8x64xf32>
    %426 = vector.extract_strided_slice %425 {offsets = [0, 0], sizes = [1, 32], strides = [1, 1]} : vector<8x64xf32> to vector<1x32xf32>
    %427 = vector.extract_strided_slice %425 {offsets = [1, 0], sizes = [1, 32], strides = [1, 1]} : vector<8x64xf32> to vector<1x32xf32>
    %428 = vector.extract_strided_slice %425 {offsets = [2, 0], sizes = [1, 64], strides = [1, 1]} : vector<8x64xf32> to vector<1x64xf32>
    %429 = vector.extract_strided_slice %425 {offsets = [3, 0], sizes = [1, 64], strides = [1, 1]} : vector<8x64xf32> to vector<1x64xf32>
    %430 = vector.extract_strided_slice %425 {offsets = [4, 0], sizes = [1, 64], strides = [1, 1]} : vector<8x64xf32> to vector<1x64xf32>
    %431 = vector.extract_strided_slice %425 {offsets = [5, 0], sizes = [1, 64], strides = [1, 1]} : vector<8x64xf32> to vector<1x64xf32>
    %432 = vector.extract_strided_slice %425 {offsets = [6, 0], sizes = [1, 64], strides = [1, 1]} : vector<8x64xf32> to vector<1x64xf32>
    %433 = arith.mulf %423, %423 : vector<12x32xf32>
    %cst_104 = arith.constant dense<0.000000e+00> : vector<12xf32>
    %434 = vector.multi_reduction <add>, %433, %cst_104 [1] : vector<12x32xf32> to vector<12xf32>
    %435 = vector.shape_cast %434 : vector<12xf32> to vector<12x1xf32>
    %cst_105 = arith.constant 3.200000e+01 : f32
    %436 = vector.broadcast %cst_105 : f32 to vector<12x1xf32>
    %437 = arith.divf %435, %436 : vector<12x1xf32>
    %cst_106 = arith.constant 9.99999997E-7 : f32
    %438 = vector.broadcast %cst_106 : f32 to vector<12x1xf32>
    %439 = arith.addf %437, %438 : vector<12x1xf32>
    %440 = math.rsqrt %439 : vector<12x1xf32>
    %441 = vector.broadcast %440 : vector<12x1xf32> to vector<12x32xf32>
    %442 = arith.mulf %423, %441 : vector<12x32xf32>
    %443 = vector.broadcast %426 : vector<1x32xf32> to vector<12x32xf32>
    %444 = arith.mulf %442, %443 : vector<12x32xf32>
    %c1_107 = arith.constant 1 : index
    %c0_108 = arith.constant 0 : index
    %c0_109 = arith.constant 0 : index
    %445 = vector.load %arg10[%c1_107, %c0_108, %c0_109] : memref<2x32x192xf32, #tpu.memory_space<vmem>>, vector<1x32x192xf32>
    %446 = vector.shape_cast %445 : vector<1x32x192xf32> to vector<32x192xf32>
    %cst_110 = arith.constant dense<0.000000e+00> : vector<12x192xf32>
    %447 = tpu.matmul %444, %446, %cst_110 {dimension_numbers = #tpu.dot_dimension_numbers<[1], [0], [0], [1], [0, 0, 1, 1], [], []>} : vector<12x32xf32>, vector<32x192xf32>, vector<12x192xf32> -> vector<12x192xf32>
    %448 = vector.extract_strided_slice %447 {offsets = [0, 0], sizes = [12, 64], strides = [1, 1]} : vector<12x192xf32> to vector<12x64xf32>
    %449 = vector.extract_strided_slice %447 {offsets = [0, 64], sizes = [12, 32], strides = [1, 1]} : vector<12x192xf32> to vector<12x32xf32>
    %450 = vector.extract_strided_slice %447 {offsets = [0, 96], sizes = [12, 32], strides = [1, 1]} : vector<12x192xf32> to vector<12x32xf32>
    %451 = vector.extract_strided_slice %447 {offsets = [0, 128], sizes = [12, 64], strides = [1, 1]} : vector<12x192xf32> to vector<12x64xf32>
    %452 = arith.mulf %448, %4 : vector<12x64xf32>
    %cst_111 = arith.constant dense<0.000000e+00> : vector<12x64xf32>
    %453 = tpu.matmul %448, %8, %cst_111 {dimension_numbers = #tpu.dot_dimension_numbers<[1], [0], [0], [1], [0, 0, 1, 1], [], []>} : vector<12x64xf32>, vector<64x64xf32>, vector<12x64xf32> -> vector<12x64xf32>
    %454 = arith.mulf %453, %5 : vector<12x64xf32>
    %455 = arith.addf %452, %454 : vector<12x64xf32>
    %456 = arith.mulf %449, %6 : vector<12x32xf32>
    %cst_112 = arith.constant dense<0.000000e+00> : vector<12x32xf32>
    %457 = tpu.matmul %449, %9, %cst_112 {dimension_numbers = #tpu.dot_dimension_numbers<[1], [0], [0], [1], [0, 0, 1, 1], [], []>} : vector<12x32xf32>, vector<32x32xf32>, vector<12x32xf32> -> vector<12x32xf32>
    %458 = arith.mulf %457, %7 : vector<12x32xf32>
    %459 = arith.addf %456, %458 : vector<12x32xf32>
    %c1_113 = arith.constant 1 : index
    %c0_114 = arith.constant 0 : index
    %c0_115 = arith.constant 0 : index
    %460 = vector.load %arg3[%c1_113, %c0_114, %c0_115] : memref<2x12x12xf32, #tpu.memory_space<vmem>>, vector<1x12x12xf32>
    %461 = vector.shape_cast %460 : vector<1x12x12xf32> to vector<12x12xf32>
    %462 = tpu.concatenate %461, %461 in 0 : vector<12x12xf32>, vector<12x12xf32> -> vector<24x12xf32>
    %463 = vector.extract_strided_slice %459 {offsets = [0, 0], sizes = [12, 16], strides = [1, 1]} : vector<12x32xf32> to vector<12x16xf32>
    %464 = vector.extract_strided_slice %450 {offsets = [0, 0], sizes = [12, 16], strides = [1, 1]} : vector<12x32xf32> to vector<12x16xf32>
    %465 = vector.extract_strided_slice %455 {offsets = [0, 0], sizes = [12, 16], strides = [1, 1]} : vector<12x64xf32> to vector<12x16xf32>
    %466 = vector.extract_strided_slice %455 {offsets = [0, 16], sizes = [12, 16], strides = [1, 1]} : vector<12x64xf32> to vector<12x16xf32>
    %467 = tpu.concatenate %465, %466 in 0 : vector<12x16xf32>, vector<12x16xf32> -> vector<24x16xf32>
    %cst_116 = arith.constant dense<0.000000e+00> : vector<24x12xf32>
    %468 = tpu.matmul %467, %463, %cst_116 {dimension_numbers = #tpu.dot_dimension_numbers<[1], [1], [0], [0], [0, 0, 1, 0], [], []>} : vector<24x16xf32>, vector<12x16xf32>, vector<24x12xf32> -> vector<24x12xf32>
    %cst_117 = arith.constant 2.500000e-01 : f32
    %469 = vector.broadcast %cst_117 : f32 to vector<24x12xf32>
    %470 = arith.mulf %468, %469 : vector<24x12xf32>
    %471 = arith.addf %470, %462 : vector<24x12xf32>
    %cst_118 = arith.constant dense<0xFF800000> : vector<24xf32>
    %472 = vector.multi_reduction <maximumf>, %471, %cst_118 [1] : vector<24x12xf32> to vector<24xf32>
    %473 = vector.shape_cast %472 : vector<24xf32> to vector<24x1xf32>
    %474 = vector.broadcast %473 : vector<24x1xf32> to vector<24x12xf32>
    %475 = arith.subf %471, %474 : vector<24x12xf32>
    %476 = math.exp %475 : vector<24x12xf32>
    %cst_119 = arith.constant dense<0.000000e+00> : vector<24xf32>
    %477 = vector.multi_reduction <add>, %476, %cst_119 [1] : vector<24x12xf32> to vector<24xf32>
    %478 = vector.shape_cast %477 : vector<24xf32> to vector<24x1xf32>
    %479 = tpu.reciprocal %478 {approx = true} : vector<24x1xf32> -> vector<24x1xf32>
    %480 = vector.broadcast %479 : vector<24x1xf32> to vector<24x12xf32>
    %481 = arith.mulf %476, %480 : vector<24x12xf32>
    %cst_120 = arith.constant dense<0.000000e+00> : vector<24x16xf32>
    %482 = tpu.matmul %481, %464, %cst_120 {dimension_numbers = #tpu.dot_dimension_numbers<[1], [0], [0], [1], [0, 0, 1, 1], [], []>} : vector<24x12xf32>, vector<12x16xf32>, vector<24x16xf32> -> vector<24x16xf32>
    %483 = vector.extract_strided_slice %482 {offsets = [0, 0], sizes = [12, 16], strides = [1, 1]} : vector<24x16xf32> to vector<12x16xf32>
    %484 = vector.extract_strided_slice %482 {offsets = [12, 0], sizes = [12, 16], strides = [1, 1]} : vector<24x16xf32> to vector<12x16xf32>
    %485 = vector.extract_strided_slice %459 {offsets = [0, 16], sizes = [12, 16], strides = [1, 1]} : vector<12x32xf32> to vector<12x16xf32>
    %486 = vector.extract_strided_slice %450 {offsets = [0, 16], sizes = [12, 16], strides = [1, 1]} : vector<12x32xf32> to vector<12x16xf32>
    %487 = vector.extract_strided_slice %455 {offsets = [0, 32], sizes = [12, 16], strides = [1, 1]} : vector<12x64xf32> to vector<12x16xf32>
    %488 = vector.extract_strided_slice %455 {offsets = [0, 48], sizes = [12, 16], strides = [1, 1]} : vector<12x64xf32> to vector<12x16xf32>
    %489 = tpu.concatenate %487, %488 in 0 : vector<12x16xf32>, vector<12x16xf32> -> vector<24x16xf32>
    %cst_121 = arith.constant dense<0.000000e+00> : vector<24x12xf32>
    %490 = tpu.matmul %489, %485, %cst_121 {dimension_numbers = #tpu.dot_dimension_numbers<[1], [1], [0], [0], [0, 0, 1, 0], [], []>} : vector<24x16xf32>, vector<12x16xf32>, vector<24x12xf32> -> vector<24x12xf32>
    %cst_122 = arith.constant 2.500000e-01 : f32
    %491 = vector.broadcast %cst_122 : f32 to vector<24x12xf32>
    %492 = arith.mulf %490, %491 : vector<24x12xf32>
    %493 = arith.addf %492, %462 : vector<24x12xf32>
    %cst_123 = arith.constant dense<0xFF800000> : vector<24xf32>
    %494 = vector.multi_reduction <maximumf>, %493, %cst_123 [1] : vector<24x12xf32> to vector<24xf32>
    %495 = vector.shape_cast %494 : vector<24xf32> to vector<24x1xf32>
    %496 = vector.broadcast %495 : vector<24x1xf32> to vector<24x12xf32>
    %497 = arith.subf %493, %496 : vector<24x12xf32>
    %498 = math.exp %497 : vector<24x12xf32>
    %cst_124 = arith.constant dense<0.000000e+00> : vector<24xf32>
    %499 = vector.multi_reduction <add>, %498, %cst_124 [1] : vector<24x12xf32> to vector<24xf32>
    %500 = vector.shape_cast %499 : vector<24xf32> to vector<24x1xf32>
    %501 = tpu.reciprocal %500 {approx = true} : vector<24x1xf32> -> vector<24x1xf32>
    %502 = vector.broadcast %501 : vector<24x1xf32> to vector<24x12xf32>
    %503 = arith.mulf %498, %502 : vector<24x12xf32>
    %cst_125 = arith.constant dense<0.000000e+00> : vector<24x16xf32>
    %504 = tpu.matmul %503, %486, %cst_125 {dimension_numbers = #tpu.dot_dimension_numbers<[1], [0], [0], [1], [0, 0, 1, 1], [], []>} : vector<24x12xf32>, vector<12x16xf32>, vector<24x16xf32> -> vector<24x16xf32>
    %505 = vector.extract_strided_slice %504 {offsets = [0, 0], sizes = [12, 16], strides = [1, 1]} : vector<24x16xf32> to vector<12x16xf32>
    %506 = vector.extract_strided_slice %504 {offsets = [12, 0], sizes = [12, 16], strides = [1, 1]} : vector<24x16xf32> to vector<12x16xf32>
    %507 = tpu.concatenate %483, %484, %505, %506 in 1 : vector<12x16xf32>, vector<12x16xf32>, vector<12x16xf32>, vector<12x16xf32> -> vector<12x64xf32>
    %c1_126 = arith.constant 1 : index
    %c0_127 = arith.constant 0 : index
    %c0_128 = arith.constant 0 : index
    %508 = vector.load %arg11[%c1_126, %c0_127, %c0_128] : memref<2x4x64xf32, #tpu.memory_space<vmem>>, vector<1x4x64xf32>
    %509 = vector.shape_cast %508 : vector<1x4x64xf32> to vector<4x64xf32>
    %510 = vector.extract_strided_slice %509 {offsets = [3, 0], sizes = [1, 64], strides = [1, 1]} : vector<4x64xf32> to vector<1x64xf32>
    %511 = vector.broadcast %510 : vector<1x64xf32> to vector<12x64xf32>
    %512 = arith.mulf %448, %511 : vector<12x64xf32>
    %cst_129 = arith.constant 0.000000e+00 : f32
    %513 = vector.broadcast %cst_129 : f32 to vector<1x64xf32>
    %514 = vector.extract_strided_slice %448 {offsets = [0, 0], sizes = [11, 64], strides = [1, 1]} : vector<12x64xf32> to vector<11x64xf32>
    %515 = tpu.concatenate %513, %514 in 0 : vector<1x64xf32>, vector<11x64xf32> -> vector<12x64xf32>
    %516 = vector.extract_strided_slice %509 {offsets = [2, 0], sizes = [1, 64], strides = [1, 1]} : vector<4x64xf32> to vector<1x64xf32>
    %517 = vector.broadcast %516 : vector<1x64xf32> to vector<12x64xf32>
    %518 = arith.mulf %515, %517 : vector<12x64xf32>
    %519 = arith.addf %512, %518 : vector<12x64xf32>
    %cst_130 = arith.constant 0.000000e+00 : f32
    %520 = vector.broadcast %cst_130 : f32 to vector<2x64xf32>
    %521 = vector.extract_strided_slice %448 {offsets = [0, 0], sizes = [10, 64], strides = [1, 1]} : vector<12x64xf32> to vector<10x64xf32>
    %522 = tpu.concatenate %520, %521 in 0 : vector<2x64xf32>, vector<10x64xf32> -> vector<12x64xf32>
    %523 = vector.extract_strided_slice %509 {offsets = [1, 0], sizes = [1, 64], strides = [1, 1]} : vector<4x64xf32> to vector<1x64xf32>
    %524 = vector.broadcast %523 : vector<1x64xf32> to vector<12x64xf32>
    %525 = arith.mulf %522, %524 : vector<12x64xf32>
    %526 = arith.addf %519, %525 : vector<12x64xf32>
    %cst_131 = arith.constant 0.000000e+00 : f32
    %527 = vector.broadcast %cst_131 : f32 to vector<3x64xf32>
    %528 = vector.extract_strided_slice %448 {offsets = [0, 0], sizes = [9, 64], strides = [1, 1]} : vector<12x64xf32> to vector<9x64xf32>
    %529 = tpu.concatenate %527, %528 in 0 : vector<3x64xf32>, vector<9x64xf32> -> vector<12x64xf32>
    %530 = vector.extract_strided_slice %509 {offsets = [0, 0], sizes = [1, 64], strides = [1, 1]} : vector<4x64xf32> to vector<1x64xf32>
    %531 = vector.broadcast %530 : vector<1x64xf32> to vector<12x64xf32>
    %532 = arith.mulf %529, %531 : vector<12x64xf32>
    %533 = arith.addf %526, %532 : vector<12x64xf32>
    %534 = vector.broadcast %428 : vector<1x64xf32> to vector<12x64xf32>
    %535 = arith.addf %533, %534 : vector<12x64xf32>
    %536 = arith.negf %535 : vector<12x64xf32>
    %537 = math.exp %536 : vector<12x64xf32>
    %cst_132 = arith.constant 1.000000e+00 : f32
    %538 = vector.broadcast %cst_132 : f32 to vector<12x64xf32>
    %539 = arith.addf %538, %537 : vector<12x64xf32>
    %540 = arith.divf %538, %539 : vector<12x64xf32>
    %541 = arith.mulf %535, %540 : vector<12x64xf32>
    %c1_133 = arith.constant 1 : index
    %c0_134 = arith.constant 0 : index
    %c0_135 = arith.constant 0 : index
    %542 = vector.load %arg12[%c1_133, %c0_134, %c0_135] : memref<2x64x8xf32, #tpu.memory_space<vmem>>, vector<1x64x8xf32>
    %543 = vector.shape_cast %542 : vector<1x64x8xf32> to vector<64x8xf32>
    %cst_136 = arith.constant dense<0.000000e+00> : vector<12x8xf32>
    %544 = tpu.matmul %541, %543, %cst_136 {dimension_numbers = #tpu.dot_dimension_numbers<[1], [0], [0], [1], [0, 0, 1, 1], [], []>} : vector<12x64xf32>, vector<64x8xf32>, vector<12x8xf32> -> vector<12x8xf32>
    %c1_137 = arith.constant 1 : index
    %c0_138 = arith.constant 0 : index
    %c0_139 = arith.constant 0 : index
    %545 = vector.load %arg14[%c1_137, %c0_138, %c0_139] : memref<2x8x64xf32, #tpu.memory_space<vmem>>, vector<1x8x64xf32>
    %546 = vector.shape_cast %545 : vector<1x8x64xf32> to vector<8x64xf32>
    %cst_140 = arith.constant dense<0.000000e+00> : vector<12x64xf32>
    %547 = tpu.matmul %544, %546, %cst_140 {dimension_numbers = #tpu.dot_dimension_numbers<[1], [0], [0], [1], [0, 0, 1, 1], [], []>} : vector<12x8xf32>, vector<8x64xf32>, vector<12x64xf32> -> vector<12x64xf32>
    %548 = vector.broadcast %429 : vector<1x64xf32> to vector<12x64xf32>
    %549 = arith.addf %547, %548 : vector<12x64xf32>
    %cst_141 = arith.constant 0.000000e+00 : f32
    %550 = vector.broadcast %cst_141 : f32 to vector<12x64xf32>
    %551 = arith.maximumf %549, %550 : vector<12x64xf32>
    %552 = vector.broadcast %cst_141 : f32 to vector<12x64xf32>
    %553 = arith.subf %549, %552 : vector<12x64xf32>
    %554 = arith.cmpf one, %553, %553 : vector<12x64xf32>
    %555 = vector.broadcast %cst_141 : f32 to vector<12x64xf32>
    %556 = arith.addf %549, %555 : vector<12x64xf32>
    %557 = math.absf %553 : vector<12x64xf32>
    %cst_142 = arith.constant 0.000000e+00 : f32
    %558 = vector.broadcast %cst_142 : f32 to vector<12x64xf32>
    %559 = arith.subf %558, %557 : vector<12x64xf32>
    %560 = math.exp %559 : vector<12x64xf32>
    %561 = math.log1p %560 : vector<12x64xf32>
    %562 = arith.addf %551, %561 : vector<12x64xf32>
    %563 = arith.select %554, %556, %562 : vector<12x64xi1>, vector<12x64xf32>
    %c1_143 = arith.constant 1 : index
    %c0_144 = arith.constant 0 : index
    %c0_145 = arith.constant 0 : index
    %564 = vector.load %arg13[%c1_143, %c0_144, %c0_145] : memref<2x32x64xf32, #tpu.memory_space<vmem>>, vector<1x32x64xf32>
    %565 = vector.shape_cast %564 : vector<1x32x64xf32> to vector<32x64xf32>
    %cst_146 = arith.constant dense<0.000000e+00> : vector<32x12xf32>
    %566 = tpu.matmul %565, %541, %cst_146 {dimension_numbers = #tpu.dot_dimension_numbers<[1], [1], [0], [0], [0, 0, 1, 0], [], []>} : vector<32x64xf32>, vector<12x64xf32>, vector<32x12xf32> -> vector<32x12xf32>
    %567 = vector.extract_strided_slice %566 {offsets = [0, 0], sizes = [16, 12], strides = [1, 1]} : vector<32x12xf32> to vector<16x12xf32>
    %568 = vector.extract_strided_slice %566 {offsets = [16, 0], sizes = [16, 12], strides = [1, 1]} : vector<32x12xf32> to vector<16x12xf32>
    %c1_147 = arith.constant 1 : index
    %c0_148 = arith.constant 0 : index
    %c0_149 = arith.constant 0 : index
    %569 = vector.load %arg15[%c1_147, %c0_148, %c0_149] : memref<2x16x64xf32, #tpu.memory_space<vmem>>, vector<1x16x64xf32>
    %570 = vector.shape_cast %569 : vector<1x16x64xf32> to vector<16x64xf32>
    %571 = math.exp %570 : vector<16x64xf32>
    %cst_150 = arith.constant 0.000000e+00 : f32
    %572 = vector.broadcast %cst_150 : f32 to vector<16x64xf32>
    %573 = arith.subf %572, %571 : vector<16x64xf32>
    %574 = arith.mulf %563, %541 : vector<12x64xf32>
    %575 = vector.extract_strided_slice %563 {offsets = [0, 0], sizes = [1, 64], strides = [1, 1]} : vector<12x64xf32> to vector<1x64xf32>
    %576 = vector.broadcast %575 : vector<1x64xf32> to vector<16x64xf32>
    %577 = arith.mulf %576, %573 : vector<16x64xf32>
    %578 = math.exp %577 : vector<16x64xf32>
    %579 = vector.extract_strided_slice %563 {offsets = [1, 0], sizes = [1, 64], strides = [1, 1]} : vector<12x64xf32> to vector<1x64xf32>
    %580 = vector.broadcast %579 : vector<1x64xf32> to vector<16x64xf32>
    %581 = arith.mulf %580, %573 : vector<16x64xf32>
    %582 = math.exp %581 : vector<16x64xf32>
    %583 = vector.extract_strided_slice %563 {offsets = [2, 0], sizes = [1, 64], strides = [1, 1]} : vector<12x64xf32> to vector<1x64xf32>
    %584 = vector.broadcast %583 : vector<1x64xf32> to vector<16x64xf32>
    %585 = arith.mulf %584, %573 : vector<16x64xf32>
    %586 = math.exp %585 : vector<16x64xf32>
    %587 = vector.extract_strided_slice %563 {offsets = [3, 0], sizes = [1, 64], strides = [1, 1]} : vector<12x64xf32> to vector<1x64xf32>
    %588 = vector.broadcast %587 : vector<1x64xf32> to vector<16x64xf32>
    %589 = arith.mulf %588, %573 : vector<16x64xf32>
    %590 = math.exp %589 : vector<16x64xf32>
    %591 = vector.extract_strided_slice %563 {offsets = [4, 0], sizes = [1, 64], strides = [1, 1]} : vector<12x64xf32> to vector<1x64xf32>
    %592 = vector.broadcast %591 : vector<1x64xf32> to vector<16x64xf32>
    %593 = arith.mulf %592, %573 : vector<16x64xf32>
    %594 = math.exp %593 : vector<16x64xf32>
    %595 = vector.extract_strided_slice %563 {offsets = [5, 0], sizes = [1, 64], strides = [1, 1]} : vector<12x64xf32> to vector<1x64xf32>
    %596 = vector.broadcast %595 : vector<1x64xf32> to vector<16x64xf32>
    %597 = arith.mulf %596, %573 : vector<16x64xf32>
    %598 = math.exp %597 : vector<16x64xf32>
    %599 = vector.extract_strided_slice %563 {offsets = [6, 0], sizes = [1, 64], strides = [1, 1]} : vector<12x64xf32> to vector<1x64xf32>
    %600 = vector.broadcast %599 : vector<1x64xf32> to vector<16x64xf32>
    %601 = arith.mulf %600, %573 : vector<16x64xf32>
    %602 = math.exp %601 : vector<16x64xf32>
    %603 = vector.extract_strided_slice %563 {offsets = [7, 0], sizes = [1, 64], strides = [1, 1]} : vector<12x64xf32> to vector<1x64xf32>
    %604 = vector.broadcast %603 : vector<1x64xf32> to vector<16x64xf32>
    %605 = arith.mulf %604, %573 : vector<16x64xf32>
    %606 = math.exp %605 : vector<16x64xf32>
    %607 = vector.extract_strided_slice %563 {offsets = [8, 0], sizes = [1, 64], strides = [1, 1]} : vector<12x64xf32> to vector<1x64xf32>
    %608 = vector.broadcast %607 : vector<1x64xf32> to vector<16x64xf32>
    %609 = arith.mulf %608, %573 : vector<16x64xf32>
    %610 = math.exp %609 : vector<16x64xf32>
    %611 = vector.extract_strided_slice %563 {offsets = [9, 0], sizes = [1, 64], strides = [1, 1]} : vector<12x64xf32> to vector<1x64xf32>
    %612 = vector.broadcast %611 : vector<1x64xf32> to vector<16x64xf32>
    %613 = arith.mulf %612, %573 : vector<16x64xf32>
    %614 = math.exp %613 : vector<16x64xf32>
    %615 = vector.extract_strided_slice %563 {offsets = [10, 0], sizes = [1, 64], strides = [1, 1]} : vector<12x64xf32> to vector<1x64xf32>
    %616 = vector.broadcast %615 : vector<1x64xf32> to vector<16x64xf32>
    %617 = arith.mulf %616, %573 : vector<16x64xf32>
    %618 = math.exp %617 : vector<16x64xf32>
    %619 = vector.extract_strided_slice %563 {offsets = [11, 0], sizes = [1, 64], strides = [1, 1]} : vector<12x64xf32> to vector<1x64xf32>
    %620 = vector.broadcast %619 : vector<1x64xf32> to vector<16x64xf32>
    %621 = arith.mulf %620, %573 : vector<16x64xf32>
    %622 = math.exp %621 : vector<16x64xf32>
    %623 = vector.extract_strided_slice %574 {offsets = [0, 0], sizes = [1, 64], strides = [1, 1]} : vector<12x64xf32> to vector<1x64xf32>
    %624 = vector.extract_strided_slice %567 {offsets = [0, 0], sizes = [16, 1], strides = [1, 1]} : vector<16x12xf32> to vector<16x1xf32>
    %625 = vector.broadcast %623 : vector<1x64xf32> to vector<16x64xf32>
    %626 = vector.broadcast %624 : vector<16x1xf32> to vector<16x64xf32>
    %627 = arith.mulf %625, %626 : vector<16x64xf32>
    %628 = vector.extract_strided_slice %574 {offsets = [1, 0], sizes = [1, 64], strides = [1, 1]} : vector<12x64xf32> to vector<1x64xf32>
    %629 = vector.extract_strided_slice %567 {offsets = [0, 1], sizes = [16, 1], strides = [1, 1]} : vector<16x12xf32> to vector<16x1xf32>
    %630 = vector.broadcast %628 : vector<1x64xf32> to vector<16x64xf32>
    %631 = vector.broadcast %629 : vector<16x1xf32> to vector<16x64xf32>
    %632 = arith.mulf %630, %631 : vector<16x64xf32>
    %633 = vector.extract_strided_slice %574 {offsets = [2, 0], sizes = [1, 64], strides = [1, 1]} : vector<12x64xf32> to vector<1x64xf32>
    %634 = vector.extract_strided_slice %567 {offsets = [0, 2], sizes = [16, 1], strides = [1, 1]} : vector<16x12xf32> to vector<16x1xf32>
    %635 = vector.broadcast %633 : vector<1x64xf32> to vector<16x64xf32>
    %636 = vector.broadcast %634 : vector<16x1xf32> to vector<16x64xf32>
    %637 = arith.mulf %635, %636 : vector<16x64xf32>
    %638 = vector.extract_strided_slice %574 {offsets = [3, 0], sizes = [1, 64], strides = [1, 1]} : vector<12x64xf32> to vector<1x64xf32>
    %639 = vector.extract_strided_slice %567 {offsets = [0, 3], sizes = [16, 1], strides = [1, 1]} : vector<16x12xf32> to vector<16x1xf32>
    %640 = vector.broadcast %638 : vector<1x64xf32> to vector<16x64xf32>
    %641 = vector.broadcast %639 : vector<16x1xf32> to vector<16x64xf32>
    %642 = arith.mulf %640, %641 : vector<16x64xf32>
    %643 = vector.extract_strided_slice %574 {offsets = [4, 0], sizes = [1, 64], strides = [1, 1]} : vector<12x64xf32> to vector<1x64xf32>
    %644 = vector.extract_strided_slice %567 {offsets = [0, 4], sizes = [16, 1], strides = [1, 1]} : vector<16x12xf32> to vector<16x1xf32>
    %645 = vector.broadcast %643 : vector<1x64xf32> to vector<16x64xf32>
    %646 = vector.broadcast %644 : vector<16x1xf32> to vector<16x64xf32>
    %647 = arith.mulf %645, %646 : vector<16x64xf32>
    %648 = vector.extract_strided_slice %574 {offsets = [5, 0], sizes = [1, 64], strides = [1, 1]} : vector<12x64xf32> to vector<1x64xf32>
    %649 = vector.extract_strided_slice %567 {offsets = [0, 5], sizes = [16, 1], strides = [1, 1]} : vector<16x12xf32> to vector<16x1xf32>
    %650 = vector.broadcast %648 : vector<1x64xf32> to vector<16x64xf32>
    %651 = vector.broadcast %649 : vector<16x1xf32> to vector<16x64xf32>
    %652 = arith.mulf %650, %651 : vector<16x64xf32>
    %653 = vector.extract_strided_slice %574 {offsets = [6, 0], sizes = [1, 64], strides = [1, 1]} : vector<12x64xf32> to vector<1x64xf32>
    %654 = vector.extract_strided_slice %567 {offsets = [0, 6], sizes = [16, 1], strides = [1, 1]} : vector<16x12xf32> to vector<16x1xf32>
    %655 = vector.broadcast %653 : vector<1x64xf32> to vector<16x64xf32>
    %656 = vector.broadcast %654 : vector<16x1xf32> to vector<16x64xf32>
    %657 = arith.mulf %655, %656 : vector<16x64xf32>
    %658 = vector.extract_strided_slice %574 {offsets = [7, 0], sizes = [1, 64], strides = [1, 1]} : vector<12x64xf32> to vector<1x64xf32>
    %659 = vector.extract_strided_slice %567 {offsets = [0, 7], sizes = [16, 1], strides = [1, 1]} : vector<16x12xf32> to vector<16x1xf32>
    %660 = vector.broadcast %658 : vector<1x64xf32> to vector<16x64xf32>
    %661 = vector.broadcast %659 : vector<16x1xf32> to vector<16x64xf32>
    %662 = arith.mulf %660, %661 : vector<16x64xf32>
    %663 = vector.extract_strided_slice %574 {offsets = [8, 0], sizes = [1, 64], strides = [1, 1]} : vector<12x64xf32> to vector<1x64xf32>
    %664 = vector.extract_strided_slice %567 {offsets = [0, 8], sizes = [16, 1], strides = [1, 1]} : vector<16x12xf32> to vector<16x1xf32>
    %665 = vector.broadcast %663 : vector<1x64xf32> to vector<16x64xf32>
    %666 = vector.broadcast %664 : vector<16x1xf32> to vector<16x64xf32>
    %667 = arith.mulf %665, %666 : vector<16x64xf32>
    %668 = vector.extract_strided_slice %574 {offsets = [9, 0], sizes = [1, 64], strides = [1, 1]} : vector<12x64xf32> to vector<1x64xf32>
    %669 = vector.extract_strided_slice %567 {offsets = [0, 9], sizes = [16, 1], strides = [1, 1]} : vector<16x12xf32> to vector<16x1xf32>
    %670 = vector.broadcast %668 : vector<1x64xf32> to vector<16x64xf32>
    %671 = vector.broadcast %669 : vector<16x1xf32> to vector<16x64xf32>
    %672 = arith.mulf %670, %671 : vector<16x64xf32>
    %673 = vector.extract_strided_slice %574 {offsets = [10, 0], sizes = [1, 64], strides = [1, 1]} : vector<12x64xf32> to vector<1x64xf32>
    %674 = vector.extract_strided_slice %567 {offsets = [0, 10], sizes = [16, 1], strides = [1, 1]} : vector<16x12xf32> to vector<16x1xf32>
    %675 = vector.broadcast %673 : vector<1x64xf32> to vector<16x64xf32>
    %676 = vector.broadcast %674 : vector<16x1xf32> to vector<16x64xf32>
    %677 = arith.mulf %675, %676 : vector<16x64xf32>
    %678 = vector.extract_strided_slice %574 {offsets = [11, 0], sizes = [1, 64], strides = [1, 1]} : vector<12x64xf32> to vector<1x64xf32>
    %679 = vector.extract_strided_slice %567 {offsets = [0, 11], sizes = [16, 1], strides = [1, 1]} : vector<16x12xf32> to vector<16x1xf32>
    %680 = vector.broadcast %678 : vector<1x64xf32> to vector<16x64xf32>
    %681 = vector.broadcast %679 : vector<16x1xf32> to vector<16x64xf32>
    %682 = arith.mulf %680, %681 : vector<16x64xf32>
    %cst_151 = arith.constant 0.000000e+00 : f32
    %683 = vector.broadcast %cst_151 : f32 to vector<16x64xf32>
    %684 = arith.mulf %683, %578 : vector<16x64xf32>
    %685 = arith.addf %684, %627 : vector<16x64xf32>
    %686 = vector.extract_strided_slice %568 {offsets = [0, 0], sizes = [16, 1], strides = [1, 1]} : vector<16x12xf32> to vector<16x1xf32>
    %687 = vector.broadcast %686 : vector<16x1xf32> to vector<16x64xf32>
    %688 = arith.mulf %685, %687 : vector<16x64xf32>
    %cst_152 = arith.constant dense<0.000000e+00> : vector<64xf32>
    %689 = vector.multi_reduction <add>, %688, %cst_152 [0] : vector<16x64xf32> to vector<64xf32>
    %690 = vector.shape_cast %689 : vector<64xf32> to vector<1x64xf32>
    %691 = arith.mulf %685, %582 : vector<16x64xf32>
    %692 = arith.addf %691, %632 : vector<16x64xf32>
    %693 = vector.extract_strided_slice %568 {offsets = [0, 1], sizes = [16, 1], strides = [1, 1]} : vector<16x12xf32> to vector<16x1xf32>
    %694 = vector.broadcast %693 : vector<16x1xf32> to vector<16x64xf32>
    %695 = arith.mulf %692, %694 : vector<16x64xf32>
    %cst_153 = arith.constant dense<0.000000e+00> : vector<64xf32>
    %696 = vector.multi_reduction <add>, %695, %cst_153 [0] : vector<16x64xf32> to vector<64xf32>
    %697 = vector.shape_cast %696 : vector<64xf32> to vector<1x64xf32>
    %698 = arith.mulf %692, %586 : vector<16x64xf32>
    %699 = arith.addf %698, %637 : vector<16x64xf32>
    %700 = vector.extract_strided_slice %568 {offsets = [0, 2], sizes = [16, 1], strides = [1, 1]} : vector<16x12xf32> to vector<16x1xf32>
    %701 = vector.broadcast %700 : vector<16x1xf32> to vector<16x64xf32>
    %702 = arith.mulf %699, %701 : vector<16x64xf32>
    %cst_154 = arith.constant dense<0.000000e+00> : vector<64xf32>
    %703 = vector.multi_reduction <add>, %702, %cst_154 [0] : vector<16x64xf32> to vector<64xf32>
    %704 = vector.shape_cast %703 : vector<64xf32> to vector<1x64xf32>
    %705 = arith.mulf %699, %590 : vector<16x64xf32>
    %706 = arith.addf %705, %642 : vector<16x64xf32>
    %707 = vector.extract_strided_slice %568 {offsets = [0, 3], sizes = [16, 1], strides = [1, 1]} : vector<16x12xf32> to vector<16x1xf32>
    %708 = vector.broadcast %707 : vector<16x1xf32> to vector<16x64xf32>
    %709 = arith.mulf %706, %708 : vector<16x64xf32>
    %cst_155 = arith.constant dense<0.000000e+00> : vector<64xf32>
    %710 = vector.multi_reduction <add>, %709, %cst_155 [0] : vector<16x64xf32> to vector<64xf32>
    %711 = vector.shape_cast %710 : vector<64xf32> to vector<1x64xf32>
    %712 = arith.mulf %706, %594 : vector<16x64xf32>
    %713 = arith.addf %712, %647 : vector<16x64xf32>
    %714 = vector.extract_strided_slice %568 {offsets = [0, 4], sizes = [16, 1], strides = [1, 1]} : vector<16x12xf32> to vector<16x1xf32>
    %715 = vector.broadcast %714 : vector<16x1xf32> to vector<16x64xf32>
    %716 = arith.mulf %713, %715 : vector<16x64xf32>
    %cst_156 = arith.constant dense<0.000000e+00> : vector<64xf32>
    %717 = vector.multi_reduction <add>, %716, %cst_156 [0] : vector<16x64xf32> to vector<64xf32>
    %718 = vector.shape_cast %717 : vector<64xf32> to vector<1x64xf32>
    %719 = arith.mulf %713, %598 : vector<16x64xf32>
    %720 = arith.addf %719, %652 : vector<16x64xf32>
    %721 = vector.extract_strided_slice %568 {offsets = [0, 5], sizes = [16, 1], strides = [1, 1]} : vector<16x12xf32> to vector<16x1xf32>
    %722 = vector.broadcast %721 : vector<16x1xf32> to vector<16x64xf32>
    %723 = arith.mulf %720, %722 : vector<16x64xf32>
    %cst_157 = arith.constant dense<0.000000e+00> : vector<64xf32>
    %724 = vector.multi_reduction <add>, %723, %cst_157 [0] : vector<16x64xf32> to vector<64xf32>
    %725 = vector.shape_cast %724 : vector<64xf32> to vector<1x64xf32>
    %726 = arith.mulf %720, %602 : vector<16x64xf32>
    %727 = arith.addf %726, %657 : vector<16x64xf32>
    %728 = vector.extract_strided_slice %568 {offsets = [0, 6], sizes = [16, 1], strides = [1, 1]} : vector<16x12xf32> to vector<16x1xf32>
    %729 = vector.broadcast %728 : vector<16x1xf32> to vector<16x64xf32>
    %730 = arith.mulf %727, %729 : vector<16x64xf32>
    %cst_158 = arith.constant dense<0.000000e+00> : vector<64xf32>
    %731 = vector.multi_reduction <add>, %730, %cst_158 [0] : vector<16x64xf32> to vector<64xf32>
    %732 = vector.shape_cast %731 : vector<64xf32> to vector<1x64xf32>
    %733 = arith.mulf %727, %606 : vector<16x64xf32>
    %734 = arith.addf %733, %662 : vector<16x64xf32>
    %735 = vector.extract_strided_slice %568 {offsets = [0, 7], sizes = [16, 1], strides = [1, 1]} : vector<16x12xf32> to vector<16x1xf32>
    %736 = vector.broadcast %735 : vector<16x1xf32> to vector<16x64xf32>
    %737 = arith.mulf %734, %736 : vector<16x64xf32>
    %cst_159 = arith.constant dense<0.000000e+00> : vector<64xf32>
    %738 = vector.multi_reduction <add>, %737, %cst_159 [0] : vector<16x64xf32> to vector<64xf32>
    %739 = vector.shape_cast %738 : vector<64xf32> to vector<1x64xf32>
    %740 = arith.mulf %734, %610 : vector<16x64xf32>
    %741 = arith.addf %740, %667 : vector<16x64xf32>
    %742 = vector.extract_strided_slice %568 {offsets = [0, 8], sizes = [16, 1], strides = [1, 1]} : vector<16x12xf32> to vector<16x1xf32>
    %743 = vector.broadcast %742 : vector<16x1xf32> to vector<16x64xf32>
    %744 = arith.mulf %741, %743 : vector<16x64xf32>
    %cst_160 = arith.constant dense<0.000000e+00> : vector<64xf32>
    %745 = vector.multi_reduction <add>, %744, %cst_160 [0] : vector<16x64xf32> to vector<64xf32>
    %746 = vector.shape_cast %745 : vector<64xf32> to vector<1x64xf32>
    %747 = arith.mulf %741, %614 : vector<16x64xf32>
    %748 = arith.addf %747, %672 : vector<16x64xf32>
    %749 = vector.extract_strided_slice %568 {offsets = [0, 9], sizes = [16, 1], strides = [1, 1]} : vector<16x12xf32> to vector<16x1xf32>
    %750 = vector.broadcast %749 : vector<16x1xf32> to vector<16x64xf32>
    %751 = arith.mulf %748, %750 : vector<16x64xf32>
    %cst_161 = arith.constant dense<0.000000e+00> : vector<64xf32>
    %752 = vector.multi_reduction <add>, %751, %cst_161 [0] : vector<16x64xf32> to vector<64xf32>
    %753 = vector.shape_cast %752 : vector<64xf32> to vector<1x64xf32>
    %754 = arith.mulf %748, %618 : vector<16x64xf32>
    %755 = arith.addf %754, %677 : vector<16x64xf32>
    %756 = vector.extract_strided_slice %568 {offsets = [0, 10], sizes = [16, 1], strides = [1, 1]} : vector<16x12xf32> to vector<16x1xf32>
    %757 = vector.broadcast %756 : vector<16x1xf32> to vector<16x64xf32>
    %758 = arith.mulf %755, %757 : vector<16x64xf32>
    %cst_162 = arith.constant dense<0.000000e+00> : vector<64xf32>
    %759 = vector.multi_reduction <add>, %758, %cst_162 [0] : vector<16x64xf32> to vector<64xf32>
    %760 = vector.shape_cast %759 : vector<64xf32> to vector<1x64xf32>
    %761 = arith.mulf %755, %622 : vector<16x64xf32>
    %762 = arith.addf %761, %682 : vector<16x64xf32>
    %763 = vector.extract_strided_slice %568 {offsets = [0, 11], sizes = [16, 1], strides = [1, 1]} : vector<16x12xf32> to vector<16x1xf32>
    %764 = vector.broadcast %763 : vector<16x1xf32> to vector<16x64xf32>
    %765 = arith.mulf %762, %764 : vector<16x64xf32>
    %cst_163 = arith.constant dense<0.000000e+00> : vector<64xf32>
    %766 = vector.multi_reduction <add>, %765, %cst_163 [0] : vector<16x64xf32> to vector<64xf32>
    %767 = vector.shape_cast %766 : vector<64xf32> to vector<1x64xf32>
    %768 = tpu.concatenate %690, %697, %704, %711, %718, %725, %732, %739, %746, %753, %760, %767 in 0 : vector<1x64xf32>, vector<1x64xf32>, vector<1x64xf32>, vector<1x64xf32>, vector<1x64xf32>, vector<1x64xf32>, vector<1x64xf32>, vector<1x64xf32>, vector<1x64xf32>, vector<1x64xf32>, vector<1x64xf32>, vector<1x64xf32> -> vector<12x64xf32>
    %769 = vector.broadcast %430 : vector<1x64xf32> to vector<12x64xf32>
    %770 = arith.mulf %769, %541 : vector<12x64xf32>
    %771 = arith.addf %768, %770 : vector<12x64xf32>
    %772 = arith.negf %451 : vector<12x64xf32>
    %773 = math.exp %772 : vector<12x64xf32>
    %cst_164 = arith.constant 1.000000e+00 : f32
    %774 = vector.broadcast %cst_164 : f32 to vector<12x64xf32>
    %775 = arith.addf %774, %773 : vector<12x64xf32>
    %776 = arith.divf %774, %775 : vector<12x64xf32>
    %777 = arith.mulf %451, %776 : vector<12x64xf32>
    %778 = arith.mulf %771, %777 : vector<12x64xf32>
    %779 = arith.mulf %507, %507 : vector<12x64xf32>
    %cst_165 = arith.constant dense<0.000000e+00> : vector<12xf32>
    %780 = vector.multi_reduction <add>, %779, %cst_165 [1] : vector<12x64xf32> to vector<12xf32>
    %781 = vector.shape_cast %780 : vector<12xf32> to vector<12x1xf32>
    %cst_166 = arith.constant 6.400000e+01 : f32
    %782 = vector.broadcast %cst_166 : f32 to vector<12x1xf32>
    %783 = arith.divf %781, %782 : vector<12x1xf32>
    %cst_167 = arith.constant 9.99999997E-7 : f32
    %784 = vector.broadcast %cst_167 : f32 to vector<12x1xf32>
    %785 = arith.addf %783, %784 : vector<12x1xf32>
    %786 = math.rsqrt %785 : vector<12x1xf32>
    %787 = vector.broadcast %786 : vector<12x1xf32> to vector<12x64xf32>
    %788 = arith.mulf %507, %787 : vector<12x64xf32>
    %789 = vector.broadcast %431 : vector<1x64xf32> to vector<12x64xf32>
    %790 = arith.mulf %788, %789 : vector<12x64xf32>
    %791 = arith.mulf %778, %778 : vector<12x64xf32>
    %cst_168 = arith.constant dense<0.000000e+00> : vector<12xf32>
    %792 = vector.multi_reduction <add>, %791, %cst_168 [1] : vector<12x64xf32> to vector<12xf32>
    %793 = vector.shape_cast %792 : vector<12xf32> to vector<12x1xf32>
    %cst_169 = arith.constant 6.400000e+01 : f32
    %794 = vector.broadcast %cst_169 : f32 to vector<12x1xf32>
    %795 = arith.divf %793, %794 : vector<12x1xf32>
    %cst_170 = arith.constant 9.99999997E-7 : f32
    %796 = vector.broadcast %cst_170 : f32 to vector<12x1xf32>
    %797 = arith.addf %795, %796 : vector<12x1xf32>
    %798 = math.rsqrt %797 : vector<12x1xf32>
    %799 = vector.broadcast %798 : vector<12x1xf32> to vector<12x64xf32>
    %800 = arith.mulf %778, %799 : vector<12x64xf32>
    %801 = vector.broadcast %432 : vector<1x64xf32> to vector<12x64xf32>
    %802 = arith.mulf %800, %801 : vector<12x64xf32>
    %803 = arith.addf %790, %802 : vector<12x64xf32>
    %cst_171 = arith.constant 5.000000e-01 : f32
    %804 = vector.broadcast %cst_171 : f32 to vector<12x64xf32>
    %805 = arith.mulf %804, %803 : vector<12x64xf32>
    %c1_172 = arith.constant 1 : index
    %c0_173 = arith.constant 0 : index
    %c0_174 = arith.constant 0 : index
    %806 = vector.load %arg16[%c1_172, %c0_173, %c0_174] : memref<2x64x32xf32, #tpu.memory_space<vmem>>, vector<1x64x32xf32>
    %807 = vector.shape_cast %806 : vector<1x64x32xf32> to vector<64x32xf32>
    %cst_175 = arith.constant dense<0.000000e+00> : vector<12x32xf32>
    %808 = tpu.matmul %805, %807, %cst_175 {dimension_numbers = #tpu.dot_dimension_numbers<[1], [0], [0], [1], [0, 0, 1, 1], [], []>} : vector<12x64xf32>, vector<64x32xf32>, vector<12x32xf32> -> vector<12x32xf32>
    %809 = arith.addf %423, %808 : vector<12x32xf32>
    %810 = arith.mulf %809, %809 : vector<12x32xf32>
    %cst_176 = arith.constant dense<0.000000e+00> : vector<12xf32>
    %811 = vector.multi_reduction <add>, %810, %cst_176 [1] : vector<12x32xf32> to vector<12xf32>
    %812 = vector.shape_cast %811 : vector<12xf32> to vector<12x1xf32>
    %cst_177 = arith.constant 3.200000e+01 : f32
    %813 = vector.broadcast %cst_177 : f32 to vector<12x1xf32>
    %814 = arith.divf %812, %813 : vector<12x1xf32>
    %cst_178 = arith.constant 9.99999997E-7 : f32
    %815 = vector.broadcast %cst_178 : f32 to vector<12x1xf32>
    %816 = arith.addf %814, %815 : vector<12x1xf32>
    %817 = math.rsqrt %816 : vector<12x1xf32>
    %818 = vector.broadcast %817 : vector<12x1xf32> to vector<12x32xf32>
    %819 = arith.mulf %809, %818 : vector<12x32xf32>
    %820 = vector.broadcast %427 : vector<1x32xf32> to vector<12x32xf32>
    %821 = arith.mulf %819, %820 : vector<12x32xf32>
    %c1_179 = arith.constant 1 : index
    %c0_180 = arith.constant 0 : index
    %c0_181 = arith.constant 0 : index
    %822 = vector.load %arg17[%c1_179, %c0_180, %c0_181] : memref<2x32x128xf32, #tpu.memory_space<vmem>>, vector<1x32x128xf32>
    %823 = vector.shape_cast %822 : vector<1x32x128xf32> to vector<32x128xf32>
    %cst_182 = arith.constant dense<0.000000e+00> : vector<12x128xf32>
    %824 = tpu.matmul %821, %823, %cst_182 {dimension_numbers = #tpu.dot_dimension_numbers<[1], [0], [0], [1], [0, 0, 1, 1], [], []>} : vector<12x32xf32>, vector<32x128xf32>, vector<12x128xf32> -> vector<12x128xf32>
    %825 = vector.extract_strided_slice %824 {offsets = [0, 0], sizes = [12, 64], strides = [1, 1]} : vector<12x128xf32> to vector<12x64xf32>
    %826 = arith.negf %825 : vector<12x64xf32>
    %827 = math.exp %826 : vector<12x64xf32>
    %cst_183 = arith.constant 1.000000e+00 : f32
    %828 = vector.broadcast %cst_183 : f32 to vector<12x64xf32>
    %829 = arith.addf %828, %827 : vector<12x64xf32>
    %830 = arith.divf %828, %829 : vector<12x64xf32>
    %831 = arith.mulf %825, %830 : vector<12x64xf32>
    %832 = vector.extract_strided_slice %824 {offsets = [0, 64], sizes = [12, 64], strides = [1, 1]} : vector<12x128xf32> to vector<12x64xf32>
    %833 = arith.mulf %831, %832 : vector<12x64xf32>
    %c1_184 = arith.constant 1 : index
    %c0_185 = arith.constant 0 : index
    %c0_186 = arith.constant 0 : index
    %834 = vector.load %arg18[%c1_184, %c0_185, %c0_186] : memref<2x64x32xf32, #tpu.memory_space<vmem>>, vector<1x64x32xf32>
    %835 = vector.shape_cast %834 : vector<1x64x32xf32> to vector<64x32xf32>
    %cst_187 = arith.constant dense<0.000000e+00> : vector<12x32xf32>
    %836 = tpu.matmul %833, %835, %cst_187 {dimension_numbers = #tpu.dot_dimension_numbers<[1], [0], [0], [1], [0, 0, 1, 1], [], []>} : vector<12x64xf32>, vector<64x32xf32>, vector<12x32xf32> -> vector<12x32xf32>
    %837 = arith.addf %809, %836 : vector<12x32xf32>
    %838 = vector.extract_strided_slice %837 {offsets = [4, 0], sizes = [8, 32], strides = [1, 1]} : vector<12x32xf32> to vector<8x32xf32>
    %c0_188 = arith.constant 0 : index
    %c0_189 = arith.constant 0 : index
    %c0_190 = arith.constant 0 : index
    %839 = vector.load %arg20[%c0_188, %c0_189, %c0_190] : memref<1x8x32xf32, #tpu.memory_space<vmem>>, vector<1x8x32xf32>
    %840 = vector.shape_cast %839 : vector<1x8x32xf32> to vector<8x32xf32>
    %841 = vector.shape_cast %838 : vector<8x32xf32> to vector<1x8x32xf32>
    tpu.vector_store %arg20[%c0_188, %c0_189, %c0_190], %841 {strides = array<i32>} : memref<1x8x32xf32, #tpu.memory_space<vmem>>, vector<1x8x32xf32>,
    return
  }
  func.func @transform_0(%arg0: i32) -> (i32, i32) {
    %c0_i32 = arith.constant 0 : i32
    %c0_i32_0 = arith.constant 0 : i32
    %c0_i32_1 = arith.constant 0 : i32
    return %c0_i32, %c0_i32_0 : i32, i32
  }
  func.func @transform_1(%arg0: i32) -> (i32, i32, i32) {
    %c0_i32 = arith.constant 0 : i32
    %c0_i32_0 = arith.constant 0 : i32
    %c0_i32_1 = arith.constant 0 : i32
    return %arg0, %c0_i32, %c0_i32_0 : i32, i32, i32
  }
  func.func @transform_2(%arg0: i32) -> (i32, i32, i32) {
    %c0_i32 = arith.constant 0 : i32
    %c0_i32_0 = arith.constant 0 : i32
    %c0_i32_1 = arith.constant 0 : i32
    %c0_i32_2 = arith.constant 0 : i32
    return %c0_i32, %c0_i32_0, %c0_i32_1 : i32, i32, i32
  }
  func.func @transform_3(%arg0: i32) -> (i32, i32) {
    %c0_i32 = arith.constant 0 : i32
    %c0_i32_0 = arith.constant 0 : i32
    %c0_i32_1 = arith.constant 0 : i32
    return %c0_i32, %c0_i32_0 : i32, i32
  }
  func.func @transform_4(%arg0: i32) -> (i32, i32) {
    %c0_i32 = arith.constant 0 : i32
    %c0_i32_0 = arith.constant 0 : i32
    %c0_i32_1 = arith.constant 0 : i32
    return %c0_i32, %c0_i32_0 : i32, i32
  }
  func.func @transform_5(%arg0: i32) -> (i32, i32) {
    %c0_i32 = arith.constant 0 : i32
    %c0_i32_0 = arith.constant 0 : i32
    %c0_i32_1 = arith.constant 0 : i32
    return %c0_i32, %c0_i32_0 : i32, i32
  }
  func.func @transform_6(%arg0: i32) -> (i32, i32) {
    %c0_i32 = arith.constant 0 : i32
    %c0_i32_0 = arith.constant 0 : i32
    %c0_i32_1 = arith.constant 0 : i32
    return %c0_i32, %c0_i32_0 : i32, i32
  }
  func.func @transform_7(%arg0: i32) -> (i32, i32) {
    %c0_i32 = arith.constant 0 : i32
    %c0_i32_0 = arith.constant 0 : i32
    %c0_i32_1 = arith.constant 0 : i32
    return %c0_i32, %c0_i32_0 : i32, i32
  }
  func.func @transform_8(%arg0: i32) -> (i32, i32) {
    %c0_i32 = arith.constant 0 : i32
    %c0_i32_0 = arith.constant 0 : i32
    %c0_i32_1 = arith.constant 0 : i32
    return %c0_i32, %c0_i32_0 : i32, i32
  }
  func.func @transform_9(%arg0: i32) -> (i32, i32, i32) {
    %c0_i32 = arith.constant 0 : i32
    %c0_i32_0 = arith.constant 0 : i32
    %c0_i32_1 = arith.constant 0 : i32
    %c0_i32_2 = arith.constant 0 : i32
    return %c0_i32, %c0_i32_0, %c0_i32_1 : i32, i32, i32
  }
  func.func @transform_10(%arg0: i32) -> (i32, i32, i32) {
    %c0_i32 = arith.constant 0 : i32
    %c0_i32_0 = arith.constant 0 : i32
    %c0_i32_1 = arith.constant 0 : i32
    %c0_i32_2 = arith.constant 0 : i32
    return %c0_i32, %c0_i32_0, %c0_i32_1 : i32, i32, i32
  }
  func.func @transform_11(%arg0: i32) -> (i32, i32, i32) {
    %c0_i32 = arith.constant 0 : i32
    %c0_i32_0 = arith.constant 0 : i32
    %c0_i32_1 = arith.constant 0 : i32
    %c0_i32_2 = arith.constant 0 : i32
    return %c0_i32, %c0_i32_0, %c0_i32_1 : i32, i32, i32
  }
  func.func @transform_12(%arg0: i32) -> (i32, i32, i32) {
    %c0_i32 = arith.constant 0 : i32
    %c0_i32_0 = arith.constant 0 : i32
    %c0_i32_1 = arith.constant 0 : i32
    %c0_i32_2 = arith.constant 0 : i32
    return %c0_i32, %c0_i32_0, %c0_i32_1 : i32, i32, i32
  }
  func.func @transform_13(%arg0: i32) -> (i32, i32, i32) {
    %c0_i32 = arith.constant 0 : i32
    %c0_i32_0 = arith.constant 0 : i32
    %c0_i32_1 = arith.constant 0 : i32
    %c0_i32_2 = arith.constant 0 : i32
    return %c0_i32, %c0_i32_0, %c0_i32_1 : i32, i32, i32
  }
  func.func @transform_14(%arg0: i32) -> (i32, i32, i32) {
    %c0_i32 = arith.constant 0 : i32
    %c0_i32_0 = arith.constant 0 : i32
    %c0_i32_1 = arith.constant 0 : i32
    %c0_i32_2 = arith.constant 0 : i32
    return %c0_i32, %c0_i32_0, %c0_i32_1 : i32, i32, i32
  }
  func.func @transform_15(%arg0: i32) -> (i32, i32, i32) {
    %c0_i32 = arith.constant 0 : i32
    %c0_i32_0 = arith.constant 0 : i32
    %c0_i32_1 = arith.constant 0 : i32
    %c0_i32_2 = arith.constant 0 : i32
    return %c0_i32, %c0_i32_0, %c0_i32_1 : i32, i32, i32
  }
  func.func @transform_16(%arg0: i32) -> (i32, i32, i32) {
    %c0_i32 = arith.constant 0 : i32
    %c0_i32_0 = arith.constant 0 : i32
    %c0_i32_1 = arith.constant 0 : i32
    %c0_i32_2 = arith.constant 0 : i32
    return %c0_i32, %c0_i32_0, %c0_i32_1 : i32, i32, i32
  }
  func.func @transform_17(%arg0: i32) -> (i32, i32, i32) {
    %c0_i32 = arith.constant 0 : i32
    %c0_i32_0 = arith.constant 0 : i32
    %c0_i32_1 = arith.constant 0 : i32
    %c0_i32_2 = arith.constant 0 : i32
    return %c0_i32, %c0_i32_0, %c0_i32_1 : i32, i32, i32
  }
  func.func @transform_18(%arg0: i32) -> (i32, i32, i32) {
    %c0_i32 = arith.constant 0 : i32
    %c0_i32_0 = arith.constant 0 : i32
    %c0_i32_1 = arith.constant 0 : i32
    %c0_i32_2 = arith.constant 0 : i32
    return %c0_i32, %c0_i32_0, %c0_i32_1 : i32, i32, i32
  }
  func.func @transform_19(%arg0: i32) -> (i32, i32, i32) {
    %c0_i32 = arith.constant 0 : i32
    %c0_i32_0 = arith.constant 0 : i32
    %c0_i32_1 = arith.constant 0 : i32
    return %arg0, %c0_i32, %c0_i32_0 : i32, i32, i32
  }
}

</mosaic_0001>

<llo_original>
// kernel: tile.24
$region0: #{tile.24}
  %s0 = inlined_call_operand.vmem [shape: f32[12,4,16], index: 0, kind: input, shape index: {}]
  %s1 = inlined_call_operand.vmem [shape: f32[12,64], index: 1, kind: output, shape index: {}]
  $region1: #{tile.24} parent=0
    #allocation0 [shape = 'u8[49152]{0}', space=vmem, size = 0xc000, scoped, tag = 'scoped mem for input reshape']
    %s3 = ssub.s32 16, 1
    %s4 = scalar_lea.vmem %s0, 44
    %v5 = vld [vmem:[%s4] sm:%s3]
    %s6 = scalar_lea.vmem [#allocation0], 88
    %7 = vst [vmem:[%s6] sm:%s3] %v5
    %s8 = scalar_lea.vmem %s0, 40
    %v9 = vld [vmem:[%s8] sm:%s3]
    %s10 = scalar_lea.vmem [#allocation0], 80
    %11 = vst [vmem:[%s10] sm:%s3] %v9
    %s12 = scalar_lea.vmem %s0, 36
    %v13 = vld [vmem:[%s12] sm:%s3]
    %s14 = scalar_lea.vmem [#allocation0], 72
    %15 = vst [vmem:[%s14] sm:%s3] %v13
    %s16 = scalar_lea.vmem %s0, 32
    %v17 = vld [vmem:[%s16] sm:%s3]
    %s18 = scalar_lea.vmem [#allocation0], 64
    %19 = vst [vmem:[%s18] sm:%s3] %v17
    %s20 = scalar_lea.vmem %s0, 28
    %v21 = vld [vmem:[%s20] sm:%s3]
    %s22 = scalar_lea.vmem [#allocation0], 56
    %23 = vst [vmem:[%s22] sm:%s3] %v21
    %s24 = scalar_lea.vmem %s0, 24
    %v25 = vld [vmem:[%s24] sm:%s3]
    %s26 = scalar_lea.vmem [#allocation0], 48
    %27 = vst [vmem:[%s26] sm:%s3] %v25
    %s28 = scalar_lea.vmem %s0, 20
    %v29 = vld [vmem:[%s28] sm:%s3]
    %s30 = scalar_lea.vmem [#allocation0], 40
    %31 = vst [vmem:[%s30] sm:%s3] %v29
    %s32 = scalar_lea.vmem %s0, 16
    %v33 = vld [vmem:[%s32] sm:%s3]
    %s34 = scalar_lea.vmem [#allocation0], 32
    %35 = vst [vmem:[%s34] sm:%s3] %v33
    %s36 = scalar_lea.vmem %s0, 12
    %v37 = vld [vmem:[%s36] sm:%s3]
    %s38 = scalar_lea.vmem [#allocation0], 24
    %39 = vst [vmem:[%s38] sm:%s3] %v37
    %s40 = scalar_lea.vmem %s0, 8
    %v41 = vld [vmem:[%s40] sm:%s3]
    %s42 = scalar_lea.vmem [#allocation0], 16
    %43 = vst [vmem:[%s42] sm:%s3] %v41
    %s44 = scalar_lea.vmem %s0, 4
    %v45 = vld [vmem:[%s44] sm:%s3]
    %s46 = scalar_lea.vmem [#allocation0], 8
    %47 = vst [vmem:[%s46] sm:%s3] %v45
    %v48 = vld [vmem:[%s0] sm:%s3]
    %49 = vst [vmem:[#allocation0] sm:%s3] %v48
    %v50 = vld [vmem:[#allocation0] ss:$8 sm:$0xf]
    %v51 = vld [vmem:[#allocation0] ss:$8 sm:$0xf0]
    %vm52 = vcmask 1047556
    %v53 = vsel %vm52, %v51, %v50
    %vm54 = vcmask 130048
    %55 = vst.msk [vmem:[%s1] sm:$0xff] %vm54, %v53
    %s56 = scalar_lea.vmem [#allocation0], 64
    %v57 = vld [vmem:[%s56] ss:$8 sm:$0xf]
    %vm58 = vcmask 130048
    %s59 = scalar_lea.vmem %s1, 8
    %60 = vst.msk [vmem:[%s59] sm:$0xf] %vm58, %v57
    %s61 = scalar_lea.vmem [#allocation0], 3
    %v62 = vld [vmem:[%s61] ss:$8 sm:$0xf]
    %s63 = scalar_lea.vmem [#allocation0], 3
    %v64 = vld [vmem:[%s63] ss:$8 sm:$0xf0]
    %vm65 = vcmask 1047556
    %v66 = vsel %vm65, %v64, %v62
    %67 = vrot.lane.b32.xlu0 %v66, 48
    %v68 = vpop.permute.xlu0 %67
    %vm69 = vcmask 523648
    %70 = vst.msk [vmem:[%s1] sm:$0xff] %vm69, %v68
    %s71 = scalar_lea.vmem [#allocation0], 67
    %v72 = vld [vmem:[%s71] ss:$8 sm:$0xf]
    %73 = vrot.lane.b32.xlu0 %v72, 48
    %v74 = vpop.permute.xlu0 %73
    %vm75 = vcmask 523648
    %s76 = scalar_lea.vmem %s1, 8
    %77 = vst.msk [vmem:[%s76] sm:$0xf] %vm75, %v74
    %s78 = scalar_lea.vmem [#allocation0], 2
    %v79 = vld [vmem:[%s78] ss:$8 sm:$0xf]
    %s80 = scalar_lea.vmem [#allocation0], 2
    %v81 = vld [vmem:[%s80] ss:$8 sm:$0xf0]
    %vm82 = vcmask 1047556
    %v83 = vsel %vm82, %v81, %v79
    %84 = vrot.lane.b32.xlu0 %v83, 32
    %v85 = vpop.permute.xlu0 %84
    %vm86 = vcmask 392448
    %87 = vst.msk [vmem:[%s1] sm:$0xff] %vm86, %v85
    %s88 = scalar_lea.vmem [#allocation0], 66
    %v89 = vld [vmem:[%s88] ss:$8 sm:$0xf]
    %90 = vrot.lane.b32.xlu0 %v89, 32
    %v91 = vpop.permute.xlu0 %90
    %vm92 = vcmask 392448
    %s93 = scalar_lea.vmem %s1, 8
    %94 = vst.msk [vmem:[%s93] sm:$0xf] %vm92, %v91
    %s95 = scalar_lea.vmem [#allocation0], 1
    %v96 = vld [vmem:[%s95] ss:$8 sm:$0xf]
    %s97 = scalar_lea.vmem [#allocation0], 1
    %v98 = vld [vmem:[%s97] ss:$8 sm:$0xf0]
    %vm99 = vcmask 1047556
    %v100 = vsel %vm99, %v98, %v96
    %101 = vrot.lane.b32.xlu0 %v100, 16
    %v102 = vpop.permute.xlu0 %101
    %vm103 = vcmask 261248
    %104 = vst.msk [vmem:[%s1] sm:$0xff] %vm103, %v102
    %s105 = scalar_lea.vmem [#allocation0], 65
    %v106 = vld [vmem:[%s105] ss:$8 sm:$0xf]
    %107 = vrot.lane.b32.xlu0 %v106, 16
    %v108 = vpop.permute.xlu0 %107
    %vm109 = vcmask 261248
    %s110 = scalar_lea.vmem %s1, 8
    %111 = vst.msk [vmem:[%s110] sm:$0xf] %vm109, %v108

// kernel: tile.34
$region0: #{tile.34}
  %s0 = inlined_call_operand.vmem [shape: f32[12,2,16], index: 0, kind: input, shape index: {}]
  %s1 = inlined_call_operand.vmem [shape: f32[12,32], index: 1, kind: output, shape index: {}]
  $region1: #{tile.34} parent=0
    #allocation0 [shape = 'u8[49152]{0}', space=vmem, size = 0xc000, scoped, tag = 'scoped mem for input reshape']
    %s3 = ssub.s32 4, 1
    %s4 = scalar_lea.vmem %s0, 22
    %v5 = vld [vmem:[%s4] sm:%s3]
    %s6 = scalar_lea.vmem [#allocation0], 88
    %7 = vst [vmem:[%s6] sm:%s3] %v5
    %s8 = scalar_lea.vmem %s0, 20
    %v9 = vld [vmem:[%s8] sm:%s3]
    %s10 = scalar_lea.vmem [#allocation0], 80
    %11 = vst [vmem:[%s10] sm:%s3] %v9
    %s12 = scalar_lea.vmem %s0, 18
    %v13 = vld [vmem:[%s12] sm:%s3]
    %s14 = scalar_lea.vmem [#allocation0], 72
    %15 = vst [vmem:[%s14] sm:%s3] %v13
    %s16 = scalar_lea.vmem %s0, 16
    %v17 = vld [vmem:[%s16] sm:%s3]
    %s18 = scalar_lea.vmem [#allocation0], 64
    %19 = vst [vmem:[%s18] sm:%s3] %v17
    %s20 = scalar_lea.vmem %s0, 14
    %v21 = vld [vmem:[%s20] sm:%s3]
    %s22 = scalar_lea.vmem [#allocation0], 56
    %23 = vst [vmem:[%s22] sm:%s3] %v21
    %s24 = scalar_lea.vmem %s0, 12
    %v25 = vld [vmem:[%s24] sm:%s3]
    %s26 = scalar_lea.vmem [#allocation0], 48
    %27 = vst [vmem:[%s26] sm:%s3] %v25
    %s28 = scalar_lea.vmem %s0, 10
    %v29 = vld [vmem:[%s28] sm:%s3]
    %s30 = scalar_lea.vmem [#allocation0], 40
    %31 = vst [vmem:[%s30] sm:%s3] %v29
    %s32 = scalar_lea.vmem %s0, 8
    %v33 = vld [vmem:[%s32] sm:%s3]
    %s34 = scalar_lea.vmem [#allocation0], 32
    %35 = vst [vmem:[%s34] sm:%s3] %v33
    %s36 = scalar_lea.vmem %s0, 6
    %v37 = vld [vmem:[%s36] sm:%s3]
    %s38 = scalar_lea.vmem [#allocation0], 24
    %39 = vst [vmem:[%s38] sm:%s3] %v37
    %s40 = scalar_lea.vmem %s0, 4
    %v41 = vld [vmem:[%s40] sm:%s3]
    %s42 = scalar_lea.vmem [#allocation0], 16
    %43 = vst [vmem:[%s42] sm:%s3] %v41
    %s44 = scalar_lea.vmem %s0, 2
    %v45 = vld [vmem:[%s44] sm:%s3]
    %s46 = scalar_lea.vmem [#allocation0], 8
    %47 = vst [vmem:[%s46] sm:%s3] %v45
    %v48 = vld [vmem:[%s0] sm:%s3]
    %49 = vst [vmem:[#allocation0] sm:%s3] %v48
    %v50 = vld [vmem:[#allocation0] ss:$8 sm:$0xf]
    %v51 = vld [vmem:[#allocation0] ss:$8 sm:$0xf0]
    %vm52 = vcmask 1047556
    %v53 = vsel %vm52, %v51, %v50
    %vm54 = vcmask 130048
    %55 = vst.msk [vmem:[%s1] sm:$0xff] %vm54, %v53
    %s56 = scalar_lea.vmem [#allocation0], 64
    %v57 = vld [vmem:[%s56] ss:$8 sm:$0xf]
    %vm58 = vcmask 130048
    %s59 = scalar_lea.vmem %s1, 8
    %60 = vst.msk [vmem:[%s59] sm:$0xf] %vm58, %v57
    %s61 = scalar_lea.vmem [#allocation0], 1
    %v62 = vld [vmem:[%s61] ss:$8 sm:$0xf]
    %s63 = scalar_lea.vmem [#allocation0], 1
    %v64 = vld [vmem:[%s63] ss:$8 sm:$0xf0]
    %vm65 = vcmask 1047556
    %v66 = vsel %vm65, %v64, %v62
    %67 = vrot.lane.b32.xlu0 %v66, 16
    %v68 = vpop.permute.xlu0 %67
    %vm69 = vcmask 261248
    %70 = vst.msk [vmem:[%s1] sm:$0xff] %vm69, %v68
    %s71 = scalar_lea.vmem [#allocation0], 65
    %v72 = vld [vmem:[%s71] ss:$8 sm:$0xf]
    %73 = vrot.lane.b32.xlu0 %v72, 16
    %v74 = vpop.permute.xlu0 %73
    %vm75 = vcmask 261248
    %s76 = scalar_lea.vmem %s1, 8
    %77 = vst.msk [vmem:[%s76] sm:$0xf] %vm75, %v74

// kernel: simplified_hymba.1
$region0: #{simplified_hymba.1}
  #allocation0 [shape = 'u32[]', space=smem, size = 0x4, offset = 0x4, fixed_abs, tag = 'smem constant byte address 0x4 - core index']
  #allocation1 [shape = 'u32[72,128]{1,0:T(1,128)}', space=vmem, size = 0x9000, scoped, tag = 'internal scratch']
  %s0 = inlined_call_operand.vmem [shape: f32[4,32], index: 0, kind: input, shape index: {}]
  %s1 = inlined_call_operand.vmem [shape: f32[2,8,32], index: 1, kind: input, shape index: {}]
  %s2 = inlined_call_operand.vmem [shape: f32[2,12,12], index: 2, kind: input, shape index: {}]
  %s3 = inlined_call_operand.vmem [shape: f32[12,64], index: 3, kind: input, shape index: {}]
  %s4 = inlined_call_operand.vmem [shape: f32[12,64], index: 4, kind: input, shape index: {}]
  %s5 = inlined_call_operand.vmem [shape: f32[12,32], index: 5, kind: input, shape index: {}]
  %s6 = inlined_call_operand.vmem [shape: f32[12,32], index: 6, kind: input, shape index: {}]
  %s7 = inlined_call_operand.vmem [shape: f32[64,64], index: 7, kind: input, shape index: {}]
  %s8 = inlined_call_operand.vmem [shape: f32[32,32], index: 8, kind: input, shape index: {}]
  %s9 = inlined_call_operand.vmem [shape: f32[2,32,192], index: 9, kind: input, shape index: {}]
  %s10 = inlined_call_operand.vmem [shape: f32[2,4,64], index: 10, kind: input, shape index: {}]
  %s11 = inlined_call_operand.vmem [shape: f32[2,64,8], index: 11, kind: input, shape index: {}]
  %s12 = inlined_call_operand.vmem [shape: f32[2,32,64], index: 12, kind: input, shape index: {}]
  %s13 = inlined_call_operand.vmem [shape: f32[2,8,64], index: 13, kind: input, shape index: {}]
  %s14 = inlined_call_operand.vmem [shape: f32[2,16,64], index: 14, kind: input, shape index: {}]
  %s15 = inlined_call_operand.vmem [shape: f32[2,64,32], index: 15, kind: input, shape index: {}]
  %s16 = inlined_call_operand.vmem [shape: f32[2,32,128], index: 16, kind: input, shape index: {}]
  %s17 = inlined_call_operand.vmem [shape: f32[2,64,32], index: 17, kind: input, shape index: {}]
  %s18 = inlined_call_operand.vmem [shape: f32[2,8,64], index: 18, kind: input, shape index: {}]
  %s19 = inlined_call_operand.hbm [shape: f32[2,8,32], index: 19, kind: output, shape index: {}]
  %s20 = sld [smem:[#allocation0]]
  $region109: #{simplified_hymba.1} parent=0
    _
  %s22 = ssub.s32 1, %s20
  %s23 = scalar_select 0, %s22, %s20
  $region1: #{simplified_hymba.1} parent=0
    #allocation2 [shape = 'u8[8192]{0}', space=vmem, size = 0x2000, scoped, tag = 'output window, operand 0']
    #allocation3 [shape = 's32[2]{0}', space=sflag, size = 0x8, scoped, tag = 'scoped memory for simplified_hymba.1']
    %24 = vsyncpa [#allocation3], 0
    %s25 = scalar_lea.sflag [#allocation3], 1
    %26 = vsyncpa %s25, 0
    loop: start=0, step=1, limit=4
    $region2: #{simplified_hymba.1} parent=1 // loop_pre_header
      _
    $region3: #{simplified_hymba.1} parent=1 // loop_header
      %s28 = sphi 0, %s32
      %p29 = scmp.ge.s32.totalorder %s28, 4
      %s36 = sphi 0, %s36
      %s38 = sphi 0, %s36
      %s39 = sphi 0, %s38
      %s53 = sphi 0, %s39
      %s59 = sphi 0, %s61
      %s62 = sphi 0, %s59
      %s63 = sphi 0, %s62
      %s79 = sphi 0, %s63
      %s83 = sphi 0, %s83
      %s85 = sphi 0, %s83
      %s86 = sphi 0, %s85
      %s100 = sphi 0, %s86
      %s104 = sphi 0, %s104
      %s106 = sphi 0, %s104
      %s107 = sphi 0, %s106
      %s121 = sphi 0, %s107
      %s125 = sphi 0, %s125
      %s127 = sphi 0, %s125
      %s128 = sphi 0, %s127
      %s142 = sphi 0, %s128
      %s146 = sphi 0, %s146
      %s148 = sphi 0, %s146
      %s149 = sphi 0, %s148
      %s163 = sphi 0, %s149
      %s167 = sphi 0, %s167
      %s169 = sphi 0, %s167
      %s170 = sphi 0, %s169
      %s184 = sphi 0, %s170
      %s188 = sphi 0, %s188
      %s190 = sphi 0, %s188
      %s191 = sphi 0, %s190
      %s205 = sphi 0, %s191
      %s209 = sphi 0, %s209
      %s211 = sphi 0, %s209
      %s212 = sphi 0, %s211
      %s226 = sphi 0, %s212
      %s230 = sphi 0, %s230
      %s232 = sphi 0, %s230
      %s233 = sphi 0, %s232
      %s247 = sphi 0, %s233
      %s251 = sphi 0, %s251
      %s253 = sphi 0, %s251
      %s254 = sphi 0, %s253
      %s268 = sphi 0, %s254
      %s272 = sphi 0, %s272
      %s274 = sphi 0, %s272
      %s275 = sphi 0, %s274
      %s289 = sphi 0, %s275
      %s293 = sphi 0, %s293
      %s295 = sphi 0, %s293
      %s296 = sphi 0, %s295
      %s310 = sphi 0, %s296
      %s314 = sphi 0, %s314
      %s316 = sphi 0, %s314
      %s317 = sphi 0, %s316
      %s331 = sphi 0, %s317
      %s335 = sphi 0, %s335
      %s337 = sphi 0, %s335
      %s338 = sphi 0, %s337
      %s352 = sphi 0, %s338
      %s356 = sphi 0, %s356
      %s358 = sphi 0, %s356
      %s359 = sphi 0, %s358
      %s373 = sphi 0, %s359
      %s377 = sphi 0, %s377
      %s379 = sphi 0, %s377
      %s380 = sphi 0, %s379
      %s394 = sphi 0, %s380
      %s398 = sphi 0, %s398
      %s400 = sphi 0, %s398
      %s401 = sphi 0, %s400
      %s415 = sphi 0, %s401
      %s419 = sphi 0, %s419
      %s421 = sphi 0, %s419
      %s422 = sphi 0, %s421
      %s436 = sphi 0, %s422
      %s442 = sphi 0, %s444
      %s445 = sphi 0, %s442
      %s446 = sphi 0, %s445
      %s462 = sphi 0, %s446
    $region4: #{simplified_hymba.1} parent=1 // loop_header_branch
      %31 = sbr.rel (%p29) target = $region8
    $region5: #{simplified_hymba.1} parent=1 // loop_body
      %s33 = ssub.s32 %s28, 1
      %s34 = ssub.s32 %s28, 2
      %s35 = sadd.s32 %s28, 1
      %s37 = sadd.s32 %s36, 1
      %p40 = scmp.eq.s32.totalorder %s28, 1
      %p41 = scmp.ne.s32.totalorder %s36, %s38
      %p42 = scmp.eq.s32.totalorder %s28, 0
      %p43 = por %p41, %p42
      %p44 = scmp.ne.s32.totalorder %s36, %s38
      %p45 = scmp.eq.s32.totalorder %s33, 1
      %p46 = por %p44, %p45
      %p47 = scmp.ne.s32.totalorder %s38, %s39
      %p48 = scmp.eq.s32.totalorder %s33, 0
      %p49 = por %p47, %p48
      %p50 = scmp.ne.s32.totalorder %s38, %s39
      %p51 = scmp.eq.s32.totalorder %s34, 1
      %p52 = por %p50, %p51
      %p54 = scmp.ne.s32.totalorder %s39, %s53
      %p55 = scmp.eq.s32.totalorder %s34, 0
      %p56 = por %p54, %p55
      %s57 = ssub.s32 %s28, %s35
      %p58 = scmp.eq.s32.totalorder %s57, 0
      %s60 = sadd.s32 %s59, 1
      %s61 = scalar_select %p58, %s59, %s60
      %p64 = pneg %p58
      %p65 = scmp.eq.s32.totalorder %s28, 1
      %p66 = por %p64, %p65
      %p67 = scmp.ne.s32.totalorder %s59, %s62
      %p68 = scmp.eq.s32.totalorder %s28, 0
      %p69 = por %p67, %p68
      %p70 = scmp.ne.s32.totalorder %s59, %s62
      %p71 = scmp.eq.s32.totalorder %s33, 1
      %p72 = por %p70, %p71
      %p73 = scmp.ne.s32.totalorder %s62, %s63
      %p74 = scmp.eq.s32.totalorder %s33, 0
      %p75 = por %p73, %p74
      %p76 = scmp.ne.s32.totalorder %s62, %s63
      %p77 = scmp.eq.s32.totalorder %s34, 1
      %p78 = por %p76, %p77
      %p80 = scmp.ne.s32.totalorder %s63, %s79
      %p81 = scmp.eq.s32.totalorder %s34, 0
      %p82 = por %p80, %p81
      %s84 = sadd.s32 %s83, 1
      %p87 = scmp.eq.s32.totalorder %s28, 1
      %p88 = scmp.ne.s32.totalorder %s83, %s85
      %p89 = scmp.eq.s32.totalorder %s28, 0
      %p90 = por %p88, %p89
      %p91 = scmp.ne.s32.totalorder %s83, %s85
      %p92 = scmp.eq.s32.totalorder %s33, 1
      %p93 = por %p91, %p92
      %p94 = scmp.ne.s32.totalorder %s85, %s86
      %p95 = scmp.eq.s32.totalorder %s33, 0
      %p96 = por %p94, %p95
      %p97 = scmp.ne.s32.totalorder %s85, %s86
      %p98 = scmp.eq.s32.totalorder %s34, 1
      %p99 = por %p97, %p98
      %p101 = scmp.ne.s32.totalorder %s86, %s100
      %p102 = scmp.eq.s32.totalorder %s34, 0
      %p103 = por %p101, %p102
      %s105 = sadd.s32 %s104, 1
      %p108 = scmp.eq.s32.totalorder %s28, 1
      %p109 = scmp.ne.s32.totalorder %s104, %s106
      %p110 = scmp.eq.s32.totalorder %s28, 0
      %p111 = por %p109, %p110
      %p112 = scmp.ne.s32.totalorder %s104, %s106
      %p113 = scmp.eq.s32.totalorder %s33, 1
      %p114 = por %p112, %p113
      %p115 = scmp.ne.s32.totalorder %s106, %s107
      %p116 = scmp.eq.s32.totalorder %s33, 0
      %p117 = por %p115, %p116
      %p118 = scmp.ne.s32.totalorder %s106, %s107
      %p119 = scmp.eq.s32.totalorder %s34, 1
      %p120 = por %p118, %p119
      %p122 = scmp.ne.s32.totalorder %s107, %s121
      %p123 = scmp.eq.s32.totalorder %s34, 0
      %p124 = por %p122, %p123
      %s126 = sadd.s32 %s125, 1
      %p129 = scmp.eq.s32.totalorder %s28, 1
      %p130 = scmp.ne.s32.totalorder %s125, %s127
      %p131 = scmp.eq.s32.totalorder %s28, 0
      %p132 = por %p130, %p131
      %p133 = scmp.ne.s32.totalorder %s125, %s127
      %p134 = scmp.eq.s32.totalorder %s33, 1
      %p135 = por %p133, %p134
      %p136 = scmp.ne.s32.totalorder %s127, %s128
      %p137 = scmp.eq.s32.totalorder %s33, 0
      %p138 = por %p136, %p137
      %p139 = scmp.ne.s32.totalorder %s127, %s128
      %p140 = scmp.eq.s32.totalorder %s34, 1
      %p141 = por %p139, %p140
      %p143 = scmp.ne.s32.totalorder %s128, %s142
      %p144 = scmp.eq.s32.totalorder %s34, 0
      %p145 = por %p143, %p144
      %s147 = sadd.s32 %s146, 1
      %p150 = scmp.eq.s32.totalorder %s28, 1
      %p151 = scmp.ne.s32.totalorder %s146, %s148
      %p152 = scmp.eq.s32.totalorder %s28, 0
      %p153 = por %p151, %p152
      %p154 = scmp.ne.s32.totalorder %s146, %s148
      %p155 = scmp.eq.s32.totalorder %s33, 1
      %p156 = por %p154, %p155
      %p157 = scmp.ne.s32.totalorder %s148, %s149
      %p158 = scmp.eq.s32.totalorder %s33, 0
      %p159 = por %p157, %p158
      %p160 = scmp.ne.s32.totalorder %s148, %s149
      %p161 = scmp.eq.s32.totalorder %s34, 1
      %p162 = por %p160, %p161
      %p164 = scmp.ne.s32.totalorder %s149, %s163
      %p165 = scmp.eq.s32.totalorder %s34, 0
      %p166 = por %p164, %p165
      %s168 = sadd.s32 %s167, 1
      %p171 = scmp.eq.s32.totalorder %s28, 1
      %p172 = scmp.ne.s32.totalorder %s167, %s169
      %p173 = scmp.eq.s32.totalorder %s28, 0
      %p174 = por %p172, %p173
      %p175 = scmp.ne.s32.totalorder %s167, %s169
      %p176 = scmp.eq.s32.totalorder %s33, 1
      %p177 = por %p175, %p176
      %p178 = scmp.ne.s32.totalorder %s169, %s170
      %p179 = scmp.eq.s32.totalorder %s33, 0
      %p180 = por %p178, %p179
      %p181 = scmp.ne.s32.totalorder %s169, %s170
      %p182 = scmp.eq.s32.totalorder %s34, 1
      %p183 = por %p181, %p182
      %p185 = scmp.ne.s32.totalorder %s170, %s184
      %p186 = scmp.eq.s32.totalorder %s34, 0
      %p187 = por %p185, %p186
      %s189 = sadd.s32 %s188, 1
      %p192 = scmp.eq.s32.totalorder %s28, 1
      %p193 = scmp.ne.s32.totalorder %s188, %s190
      %p194 = scmp.eq.s32.totalorder %s28, 0
      %p195 = por %p193, %p194
      %p196 = scmp.ne.s32.totalorder %s188, %s190
      %p197 = scmp.eq.s32.totalorder %s33, 1
      %p198 = por %p196, %p197
      %p199 = scmp.ne.s32.totalorder %s190, %s191
      %p200 = scmp.eq.s32.totalorder %s33, 0
      %p201 = por %p199, %p200
      %p202 = scmp.ne.s32.totalorder %s190, %s191
      %p203 = scmp.eq.s32.totalorder %s34, 1
      %p204 = por %p202, %p203
      %p206 = scmp.ne.s32.totalorder %s191, %s205
      %p207 = scmp.eq.s32.totalorder %s34, 0
      %p208 = por %p206, %p207
      %s210 = sadd.s32 %s209, 1
      %p213 = scmp.eq.s32.totalorder %s28, 1
      %p214 = scmp.ne.s32.totalorder %s209, %s211
      %p215 = scmp.eq.s32.totalorder %s28, 0
      %p216 = por %p214, %p215
      %p217 = scmp.ne.s32.totalorder %s209, %s211
      %p218 = scmp.eq.s32.totalorder %s33, 1
      %p219 = por %p217, %p218
      %p220 = scmp.ne.s32.totalorder %s211, %s212
      %p221 = scmp.eq.s32.totalorder %s33, 0
      %p222 = por %p220, %p221
      %p223 = scmp.ne.s32.totalorder %s211, %s212
      %p224 = scmp.eq.s32.totalorder %s34, 1
      %p225 = por %p223, %p224
      %p227 = scmp.ne.s32.totalorder %s212, %s226
      %p228 = scmp.eq.s32.totalorder %s34, 0
      %p229 = por %p227, %p228
      %s231 = sadd.s32 %s230, 1
      %p234 = scmp.eq.s32.totalorder %s28, 1
      %p235 = scmp.ne.s32.totalorder %s230, %s232
      %p236 = scmp.eq.s32.totalorder %s28, 0
      %p237 = por %p235, %p236
      %p238 = scmp.ne.s32.totalorder %s230, %s232
      %p239 = scmp.eq.s32.totalorder %s33, 1
      %p240 = por %p238, %p239
      %p241 = scmp.ne.s32.totalorder %s232, %s233
      %p242 = scmp.eq.s32.totalorder %s33, 0
      %p243 = por %p241, %p242
      %p244 = scmp.ne.s32.totalorder %s232, %s233
      %p245 = scmp.eq.s32.totalorder %s34, 1
      %p246 = por %p244, %p245
      %p248 = scmp.ne.s32.totalorder %s233, %s247
      %p249 = scmp.eq.s32.totalorder %s34, 0
      %p250 = por %p248, %p249
      %s252 = sadd.s32 %s251, 1
      %p255 = scmp.eq.s32.totalorder %s28, 1
      %p256 = scmp.ne.s32.totalorder %s251, %s253
      %p257 = scmp.eq.s32.totalorder %s28, 0
      %p258 = por %p256, %p257
      %p259 = scmp.ne.s32.totalorder %s251, %s253
      %p260 = scmp.eq.s32.totalorder %s33, 1
      %p261 = por %p259, %p260
      %p262 = scmp.ne.s32.totalorder %s253, %s254
      %p263 = scmp.eq.s32.totalorder %s33, 0
      %p264 = por %p262, %p263
      %p265 = scmp.ne.s32.totalorder %s253, %s254
      %p266 = scmp.eq.s32.totalorder %s34, 1
      %p267 = por %p265, %p266
      %p269 = scmp.ne.s32.totalorder %s254, %s268
      %p270 = scmp.eq.s32.totalorder %s34, 0
      %p271 = por %p269, %p270
      %s273 = sadd.s32 %s272, 1
      %p276 = scmp.eq.s32.totalorder %s28, 1
      %p277 = scmp.ne.s32.totalorder %s272, %s274
      %p278 = scmp.eq.s32.totalorder %s28, 0
      %p279 = por %p277, %p278
      %p280 = scmp.ne.s32.totalorder %s272, %s274
      %p281 = scmp.eq.s32.totalorder %s33, 1
      %p282 = por %p280, %p281
      %p283 = scmp.ne.s32.totalorder %s274, %s275
      %p284 = scmp.eq.s32.totalorder %s33, 0
      %p285 = por %p283, %p284
      %p286 = scmp.ne.s32.totalorder %s274, %s275
      %p287 = scmp.eq.s32.totalorder %s34, 1
      %p288 = por %p286, %p287
      %p290 = scmp.ne.s32.totalorder %s275, %s289
      %p291 = scmp.eq.s32.totalorder %s34, 0
      %p292 = por %p290, %p291
      %s294 = sadd.s32 %s293, 1
      %p297 = scmp.eq.s32.totalorder %s28, 1
      %p298 = scmp.ne.s32.totalorder %s293, %s295
      %p299 = scmp.eq.s32.totalorder %s28, 0
      %p300 = por %p298, %p299
      %p301 = scmp.ne.s32.totalorder %s293, %s295
      %p302 = scmp.eq.s32.totalorder %s33, 1
      %p303 = por %p301, %p302
      %p304 = scmp.ne.s32.totalorder %s295, %s296
      %p305 = scmp.eq.s32.totalorder %s33, 0
      %p306 = por %p304, %p305
      %p307 = scmp.ne.s32.totalorder %s295, %s296
      %p308 = scmp.eq.s32.totalorder %s34, 1
      %p309 = por %p307, %p308
      %p311 = scmp.ne.s32.totalorder %s296, %s310
      %p312 = scmp.eq.s32.totalorder %s34, 0
      %p313 = por %p311, %p312
      %s315 = sadd.s32 %s314, 1
      %p318 = scmp.eq.s32.totalorder %s28, 1
      %p319 = scmp.ne.s32.totalorder %s314, %s316
      %p320 = scmp.eq.s32.totalorder %s28, 0
      %p321 = por %p319, %p320
      %p322 = scmp.ne.s32.totalorder %s314, %s316
      %p323 = scmp.eq.s32.totalorder %s33, 1
      %p324 = por %p322, %p323
      %p325 = scmp.ne.s32.totalorder %s316, %s317
      %p326 = scmp.eq.s32.totalorder %s33, 0
      %p327 = por %p325, %p326
      %p328 = scmp.ne.s32.totalorder %s316, %s317
      %p329 = scmp.eq.s32.totalorder %s34, 1
      %p330 = por %p328, %p329
      %p332 = scmp.ne.s32.totalorder %s317, %s331
      %p333 = scmp.eq.s32.totalorder %s34, 0
      %p334 = por %p332, %p333
      %s336 = sadd.s32 %s335, 1
      %p339 = scmp.eq.s32.totalorder %s28, 1
      %p340 = scmp.ne.s32.totalorder %s335, %s337
      %p341 = scmp.eq.s32.totalorder %s28, 0
      %p342 = por %p340, %p341
      %p343 = scmp.ne.s32.totalorder %s335, %s337
      %p344 = scmp.eq.s32.totalorder %s33, 1
      %p345 = por %p343, %p344
      %p346 = scmp.ne.s32.totalorder %s337, %s338
      %p347 = scmp.eq.s32.totalorder %s33, 0
      %p348 = por %p346, %p347
      %p349 = scmp.ne.s32.totalorder %s337, %s338
      %p350 = scmp.eq.s32.totalorder %s34, 1
      %p351 = por %p349, %p350
      %p353 = scmp.ne.s32.totalorder %s338, %s352
      %p354 = scmp.eq.s32.totalorder %s34, 0
      %p355 = por %p353, %p354
      %s357 = sadd.s32 %s356, 1
      %p360 = scmp.eq.s32.totalorder %s28, 1
      %p361 = scmp.ne.s32.totalorder %s356, %s358
      %p362 = scmp.eq.s32.totalorder %s28, 0
      %p363 = por %p361, %p362
      %p364 = scmp.ne.s32.totalorder %s356, %s358
      %p365 = scmp.eq.s32.totalorder %s33, 1
      %p366 = por %p364, %p365
      %p367 = scmp.ne.s32.totalorder %s358, %s359
      %p368 = scmp.eq.s32.totalorder %s33, 0
      %p369 = por %p367, %p368
      %p370 = scmp.ne.s32.totalorder %s358, %s359
      %p371 = scmp.eq.s32.totalorder %s34, 1
      %p372 = por %p370, %p371
      %p374 = scmp.ne.s32.totalorder %s359, %s373
      %p375 = scmp.eq.s32.totalorder %s34, 0
      %p376 = por %p374, %p375
      %s378 = sadd.s32 %s377, 1
      %p381 = scmp.eq.s32.totalorder %s28, 1
      %p382 = scmp.ne.s32.totalorder %s377, %s379
      %p383 = scmp.eq.s32.totalorder %s28, 0
      %p384 = por %p382, %p383
      %p385 = scmp.ne.s32.totalorder %s377, %s379
      %p386 = scmp.eq.s32.totalorder %s33, 1
      %p387 = por %p385, %p386
      %p388 = scmp.ne.s32.totalorder %s379, %s380
      %p389 = scmp.eq.s32.totalorder %s33, 0
      %p390 = por %p388, %p389
      %p391 = scmp.ne.s32.totalorder %s379, %s380
      %p392 = scmp.eq.s32.totalorder %s34, 1
      %p393 = por %p391, %p392
      %p395 = scmp.ne.s32.totalorder %s380, %s394
      %p396 = scmp.eq.s32.totalorder %s34, 0
      %p397 = por %p395, %p396
      %s399 = sadd.s32 %s398, 1
      %p402 = scmp.eq.s32.totalorder %s28, 1
      %p403 = scmp.ne.s32.totalorder %s398, %s400
      %p404 = scmp.eq.s32.totalorder %s28, 0
      %p405 = por %p403, %p404
      %p406 = scmp.ne.s32.totalorder %s398, %s400
      %p407 = scmp.eq.s32.totalorder %s33, 1
      %p408 = por %p406, %p407
      %p409 = scmp.ne.s32.totalorder %s400, %s401
      %p410 = scmp.eq.s32.totalorder %s33, 0
      %p411 = por %p409, %p410
      %p412 = scmp.ne.s32.totalorder %s400, %s401
      %p413 = scmp.eq.s32.totalorder %s34, 1
      %p414 = por %p412, %p413
      %p416 = scmp.ne.s32.totalorder %s401, %s415
      %p417 = scmp.eq.s32.totalorder %s34, 0
      %p418 = por %p416, %p417
      %s420 = sadd.s32 %s419, 1
      %p423 = scmp.eq.s32.totalorder %s28, 1
      %p424 = scmp.ne.s32.totalorder %s419, %s421
      %p425 = scmp.eq.s32.totalorder %s28, 0
      %p426 = por %p424, %p425
      %p427 = scmp.ne.s32.totalorder %s419, %s421
      %p428 = scmp.eq.s32.totalorder %s33, 1
      %p429 = por %p427, %p428
      %p430 = scmp.ne.s32.totalorder %s421, %s422
      %p431 = scmp.eq.s32.totalorder %s33, 0
      %p432 = por %p430, %p431
      %p433 = scmp.ne.s32.totalorder %s421, %s422
      %p434 = scmp.eq.s32.totalorder %s34, 1
      %p435 = por %p433, %p434
      %p437 = scmp.ne.s32.totalorder %s422, %s436
      %p438 = scmp.eq.s32.totalorder %s34, 0
      %p439 = por %p437, %p438
      %s440 = ssub.s32 %s28, %s35
      %p441 = scmp.eq.s32.totalorder %s440, 0
      %s443 = sadd.s32 %s442, 1
      %s444 = scalar_select %p441, %s442, %s443
      %p447 = pneg %p441
      %p448 = scmp.eq.s32.totalorder %s28, 1
      %p449 = por %p447, %p448
      %p450 = scmp.ne.s32.totalorder %s442, %s445
      %p451 = scmp.eq.s32.totalorder %s28, 0
      %p452 = por %p450, %p451
      %p453 = scmp.ne.s32.totalorder %s442, %s445
      %p454 = scmp.eq.s32.totalorder %s33, 1
      %p455 = por %p453, %p454
      %p456 = scmp.ne.s32.totalorder %s445, %s446
      %p457 = scmp.eq.s32.totalorder %s33, 0
      %p458 = por %p456, %p457
      %p459 = scmp.ne.s32.totalorder %s445, %s446
      %p460 = scmp.eq.s32.totalorder %s34, 1
      %p461 = por %p459, %p460
      %p463 = scmp.ne.s32.totalorder %s446, %s462
      %p464 = scmp.eq.s32.totalorder %s34, 0
      %p465 = por %p463, %p464
      %p466 = scmp.le.s32.totalorder 1, %s28
      %p467 = scmp.lt.s32.totalorder %s28, 3
      %p468 = pnand %p466, %p467
      %p469 = pneg %p468
      // Predicated region
      $region9: #{simplified_hymba.1} parent=5 // pred_check
        _
      $region10: #{simplified_hymba.1} parent=5 // pred_check_branch
        %471 = sbr.rel (%p468) target = $region12
      $region11: #{simplified_hymba.1} parent=5 // pred_region
        %s472 = ssub.s32 %s28, 1
        // Predicated region
        $region13: #{simplified_hymba.1} parent=11 // pred_check
          %p473 = pneg %p49
        $region14: #{simplified_hymba.1} parent=11 // pred_check_branch
          %475 = sbr.rel (%p473) target = $region16
        $region15: #{simplified_hymba.1} parent=11 // pred_region
          _
        $region16: #{simplified_hymba.1} parent=11 // pred_fallthru
          _
        // Predicated region
        $region17: #{simplified_hymba.1} parent=11 // pred_check
          %p476 = pneg %p96
        $region18: #{simplified_hymba.1} parent=11 // pred_check_branch
          %478 = sbr.rel (%p476) target = $region20
        $region19: #{simplified_hymba.1} parent=11 // pred_region
          _
        $region20: #{simplified_hymba.1} parent=11 // pred_fallthru
          _
        // Predicated region
        $region21: #{simplified_hymba.1} parent=11 // pred_check
          %p479 = pneg %p117
        $region22: #{simplified_hymba.1} parent=11 // pred_check_branch
          %481 = sbr.rel (%p479) target = $region24
        $region23: #{simplified_hymba.1} parent=11 // pred_region
          _
        $region24: #{simplified_hymba.1} parent=11 // pred_fallthru
          _
        // Predicated region
        $region25: #{simplified_hymba.1} parent=11 // pred_check
          %p482 = pneg %p138
        $region26: #{simplified_hymba.1} parent=11 // pred_check_branch
          %484 = sbr.rel (%p482) target = $region28
        $region27: #{simplified_hymba.1} parent=11 // pred_region
          _
        $region28: #{simplified_hymba.1} parent=11 // pred_fallthru
          _
        // Predicated region
        $region29: #{simplified_hymba.1} parent=11 // pred_check
          %p485 = pneg %p159
        $region30: #{simplified_hymba.1} parent=11 // pred_check_branch
          %487 = sbr.rel (%p485) target = $region32
        $region31: #{simplified_hymba.1} parent=11 // pred_region
          _
        $region32: #{simplified_hymba.1} parent=11 // pred_fallthru
          _
        // Predicated region
        $region33: #{simplified_hymba.1} parent=11 // pred_check
          %p488 = pneg %p180
        $region34: #{simplified_hymba.1} parent=11 // pred_check_branch
          %490 = sbr.rel (%p488) target = $region36
        $region35: #{simplified_hymba.1} parent=11 // pred_region
          _
        $region36: #{simplified_hymba.1} parent=11 // pred_fallthru
          _
        // Predicated region
        $region37: #{simplified_hymba.1} parent=11 // pred_check
          %p491 = pneg %p201
        $region38: #{simplified_hymba.1} parent=11 // pred_check_branch
          %493 = sbr.rel (%p491) target = $region40
        $region39: #{simplified_hymba.1} parent=11 // pred_region
          _
        $region40: #{simplified_hymba.1} parent=11 // pred_fallthru
          _
        // Predicated region
        $region41: #{simplified_hymba.1} parent=11 // pred_check
          %p494 = pneg %p222
        $region42: #{simplified_hymba.1} parent=11 // pred_check_branch
          %496 = sbr.rel (%p494) target = $region44
        $region43: #{simplified_hymba.1} parent=11 // pred_region
          _
        $region44: #{simplified_hymba.1} parent=11 // pred_fallthru
          _
        // Predicated region
        $region45: #{simplified_hymba.1} parent=11 // pred_check
          %p497 = pneg %p243
        $region46: #{simplified_hymba.1} parent=11 // pred_check_branch
          %499 = sbr.rel (%p497) target = $region48
        $region47: #{simplified_hymba.1} parent=11 // pred_region
          _
        $region48: #{simplified_hymba.1} parent=11 // pred_fallthru
          _
        // Predicated region
        $region49: #{simplified_hymba.1} parent=11 // pred_check
          %p500 = pneg %p264
        $region50: #{simplified_hymba.1} parent=11 // pred_check_branch
          %502 = sbr.rel (%p500) target = $region52
        $region51: #{simplified_hymba.1} parent=11 // pred_region
          _
        $region52: #{simplified_hymba.1} parent=11 // pred_fallthru
          _
        // Predicated region
        $region53: #{simplified_hymba.1} parent=11 // pred_check
          %p503 = pneg %p285
        $region54: #{simplified_hymba.1} parent=11 // pred_check_branch
          %505 = sbr.rel (%p503) target = $region56
        $region55: #{simplified_hymba.1} parent=11 // pred_region
          _
        $region56: #{simplified_hymba.1} parent=11 // pred_fallthru
          _
        // Predicated region
        $region57: #{simplified_hymba.1} parent=11 // pred_check
          %p506 = pneg %p306
        $region58: #{simplified_hymba.1} parent=11 // pred_check_branch
          %508 = sbr.rel (%p506) target = $region60
        $region59: #{simplified_hymba.1} parent=11 // pred_region
          _
        $region60: #{simplified_hymba.1} parent=11 // pred_fallthru
          _
        // Predicated region
        $region61: #{simplified_hymba.1} parent=11 // pred_check
          %p509 = pneg %p327
        $region62: #{simplified_hymba.1} parent=11 // pred_check_branch
          %511 = sbr.rel (%p509) target = $region64
        $region63: #{simplified_hymba.1} parent=11 // pred_region
          _
        $region64: #{simplified_hymba.1} parent=11 // pred_fallthru
          _
        // Predicated region
        $region65: #{simplified_hymba.1} parent=11 // pred_check
          %p512 = pneg %p348
        $region66: #{simplified_hymba.1} parent=11 // pred_check_branch
          %514 = sbr.rel (%p512) target = $region68
        $region67: #{simplified_hymba.1} parent=11 // pred_region
          _
        $region68: #{simplified_hymba.1} parent=11 // pred_fallthru
          _
        // Predicated region
        $region69: #{simplified_hymba.1} parent=11 // pred_check
          %p515 = pneg %p369
        $region70: #{simplified_hymba.1} parent=11 // pred_check_branch
          %517 = sbr.rel (%p515) target = $region72
        $region71: #{simplified_hymba.1} parent=11 // pred_region
          _
        $region72: #{simplified_hymba.1} parent=11 // pred_fallthru
          _
        // Predicated region
        $region73: #{simplified_hymba.1} parent=11 // pred_check
          %p518 = pneg %p390
        $region74: #{simplified_hymba.1} parent=11 // pred_check_branch
          %520 = sbr.rel (%p518) target = $region76
        $region75: #{simplified_hymba.1} parent=11 // pred_region
          _
        $region76: #{simplified_hymba.1} parent=11 // pred_fallthru
          _
        // Predicated region
        $region77: #{simplified_hymba.1} parent=11 // pred_check
          %p521 = pneg %p411
        $region78: #{simplified_hymba.1} parent=11 // pred_check_branch
          %523 = sbr.rel (%p521) target = $region80
        $region79: #{simplified_hymba.1} parent=11 // pred_region
          _
        $region80: #{simplified_hymba.1} parent=11 // pred_fallthru
          _
        // Predicated region
        $region81: #{simplified_hymba.1} parent=11 // pred_check
          %p524 = pneg %p432
        $region82: #{simplified_hymba.1} parent=11 // pred_check_branch
          %526 = sbr.rel (%p524) target = $region84
        $region83: #{simplified_hymba.1} parent=11 // pred_region
          _
        $region84: #{simplified_hymba.1} parent=11 // pred_fallthru
          _
      $region12: #{simplified_hymba.1} parent=5 // pred_fallthru
        _
      %p527 = scmp.lt.s32.totalorder %s28, 2
      // Predicated region
      $region85: #{simplified_hymba.1} parent=5 // pred_check
        %p528 = pneg %p527
      $region86: #{simplified_hymba.1} parent=5 // pred_check_branch
        %530 = sbr.rel (%p528) target = $region88
      $region87: #{simplified_hymba.1} parent=5 // pred_region
        // Predicated region
        $region89: #{simplified_hymba.1} parent=87 // pred_check
          %p531 = pneg %p69
        $region90: #{simplified_hymba.1} parent=87 // pred_check_branch
          %533 = sbr.rel (%p531) target = $region92
        $region91: #{simplified_hymba.1} parent=87 // pred_region
          %p534 = scmp.lt.s32.totalorder %s28, 1
          %s535 = scalar_select %p534, %s28, 1
          %s536 = smul.addr %s535, 8
          %s537 = scalar_lea.vmem %s1, %s536
        $region92: #{simplified_hymba.1} parent=87 // pred_fallthru
          _
      $region88: #{simplified_hymba.1} parent=5 // pred_fallthru
        _
      %p538 = scmp.le.s32.totalorder 1, %s28
      %p539 = scmp.lt.s32.totalorder %s28, 3
      %p540 = pnand %p538, %p539
      %p541 = pneg %p540
      // Predicated region
      $region93: #{simplified_hymba.1} parent=5 // pred_check
        _
      $region94: #{simplified_hymba.1} parent=5 // pred_check_branch
        %543 = sbr.rel (%p540) target = $region96
      $region95: #{simplified_hymba.1} parent=5 // pred_region
        %s544 = ssub.s32 %s28, 1
        %p545 = pneg %p49
        %p546 = pneg %p46
        %p547 = scmp.lt.s32.totalorder %s33, 1
        %s548 = scalar_select %p547, %s33, 1
        %s549 = smul.addr %s548, 8
        %s550 = scalar_lea.vmem %s1, %s549
        %p551 = pneg %p75
        %p552 = pneg %p72
        %p553 = pneg %p96
        %p554 = pneg %p93
        %p555 = pneg %p117
        %p556 = pneg %p114
        %p557 = pneg %p138
        %p558 = pneg %p135
        %p559 = pneg %p159
        %p560 = pneg %p156
        %p561 = pneg %p180
        %p562 = pneg %p177
        %p563 = pneg %p201
        %p564 = pneg %p198
        %p565 = pneg %p222
        %p566 = pneg %p219
        %p567 = pneg %p243
        %p568 = pneg %p240
        %p569 = pneg %p264
        %p570 = pneg %p261
        %p571 = pneg %p285
        %p572 = pneg %p282
        %p573 = pneg %p306
        %p574 = pneg %p303
        %p575 = pneg %p327
        %p576 = pneg %p324
        %p577 = pneg %p348
        %p578 = pneg %p345
        %p579 = pneg %p369
        %p580 = pneg %p366
        %p581 = pneg %p390
        %p582 = pneg %p387
        %p583 = pneg %p411
        %p584 = pneg %p408
        %p585 = pneg %p432
        %p586 = pneg %p429
        %p587 = pneg %p458
        %p588 = pneg %p455
        %s589 = sand.u32 %s445, 1
        %s590 = scalar_lea.sflag [#allocation3], %s589
        %s591 = sand.u32 %s445, 1
        %s592 = smul.addr %s591, 8
        %s593 = scalar_lea.vmem [#allocation2], %s592
        %p594 = scmp.lt.s32.totalorder %s33, 1
        %s595 = scalar_select %p594, %s33, 1
        %s596 = smul.addr %s595, 8
        %s597 = scalar_lea.vmem %s1, %s596
        %v598 = vld [vmem:[%s0] sm:$0xf]
        %v599 = vld [vmem:[%s597] sm:$0xff]
        %v601 = vrot.slane %v599, 4
        %vm603 = vcmask 1043456
        %v604 = vsel %vm603, %v598, %v601
        %v605 = vld [vmem:[%s3] sm:$0xff]
        %v606 = vld [vmem:[%s3 + $0x8] sm:$0xf]
        %v607 = vld [vmem:[%s4] sm:$0xff]
        %v608 = vld [vmem:[%s4 + $0x8] sm:$0xf]
        %v609 = vld [vmem:[%s5] sm:$0xff]
        %v610 = vld [vmem:[%s5 + $0x8] sm:$0xf]
        %v611 = vld [vmem:[%s6] sm:$0xff]
        %v612 = vld [vmem:[%s6 + $0x8] sm:$0xf]
        %v613 = vld [vmem:[%s7] sm:$0xff]
        %v614 = vld [vmem:[%s7 + $0x8] sm:$0xff]
        %v615 = vld [vmem:[%s7 + $0x10] sm:$0xff]
        %v616 = vld [vmem:[%s7 + $0x18] sm:$0xff]
        %v617 = vld [vmem:[%s7 + $0x20] sm:$0xff]
        %v618 = vld [vmem:[%s7 + $0x28] sm:$0xff]
        %v619 = vld [vmem:[%s7 + $0x30] sm:$0xff]
        %v620 = vld [vmem:[%s7 + $0x38] sm:$0xff]
        %v621 = vld [vmem:[%s8] sm:$0xff]
        %v622 = vld [vmem:[%s8 + $0x8] sm:$0xff]
        %v623 = vld [vmem:[%s8 + $0x10] sm:$0xff]
        %v624 = vld [vmem:[%s8 + $0x18] sm:$0xff]
        %v625 = vld [vmem:[%s18] sm:$0xff]
        %v626 = vmul.f32 %v604, %v604
        %v627 = vmul.f32 %v601, %v601
        %vm628 = vcmask 261120
        %v629 = vsel %vm628, %v626, 0.0
        %630 = vadd.xlane.f32.xlu0 %v629
        %v631 = vpop.xlane.xlu0 %630
        %vm632 = vcmask 257024
        %v633 = vsel %vm632, %v627, 0.0
        %634 = vadd.xlane.f32.xlu0 %v633
        %v635 = vpop.xlane.xlu0 %634
        %v636 = vrcp.pop 32.0
        %v637 = vmul.f32 32.0, %v636
        %v638 = vsub.f32 1.0, %v637
        %v639 = vmul.f32 %v636, %v638
        %v640 = vadd.f32 %v636, %v639
        %vm641 = vweird.f32 %v636
        %v642 = vsel %vm641, %v636, %v640
        %v643 = vmul.f32 %v631, %v642
        %v644 = vmul.f32 %v635, %v642
        %v645 = vadd.f32 %v643, 1e-06
        %v646 = vadd.f32 %v644, 1e-06
        %v647 = vrsqrt.pop %v645
        %v648 = vmul.f32 %v647, %v645
        %v649 = vmul.f32 %v648, %v647
        %v650 = vmul.f32 0.5, %v649
        %v651 = vsub.f32 1.5, %v650
        %v652 = vmul.f32 %v647, %v651
        %vm653 = vweird.f32 %v645
        %vm654 = vweird.f32 %v647
        %vm655 = vmor %vm653, %vm654
        %v656 = vsel %vm655, %v647, %v652
        %v657 = vrsqrt.pop %v646
        %v658 = vmul.f32 %v657, %v646
        %v659 = vmul.f32 %v658, %v657
        %v660 = vmul.f32 0.5, %v659
        %v661 = vsub.f32 1.5, %v660
        %v662 = vmul.f32 %v657, %v661
        %vm663 = vweird.f32 %v646
        %vm664 = vweird.f32 %v657
        %vm665 = vmor %vm663, %vm664
        %v666 = vsel %vm665, %v657, %v662
        %v667 = vmul.f32 %v604, %v656
        %v668 = vmul.f32 %v601, %v666
        %v669 = vperm.slane %v625, 0
        %v670 = vmul.f32 %v667, %v669
        %v671 = vmul.f32 %v668, %v669
        %v672 = vld [vmem:[%s9] sm:$0xff]
        %v673 = vld [vmem:[%s9 + $0x8] sm:$0xff]
        %v674 = vld [vmem:[%s9 + $0x10] sm:$0xff]
        %v675 = vld [vmem:[%s9 + $0x18] sm:$0xff]
        %v676 = vld [vmem:[%s9 + $0x20] sm:$0xff]
        %v677 = vld [vmem:[%s9 + $0x28] sm:$0xff]
        %v678 = vld [vmem:[%s9 + $0x30] sm:$0xff]
        %v679 = vld [vmem:[%s9 + $0x38] sm:$0xff]
        %v681 = vsel %vm628, %v670, 0
        %v684 = vsel %vm628, %v671, 0
        %686 = vmatpush.msra.mxu0 0.0
        %687 = vmatpush.msra.mxu0 0.0
        %688 = vmatpush.msra.mxu0 0.0
        %689 = vmatpush.msra.mxu0 0.0
        %690 = vmatpush.msra.mxu0 0.0
        %691 = vmatpush.msra.mxu0 0.0
        %692 = vmatpush.msra.mxu0 0.0
        %693 = vmatpush.msra.mxu0 0.0
        %694 = vmatpush.msra.mxu0 0.0
        %695 = vmatpush.msra.mxu0 0.0
        %696 = vmatpush.msra.mxu0 0.0
        %697 = vmatpush.msra.mxu0 0.0
        %698 = vmatpush.msra.mxu0 %v678
        %699 = vmatpush.msra.mxu0 %v676
        %700 = vmatpush.msra.mxu0 %v674
        %701 = vmatpush.msra.mxu0 %v672
        %702 = vmatmul.f32.gmra.mxu0 %v681
        %v703 = vpop.f32.mrf.mxu0
        %v704 = vadd.f32 0.0, %v703
        %705 = vmatmul.f32.gmra.mxu0 %v684
        %v706 = vpop.f32.mrf.mxu0
        %v707 = vadd.f32 0.0, %v706
        %708 = vdwg.mxu0
        %709 = vmatpush.msra.mxu0 0.0
        %710 = vmatpush.msra.mxu0 0.0
        %711 = vmatpush.msra.mxu0 0.0
        %712 = vmatpush.msra.mxu0 0.0
        %713 = vmatpush.msra.mxu0 0.0
        %714 = vmatpush.msra.mxu0 0.0
        %715 = vmatpush.msra.mxu0 0.0
        %716 = vmatpush.msra.mxu0 0.0
        %717 = vmatpush.msra.mxu0 0.0
        %718 = vmatpush.msra.mxu0 0.0
        %719 = vmatpush.msra.mxu0 0.0
        %720 = vmatpush.msra.mxu0 0.0
        %721 = vmatpush.msra.mxu0 %v679
        %722 = vmatpush.msra.mxu0 %v677
        %723 = vmatpush.msra.mxu0 %v675
        %724 = vmatpush.msra.mxu0 %v673
        %725 = vmatmul.f32.gmra.mxu0 %v681
        %v726 = vpop.f32.mrf.mxu0
        %v727 = vadd.f32 0.0, %v726
        %728 = vmatmul.f32.gmra.mxu0 %v684
        %v729 = vpop.f32.mrf.mxu0
        %v730 = vadd.f32 0.0, %v729
        %731 = vdwg.mxu0
        %v732 = vmul.f32 %v704, %v605
        %v733 = vmul.f32 %v707, %v606
        %vm734 = vcmask 523264
        %v736 = vsel %vm734, %v704, 0
        %v739 = vsel %vm734, %v707, 0
        %741 = vmatpush.msra.mxu0 0.0
        %742 = vmatpush.msra.mxu0 0.0
        %743 = vmatpush.msra.mxu0 0.0
        %744 = vmatpush.msra.mxu0 0.0
        %745 = vmatpush.msra.mxu0 0.0
        %746 = vmatpush.msra.mxu0 0.0
        %747 = vmatpush.msra.mxu0 0.0
        %748 = vmatpush.msra.mxu0 0.0
        %749 = vmatpush.msra.mxu0 %v620
        %750 = vmatpush.msra.mxu0 %v619
        %751 = vmatpush.msra.mxu0 %v618
        %752 = vmatpush.msra.mxu0 %v617
        %753 = vmatpush.msra.mxu0 %v616
        %754 = vmatpush.msra.mxu0 %v615
        %755 = vmatpush.msra.mxu0 %v614
        %756 = vmatpush.msra.mxu0 %v613
        %757 = vmatmul.f32.gmra.mxu0 %v736
        %v758 = vpop.f32.mrf.mxu0
        %v759 = vadd.f32 0.0, %v758
        %760 = vmatmul.f32.gmra.mxu0 %v739
        %v761 = vpop.f32.mrf.mxu0
        %v762 = vadd.f32 0.0, %v761
        %763 = vdwg.mxu0
        %v764 = vmul.f32 %v759, %v607
        %v765 = vmul.f32 %v762, %v608
        %v766 = vadd.f32 %v732, %v764
        %v767 = vadd.f32 %v733, %v765
        %770 = vrot.lane.b32.xlu0 %v609, 64
        %v771 = vpop.permute.xlu0 %770
        %772 = vrot.lane.b32.xlu0 %v610, 64
        %v773 = vpop.permute.xlu0 %772
        %v776 = vmul.f32 %v704, %v771
        %v777 = vmul.f32 %v707, %v773
        %778 = vrot.lane.b32.xlu0 %v704, 64
        %v779 = vpop.permute.xlu0 %778
        %780 = vrot.lane.b32.xlu0 %v707, 64
        %v781 = vpop.permute.xlu0 %780
        %v782 = vsel %vm628, %v779, 0
        %v784 = vsel %vm628, %v781, 0
        %786 = vmatpush.msra.mxu0 0.0
        %787 = vmatpush.msra.mxu0 0.0
        %788 = vmatpush.msra.mxu0 0.0
        %789 = vmatpush.msra.mxu0 0.0
        %790 = vmatpush.msra.mxu0 0.0
        %791 = vmatpush.msra.mxu0 0.0
        %792 = vmatpush.msra.mxu0 0.0
        %793 = vmatpush.msra.mxu0 0.0
        %794 = vmatpush.msra.mxu0 0.0
        %795 = vmatpush.msra.mxu0 0.0
        %796 = vmatpush.msra.mxu0 0.0
        %797 = vmatpush.msra.mxu0 0.0
        %798 = vmatpush.msra.mxu0 %v624
        %799 = vmatpush.msra.mxu0 %v623
        %800 = vmatpush.msra.mxu0 %v622
        %801 = vmatpush.msra.mxu0 %v621
        %802 = vmatmul.f32.gmra.mxu0 %v782
        %v803 = vpop.f32.mrf.mxu0
        %v804 = vadd.f32 0.0, %v803
        %805 = vmatmul.f32.gmra.mxu0 %v784
        %v806 = vpop.f32.mrf.mxu0
        %v807 = vadd.f32 0.0, %v806
        %808 = vdwg.mxu0
        %v809 = vmul.f32 %v804, %v611
        %v810 = vmul.f32 %v807, %v612
        %813 = vrot.lane.b32.xlu0 %v809, 64
        %v814 = vpop.permute.xlu0 %813
        %815 = vrot.lane.b32.xlu0 %v810, 64
        %v816 = vpop.permute.xlu0 %815
        %v819 = vadd.f32 %v776, %v814
        %v820 = vadd.f32 %v777, %v816
        %v821 = vld [vmem:[%s2] sm:$0xff]
        %v822 = vld [vmem:[%s2 + $0x8] sm:$0xf]
        %v825 = vrot.slane %v821, 4
        %v826 = vrot.slane %v822, 4
        %v827 = vsel %vm603, %v825, %v826
        %v830 = vsel %vm603, %v822, %v825
        %v833 = vrot.slane %v766, 4
        %v834 = vrot.slane %v767, 4
        %v835 = vsel %vm603, %v833, %v834
        %836 = vrot.lane.b32.xlu0 %v833, 112
        %v837 = vpop.permute.xlu0 %836
        %838 = vrot.lane.b32.xlu0 %v835, 112
        %v839 = vpop.permute.xlu0 %838
        %v841 = vsel %vm603, %v767, %v837
        %844 = vrot.lane.b32.xlu0 %v819, 64
        %v845 = vpop.permute.xlu0 %844
        %846 = vrot.lane.b32.xlu0 %v820, 64
        %v847 = vpop.permute.xlu0 %846
        %vm848 = vcmask 130048
        %v849 = vsel %vm848, %v766, 0
        %v852 = vsel %vm848, %v841, 0
        %v854 = vsel %vm848, %v839, 0
        %v856 = vsel %vm848, %v845, 0
        %v858 = vsel %vm848, %v847, 0
        %860 = vmatpush.xpose.msra.mxu0 0.0
        %861 = vmatpush.xpose.msra.mxu0 0.0
        %862 = vmatpush.xpose.msra.mxu0 0.0
        %863 = vmatpush.xpose.msra.mxu0 0.0
        %864 = vmatpush.xpose.msra.mxu0 0.0
        %865 = vmatpush.xpose.msra.mxu0 0.0
        %866 = vmatpush.xpose.msra.mxu0 0.0
        %867 = vmatpush.xpose.msra.mxu0 0.0
        %868 = vmatpush.xpose.msra.mxu0 0.0
        %869 = vmatpush.xpose.msra.mxu0 0.0
        %870 = vmatpush.xpose.msra.mxu0 0.0
        %871 = vmatpush.xpose.msra.mxu0 0.0
        %872 = vmatpush.xpose.msra.mxu0 0.0
        %873 = vmatpush.xpose.msra.mxu0 0.0
        %874 = vmatpush.xpose.msra.mxu0 %v858
        %875 = vmatpush.xpose.msra.mxu0 %v856
        %876 = vmatmul.f32.gmra.mxu0 %v849
        %v877 = vpop.f32.mrf.mxu0
        %v878 = vadd.f32 0.0, %v877
        %879 = vmatmul.f32.gmra.mxu0 %v852
        %v880 = vpop.f32.mrf.mxu0
        %v881 = vadd.f32 0.0, %v880
        %882 = vmatmul.f32.gmra.mxu0 %v854
        %v883 = vpop.f32.mrf.mxu0
        %v884 = vadd.f32 0.0, %v883
        %885 = vdwg.mxu0
        %v886 = vmul.f32 %v878, 0.25
        %v887 = vmul.f32 %v881, 0.25
        %v888 = vmul.f32 %v884, 0.25
        %v889 = vadd.f32 %v886, %v821
        %v890 = vadd.f32 %v887, %v830
        %v891 = vadd.f32 %v888, %v827
        %vm892 = vcmask 97280
        %v893 = vsel %vm892, %v889, -inf
        %894 = vmax.xlane.f32.xlu0 %v893
        %v895 = vpop.xlane.xlu0 %894
        %v896 = vsel %vm892, %v890, -inf
        %897 = vmax.xlane.f32.xlu0 %v896
        %v898 = vpop.xlane.xlu0 %897
        %v899 = vsel %vm892, %v891, -inf
        %900 = vmax.xlane.f32.xlu0 %v899
        %v901 = vpop.xlane.xlu0 %900
        %v902 = vsub.f32 %v889, %v895
        %v903 = vsub.f32 %v890, %v898
        %v904 = vsub.f32 %v891, %v901
        %v905 = vmul.f32 %v902, 1.442695
        %v906 = vpow.pop %v905
        %v907 = vmul.f32 %v903, 1.442695
        %v908 = vpow.pop %v907
        %v909 = vmul.f32 %v904, 1.442695
        %v910 = vpow.pop %v909
        %v911 = vsel %vm892, %v906, 0.0
        %912 = vadd.xlane.f32.xlu0 %v911
        %v913 = vpop.xlane.xlu0 %912
        %v914 = vsel %vm892, %v908, 0.0
        %915 = vadd.xlane.f32.xlu0 %v914
        %v916 = vpop.xlane.xlu0 %915
        %v917 = vsel %vm892, %v910, 0.0
        %918 = vadd.xlane.f32.xlu0 %v917
        %v919 = vpop.xlane.xlu0 %918
        %v920 = vrcp.pop %v913
        %v921 = vrcp.pop %v916
        %v922 = vrcp.pop %v919
        %v923 = vmul.f32 %v906, %v920
        %v924 = vmul.f32 %v908, %v921
        %v925 = vmul.f32 %v910, %v922
        %926 = vrot.lane.b32.xlu0 %v704, 32
        %v927 = vpop.permute.xlu0 %926
        %928 = vrot.lane.b32.xlu0 %v707, 32
        %v929 = vpop.permute.xlu0 %928
        %v932 = vsel %vm892, %v923, 0
        %v935 = vsel %vm892, %v924, 0
        %v938 = vsel %vm892, %v925, 0
        %v940 = vsel %vm603, %v929, 0
        %942 = vmatpush.msra.mxu0 0.0
        %943 = vmatpush.msra.mxu0 0.0
        %944 = vmatpush.msra.mxu0 0.0
        %945 = vmatpush.msra.mxu0 0.0
        %946 = vmatpush.msra.mxu0 0.0
        %947 = vmatpush.msra.mxu0 0.0
        %948 = vmatpush.msra.mxu0 0.0
        %949 = vmatpush.msra.mxu0 0.0
        %950 = vmatpush.msra.mxu0 0.0
        %951 = vmatpush.msra.mxu0 0.0
        %952 = vmatpush.msra.mxu0 0.0
        %953 = vmatpush.msra.mxu0 0.0
        %954 = vmatpush.msra.mxu0 0.0
        %955 = vmatpush.msra.mxu0 0.0
        %956 = vmatpush.msra.mxu0 %v940
        %957 = vmatpush.msra.mxu0 %v927
        %958 = vmatmul.f32.gmra.mxu0 %v932
        %v959 = vpop.f32.mrf.mxu0
        %v960 = vadd.f32 0.0, %v959
        %961 = vmatmul.f32.gmra.mxu0 %v935
        %v962 = vpop.f32.mrf.mxu0
        %v963 = vadd.f32 0.0, %v962
        %964 = vmatmul.f32.gmra.mxu0 %v938
        %v965 = vpop.f32.mrf.mxu0
        %v966 = vadd.f32 0.0, %v965
        %967 = vdwg.mxu0
        %968 = vrot.lane.b32.xlu0 %v766, 96
        %v969 = vpop.permute.xlu0 %968
        %970 = vrot.lane.b32.xlu0 %v841, 96
        %v971 = vpop.permute.xlu0 %970
        %972 = vrot.lane.b32.xlu0 %v839, 96
        %v973 = vpop.permute.xlu0 %972
        %974 = vrot.lane.b32.xlu0 %v819, 48
        %v975 = vpop.permute.xlu0 %974
        %976 = vrot.lane.b32.xlu0 %v820, 48
        %v977 = vpop.permute.xlu0 %976
        %v978 = vsel %vm848, %v969, 0
        %v980 = vsel %vm848, %v971, 0
        %v982 = vsel %vm848, %v973, 0
        %v984 = vsel %vm848, %v975, 0
        %v986 = vsel %vm848, %v977, 0
        %988 = vmatpush.xpose.msra.mxu0 0.0
        %989 = vmatpush.xpose.msra.mxu0 0.0
        %990 = vmatpush.xpose.msra.mxu0 0.0
        %991 = vmatpush.xpose.msra.mxu0 0.0
        %992 = vmatpush.xpose.msra.mxu0 0.0
        %993 = vmatpush.xpose.msra.mxu0 0.0
        %994 = vmatpush.xpose.msra.mxu0 0.0
        %995 = vmatpush.xpose.msra.mxu0 0.0
        %996 = vmatpush.xpose.msra.mxu0 0.0
        %997 = vmatpush.xpose.msra.mxu0 0.0
        %998 = vmatpush.xpose.msra.mxu0 0.0
        %999 = vmatpush.xpose.msra.mxu0 0.0
        %1000 = vmatpush.xpose.msra.mxu0 0.0
        %1001 = vmatpush.xpose.msra.mxu0 0.0
        %1002 = vmatpush.xpose.msra.mxu0 %v986
        %1003 = vmatpush.xpose.msra.mxu0 %v984
        %1004 = vmatmul.f32.gmra.mxu0 %v978
        %v1005 = vpop.f32.mrf.mxu0
        %v1006 = vadd.f32 0.0, %v1005
        %1007 = vmatmul.f32.gmra.mxu0 %v980
        %v1008 = vpop.f32.mrf.mxu0
        %v1009 = vadd.f32 0.0, %v1008
        %1010 = vmatmul.f32.gmra.mxu0 %v982
        %v1011 = vpop.f32.mrf.mxu0
        %v1012 = vadd.f32 0.0, %v1011
        %1013 = vdwg.mxu0
        %v1014 = vmul.f32 %v1006, 0.25
        %v1015 = vmul.f32 %v1009, 0.25
        %v1016 = vmul.f32 %v1012, 0.25
        %v1017 = vadd.f32 %v1014, %v821
        %v1018 = vadd.f32 %v1015, %v830
        %v1019 = vadd.f32 %v1016, %v827
        %v1020 = vsel %vm892, %v1017, -inf
        %1021 = vmax.xlane.f32.xlu0 %v1020
        %v1022 = vpop.xlane.xlu0 %1021
        %v1023 = vsel %vm892, %v1018, -inf
        %1024 = vmax.xlane.f32.xlu0 %v1023
        %v1025 = vpop.xlane.xlu0 %1024
        %v1026 = vsel %vm892, %v1019, -inf
        %1027 = vmax.xlane.f32.xlu0 %v1026
        %v1028 = vpop.xlane.xlu0 %1027
        %v1029 = vsub.f32 %v1017, %v1022
        %v1030 = vsub.f32 %v1018, %v1025
        %v1031 = vsub.f32 %v1019, %v1028
        %v1032 = vmul.f32 %v1029, 1.442695
        %v1033 = vpow.pop %v1032
        %v1034 = vmul.f32 %v1030, 1.442695
        %v1035 = vpow.pop %v1034
        %v1036 = vmul.f32 %v1031, 1.442695
        %v1037 = vpow.pop %v1036
        %v1038 = vsel %vm892, %v1033, 0.0
        %1039 = vadd.xlane.f32.xlu0 %v1038
        %v1040 = vpop.xlane.xlu0 %1039
        %v1041 = vsel %vm892, %v1035, 0.0
        %1042 = vadd.xlane.f32.xlu0 %v1041
        %v1043 = vpop.xlane.xlu0 %1042
        %v1044 = vsel %vm892, %v1037, 0.0
        %1045 = vadd.xlane.f32.xlu0 %v1044
        %v1046 = vpop.xlane.xlu0 %1045
        %v1047 = vrcp.pop %v1040
        %v1048 = vrcp.pop %v1043
        %v1049 = vrcp.pop %v1046
        %v1050 = vmul.f32 %v1033, %v1047
        %v1051 = vmul.f32 %v1035, %v1048
        %v1052 = vmul.f32 %v1037, %v1049
        %1053 = vrot.lane.b32.xlu0 %v704, 16
        %v1054 = vpop.permute.xlu0 %1053
        %1055 = vrot.lane.b32.xlu0 %v707, 16
        %v1056 = vpop.permute.xlu0 %1055
        %v1059 = vsel %vm892, %v1050, 0
        %v1062 = vsel %vm892, %v1051, 0
        %v1065 = vsel %vm892, %v1052, 0
        %v1067 = vsel %vm603, %v1056, 0
        %1069 = vmatpush.msra.mxu0 0.0
        %1070 = vmatpush.msra.mxu0 0.0
        %1071 = vmatpush.msra.mxu0 0.0
        %1072 = vmatpush.msra.mxu0 0.0
        %1073 = vmatpush.msra.mxu0 0.0
        %1074 = vmatpush.msra.mxu0 0.0
        %1075 = vmatpush.msra.mxu0 0.0
        %1076 = vmatpush.msra.mxu0 0.0
        %1077 = vmatpush.msra.mxu0 0.0
        %1078 = vmatpush.msra.mxu0 0.0
        %1079 = vmatpush.msra.mxu0 0.0
        %1080 = vmatpush.msra.mxu0 0.0
        %1081 = vmatpush.msra.mxu0 0.0
        %1082 = vmatpush.msra.mxu0 0.0
        %1083 = vmatpush.msra.mxu0 %v1067
        %1084 = vmatpush.msra.mxu0 %v1054
        %1085 = vmatmul.f32.gmra.mxu0 %v1059
        %v1086 = vpop.f32.mrf.mxu0
        %v1087 = vadd.f32 0.0, %v1086
        %1088 = vmatmul.f32.gmra.mxu0 %v1062
        %v1089 = vpop.f32.mrf.mxu0
        %v1090 = vadd.f32 0.0, %v1089
        %1091 = vmatmul.f32.gmra.mxu0 %v1065
        %v1092 = vpop.f32.mrf.mxu0
        %v1093 = vadd.f32 0.0, %v1092
        %1094 = vdwg.mxu0
        %v1097 = vrot.slane %v963, 4
        %v1098 = vrot.slane %v966, 4
        %v1099 = vsel %vm603, %v1097, %v1098
        %1100 = vrot.lane.b32.xlu0 %v1099, 16
        %v1101 = vpop.permute.xlu0 %1100
        %1102 = vrot.lane.b32.xlu0 %v1098, 16
        %v1103 = vpop.permute.xlu0 %1102
        %1108 = vrot.lane.b32.xlu0 %v1087, 32
        %v1109 = vpop.permute.xlu0 %1108
        %1110 = vrot.lane.b32.xlu0 %v1090, 32
        %v1111 = vpop.permute.xlu0 %1110
        %v1115 = vrot.slane %v1090, 4
        %v1116 = vrot.slane %v1093, 4
        %v1117 = vsel %vm603, %v1115, %v1116
        %1118 = vrot.lane.b32.xlu0 %v1117, 48
        %v1119 = vpop.permute.xlu0 %1118
        %1120 = vrot.lane.b32.xlu0 %v1116, 48
        %v1121 = vpop.permute.xlu0 %1120
        %v1124 = vsel %vm848, %v960, %v1101
        %v1125 = vsel %vm848, %v963, %v1103
        %v1126 = vsel %vm628, %v1124, %v1109
        %v1127 = vsel %vm628, %v1125, %v1111
        %vm1128 = vcmask 392192
        %v1129 = vsel %vm1128, %v1126, %v1119
        %v1130 = vsel %vm1128, %v1127, %v1121
        %v1131 = vld [vmem:[%s10] sm:$0xf]
        %v1132 = vperm.slane %v1131, 3
        %v1133 = vmul.f32 %v704, %v1132
        %v1134 = vmul.f32 %v707, %v1132
        %vm1135 = vcmask 1040384
        %v1136 = vrot.slane %v704, 7
        %v1137 = vrot.slane %v707, 7
        %v1138 = vsel %vm1135, %v1136, %v1137
        %v1141 = vsel %vm1135, 0.0, %v1136
        %v1142 = vperm.slane %v1131, 2
        %v1143 = vmul.f32 %v1141, %v1142
        %v1144 = vmul.f32 %v1138, %v1142
        %v1145 = vadd.f32 %v1133, %v1143
        %v1146 = vadd.f32 %v1134, %v1144
        %vm1147 = vcmask 1041408
        %v1148 = vrot.slane %v704, 6
        %v1149 = vrot.slane %v707, 6
        %v1150 = vsel %vm1147, %v1148, %v1149
        %v1153 = vsel %vm1147, 0.0, %v1148
        %v1154 = vperm.slane %v1131, 1
        %v1155 = vmul.f32 %v1153, %v1154
        %v1156 = vmul.f32 %v1150, %v1154
        %v1157 = vadd.f32 %v1145, %v1155
        %v1158 = vadd.f32 %v1146, %v1156
        %vm1159 = vcmask 1042432
        %v1160 = vrot.slane %v704, 5
        %v1161 = vrot.slane %v707, 5
        %v1162 = vsel %vm1159, %v1160, %v1161
        %v1165 = vsel %vm1159, 0.0, %v1160
        %v1166 = vperm.slane %v1131, 0
        %v1167 = vmul.f32 %v1165, %v1166
        %v1168 = vmul.f32 %v1162, %v1166
        %v1169 = vadd.f32 %v1157, %v1167
        %v1170 = vadd.f32 %v1158, %v1168
        %v1171 = vperm.slane %v625, 2
        %v1172 = vadd.f32 %v1169, %v1171
        %v1173 = vadd.f32 %v1170, %v1171
        %v1174 = vxor.u32 %v1172, 2147483648
        %v1175 = vxor.u32 %v1173, 2147483648
        %v1176 = vmul.f32 %v1174, 1.442695
        %v1177 = vpow.pop %v1176
        %v1178 = vmul.f32 %v1175, 1.442695
        %v1179 = vpow.pop %v1178
        %v1180 = vadd.f32 %v1177, 1.0
        %v1181 = vadd.f32 %v1179, 1.0
        %v1182 = vrcp.pop %v1180
        %v1183 = vmul.f32 %v1180, %v1182
        %v1184 = vsub.f32 1.0, %v1183
        %v1185 = vmul.f32 %v1182, %v1184
        %v1186 = vadd.f32 %v1182, %v1185
        %vm1187 = vweird.f32 %v1180
        %vm1188 = vweird.f32 %v1182
        %vm1189 = vmor %vm1187, %vm1188
        %v1190 = vsel %vm1189, %v1182, %v1186
        %v1191 = vand.u32 2147483647, %v1180
        %vm1192 = vcmp.eq.f32.partialorder %v1191, 8.507059e+37
        %v1193 = vand.u32 %v1180, 2147483648
        %v1194 = vor.u32 1.1754944e-38, %v1193
        %v1195 = vsel %vm1192, %v1194, %v1190
        %v1196 = vmul.f32 1.0, %v1195
        %v1197 = vrcp.pop %v1181
        %v1198 = vmul.f32 %v1181, %v1197
        %v1199 = vsub.f32 1.0, %v1198
        %v1200 = vmul.f32 %v1197, %v1199
        %v1201 = vadd.f32 %v1197, %v1200
        %vm1202 = vweird.f32 %v1181
        %vm1203 = vweird.f32 %v1197
        %vm1204 = vmor %vm1202, %vm1203
        %v1205 = vsel %vm1204, %v1197, %v1201
        %v1206 = vand.u32 2147483647, %v1181
        %vm1207 = vcmp.eq.f32.partialorder %v1206, 8.507059e+37
        %v1208 = vand.u32 %v1181, 2147483648
        %v1209 = vor.u32 1.1754944e-38, %v1208
        %v1210 = vsel %vm1207, %v1209, %v1205
        %v1211 = vmul.f32 1.0, %v1210
        %v1212 = vmul.f32 %v1172, %v1196
        %v1213 = vmul.f32 %v1173, %v1211
        %v1214 = vld [vmem:[%s11] sm:$0xff]
        %v1215 = vld [vmem:[%s11 + $0x8] sm:$0xff]
        %v1216 = vld [vmem:[%s11 + $0x10] sm:$0xff]
        %v1217 = vld [vmem:[%s11 + $0x18] sm:$0xff]
        %v1218 = vld [vmem:[%s11 + $0x20] sm:$0xff]
        %v1219 = vld [vmem:[%s11 + $0x28] sm:$0xff]
        %v1220 = vld [vmem:[%s11 + $0x30] sm:$0xff]
        %v1221 = vld [vmem:[%s11 + $0x38] sm:$0xff]
        %v1223 = vsel %vm734, %v1212, 0
        %v1226 = vsel %vm734, %v1213, 0
        %1228 = vmatpush.msra.mxu0 0.0
        %1229 = vmatpush.msra.mxu0 0.0
        %1230 = vmatpush.msra.mxu0 0.0
        %1231 = vmatpush.msra.mxu0 0.0
        %1232 = vmatpush.msra.mxu0 0.0
        %1233 = vmatpush.msra.mxu0 0.0
        %1234 = vmatpush.msra.mxu0 0.0
        %1235 = vmatpush.msra.mxu0 0.0
        %1236 = vmatpush.msra.mxu0 %v1221
        %1237 = vmatpush.msra.mxu0 %v1220
        %1238 = vmatpush.msra.mxu0 %v1219
        %1239 = vmatpush.msra.mxu0 %v1218
        %1240 = vmatpush.msra.mxu0 %v1217
        %1241 = vmatpush.msra.mxu0 %v1216
        %1242 = vmatpush.msra.mxu0 %v1215
        %1243 = vmatpush.msra.mxu0 %v1214
        %1244 = vmatmul.f32.gmra.mxu0 %v1223
        %v1245 = vpop.f32.mrf.mxu0
        %v1246 = vadd.f32 0.0, %v1245
        %1247 = vmatmul.f32.gmra.mxu0 %v1226
        %v1248 = vpop.f32.mrf.mxu0
        %v1249 = vadd.f32 0.0, %v1248
        %1250 = vdwg.mxu0
        %v1251 = vld [vmem:[%s13] sm:$0xff]
        %v1252 = vperm.slane %v625, 3
        %vm1253 = vcmask 64512
        %v1255 = vsel %vm1253, %v1246, 0
        %v1258 = vsel %vm1253, %v1249, 0
        %1260 = vmatpush.msra.mxu0 0.0
        %1261 = vmatpush.msra.mxu0 0.0
        %1262 = vmatpush.msra.mxu0 0.0
        %1263 = vmatpush.msra.mxu0 0.0
        %1264 = vmatpush.msra.mxu0 0.0
        %1265 = vmatpush.msra.mxu0 0.0
        %1266 = vmatpush.msra.mxu0 0.0
        %1267 = vmatpush.msra.mxu0 0.0
        %1268 = vmatpush.msra.mxu0 0.0
        %1269 = vmatpush.msra.mxu0 0.0
        %1270 = vmatpush.msra.mxu0 0.0
        %1271 = vmatpush.msra.mxu0 0.0
        %1272 = vmatpush.msra.mxu0 0.0
        %1273 = vmatpush.msra.mxu0 0.0
        %1274 = vmatpush.msra.mxu0 0.0
        %1275 = vmatpush.msra.mxu0 %v1251
        %1276 = vmatmul.f32.gmra.mxu0 %v1255
        %v1277 = vpop.f32.mrf.mxu0
        %v1278 = vadd.f32 %v1252, %v1277
        %1279 = vmatmul.f32.gmra.mxu0 %v1258
        %v1280 = vpop.f32.mrf.mxu0
        %v1281 = vadd.f32 %v1252, %v1280
        %1282 = vdwg.mxu0
        %v1283 = vmax.f32 %v1278, 0.0
        %v1284 = vmax.f32 %v1281, 0.0
        %vm1285 = vcmp.ne.f32.partialorder %v1278, %v1278
        %vm1286 = vcmp.ne.f32.partialorder %v1281, %v1281
        %v1287 = vadd.f32 %v1278, 0.0
        %v1288 = vadd.f32 %v1281, 0.0
        %v1289 = vand.u32 2147483647, %v1278
        %v1290 = vand.u32 2147483647, %v1281
        %v1291 = vsub.f32 0.0, %v1289
        %v1292 = vsub.f32 0.0, %v1290
        %v1293 = vmul.f32 %v1291, 1.442695
        %v1294 = vpow.pop %v1293
        %v1295 = vmul.f32 %v1292, 1.442695
        %v1296 = vpow.pop %v1295
        %v1297 = vadd.f32 %v1294, 1.0
        %v1298 = vlog2.pop %v1297
        %v1299 = vmul.f32 %v1298, 0.6931472
        %v1300 = vmul.f32 -0.5, %v1294
        %v1301 = vadd.f32 %v1300, 1.0
        %v1302 = vmul.f32 %v1301, %v1294
        %v1303 = vand.u32 2147483647, %v1294
        %vm1304 = vcmp.lt.f32.partialorder %v1303, 0.0004427343
        %v1305 = vsel %vm1304, %v1302, %v1299
        %v1306 = vadd.f32 %v1296, 1.0
        %v1307 = vlog2.pop %v1306
        %v1308 = vmul.f32 %v1307, 0.6931472
        %v1309 = vmul.f32 -0.5, %v1296
        %v1310 = vadd.f32 %v1309, 1.0
        %v1311 = vmul.f32 %v1310, %v1296
        %v1312 = vand.u32 2147483647, %v1296
        %vm1313 = vcmp.lt.f32.partialorder %v1312, 0.0004427343
        %v1314 = vsel %vm1313, %v1311, %v1308
        %v1315 = vadd.f32 %v1283, %v1305
        %v1316 = vadd.f32 %v1284, %v1314
        %v1317 = vsel %vm1285, %v1287, %v1315
        %v1318 = vsel %vm1286, %v1288, %v1316
        %v1319 = vld [vmem:[%s12] sm:$0xff]
        %v1320 = vld [vmem:[%s12 + $0x8] sm:$0xff]
        %v1321 = vld [vmem:[%s12 + $0x10] sm:$0xff]
        %v1322 = vld [vmem:[%s12 + $0x18] sm:$0xff]
        %v1324 = vsel %vm734, %v1319, 0
        %v1327 = vsel %vm734, %v1320, 0
        %v1330 = vsel %vm734, %v1321, 0
        %v1333 = vsel %vm734, %v1322, 0
        %1335 = vmatpush.xpose.msra.mxu0 0.0
        %1336 = vmatpush.xpose.msra.mxu0 0.0
        %1337 = vmatpush.xpose.msra.mxu0 0.0
        %1338 = vmatpush.xpose.msra.mxu0 0.0
        %1339 = vmatpush.xpose.msra.mxu0 0.0
        %1340 = vmatpush.xpose.msra.mxu0 0.0
        %1341 = vmatpush.xpose.msra.mxu0 0.0
        %1342 = vmatpush.xpose.msra.mxu0 0.0
        %1343 = vmatpush.xpose.msra.mxu0 0.0
        %1344 = vmatpush.xpose.msra.mxu0 0.0
        %1345 = vmatpush.xpose.msra.mxu0 0.0
        %1346 = vmatpush.xpose.msra.mxu0 0.0
        %1347 = vmatpush.xpose.msra.mxu0 0.0
        %1348 = vmatpush.xpose.msra.mxu0 0.0
        %1349 = vmatpush.xpose.msra.mxu0 %v1226
        %1350 = vmatpush.xpose.msra.mxu0 %v1223
        %1351 = vmatmul.f32.gmra.mxu0 %v1324
        %v1352 = vpop.f32.mrf.mxu0
        %v1353 = vadd.f32 0.0, %v1352
        %1354 = vmatmul.f32.gmra.mxu0 %v1327
        %v1355 = vpop.f32.mrf.mxu0
        %v1356 = vadd.f32 0.0, %v1355
        %1357 = vmatmul.f32.gmra.mxu0 %v1330
        %v1358 = vpop.f32.mrf.mxu0
        %v1359 = vadd.f32 0.0, %v1358
        %1360 = vmatmul.f32.gmra.mxu0 %v1333
        %v1361 = vpop.f32.mrf.mxu0
        %v1362 = vadd.f32 0.0, %v1361
        %1363 = vdwg.mxu0
        %v1364 = vld [vmem:[%s14] sm:$0xff]
        %v1365 = vld [vmem:[%s14 + $0x8] sm:$0xff]
        %v1366 = vmul.f32 %v1364, 1.442695
        %v1367 = vpow.pop %v1366
        %v1368 = vmul.f32 %v1365, 1.442695
        %v1369 = vpow.pop %v1368
        %v1370 = vsub.f32 0.0, %v1367
        %v1371 = vsub.f32 0.0, %v1369
        %v1372 = vmul.f32 %v1317, %v1212
        %v1373 = vmul.f32 %v1318, %v1213
        %v1374 = vperm.slane %v1317, 0
        %v1375 = vmul.f32 %v1374, %v1370
        %v1376 = vmul.f32 %v1374, %v1371
        %v1377 = vmul.f32 %v1375, 1.442695
        %v1378 = vpow.pop %v1377
        %v1379 = vmul.f32 %v1376, 1.442695
        %v1380 = vpow.pop %v1379
        %v1381 = vperm.slane %v1317, 1
        %v1382 = vmul.f32 %v1381, %v1370
        %v1383 = vmul.f32 %v1381, %v1371
        %v1384 = vmul.f32 %v1382, 1.442695
        %v1385 = vpow.pop %v1384
        %v1386 = vmul.f32 %v1383, 1.442695
        %v1387 = vpow.pop %v1386
        %v1388 = vperm.slane %v1317, 2
        %v1389 = vmul.f32 %v1388, %v1370
        %v1390 = vmul.f32 %v1388, %v1371
        %v1391 = vmul.f32 %v1389, 1.442695
        %v1392 = vpow.pop %v1391
        %v1393 = vmul.f32 %v1390, 1.442695
        %v1394 = vpow.pop %v1393
        %v1395 = vperm.slane %v1317, 3
        %v1396 = vmul.f32 %v1395, %v1370
        %v1397 = vmul.f32 %v1395, %v1371
        %v1398 = vmul.f32 %v1396, 1.442695
        %v1399 = vpow.pop %v1398
        %v1400 = vmul.f32 %v1397, 1.442695
        %v1401 = vpow.pop %v1400
        %v1402 = vperm.slane %v1317, 4
        %v1403 = vmul.f32 %v1402, %v1370
        %v1404 = vmul.f32 %v1402, %v1371
        %v1405 = vmul.f32 %v1403, 1.442695
        %v1406 = vpow.pop %v1405
        %v1407 = vmul.f32 %v1404, 1.442695
        %v1408 = vpow.pop %v1407
        %v1409 = vperm.slane %v1317, 5
        %v1410 = vmul.f32 %v1409, %v1370
        %v1411 = vmul.f32 %v1409, %v1371
        %v1412 = vmul.f32 %v1410, 1.442695
        %v1413 = vpow.pop %v1412
        %v1414 = vmul.f32 %v1411, 1.442695
        %v1415 = vpow.pop %v1414
        %v1416 = vperm.slane %v1317, 6
        %v1417 = vmul.f32 %v1416, %v1370
        %v1418 = vmul.f32 %v1416, %v1371
        %v1419 = vmul.f32 %v1417, 1.442695
        %v1420 = vpow.pop %v1419
        %v1421 = vmul.f32 %v1418, 1.442695
        %v1422 = vpow.pop %v1421
        %v1423 = vperm.slane %v1317, 7
        %v1424 = vmul.f32 %v1423, %v1370
        %v1425 = vmul.f32 %v1423, %v1371
        %v1426 = vmul.f32 %v1424, 1.442695
        %v1427 = vpow.pop %v1426
        %v1428 = vmul.f32 %v1425, 1.442695
        %v1429 = vpow.pop %v1428
        %v1430 = vperm.slane %v1318, 0
        %v1431 = vmul.f32 %v1430, %v1370
        %v1432 = vmul.f32 %v1430, %v1371
        %v1433 = vmul.f32 %v1431, 1.442695
        %v1434 = vpow.pop %v1433
        %v1435 = vmul.f32 %v1432, 1.442695
        %v1436 = vpow.pop %v1435
        %v1437 = vperm.slane %v1318, 1
        %v1438 = vmul.f32 %v1437, %v1370
        %v1439 = vmul.f32 %v1437, %v1371
        %v1440 = vmul.f32 %v1438, 1.442695
        %v1441 = vpow.pop %v1440
        %v1442 = vmul.f32 %v1439, 1.442695
        %v1443 = vpow.pop %v1442
        %v1444 = vperm.slane %v1318, 2
        %v1445 = vmul.f32 %v1444, %v1370
        %v1446 = vmul.f32 %v1444, %v1371
        %v1447 = vmul.f32 %v1445, 1.442695
        %v1448 = vpow.pop %v1447
        %v1449 = vmul.f32 %v1446, 1.442695
        %v1450 = vpow.pop %v1449
        %v1451 = vperm.slane %v1318, 3
        %v1452 = vmul.f32 %v1451, %v1370
        %v1453 = vmul.f32 %v1451, %v1371
        %v1454 = vmul.f32 %v1452, 1.442695
        %v1455 = vpow.pop %v1454
        %v1456 = vmul.f32 %v1453, 1.442695
        %v1457 = vpow.pop %v1456
        %v1458 = vperm.slane %v1372, 0
        %1460 = vset.pattern.permute.xlu0 0
        %1461 = vperm.xlu0 %1460, %v1353
        %v1462 = vpop.permute.xlu0 %1461
        %1465 = vset.pattern.permute.xlu0 0
        %1466 = vperm.xlu0 %1465, %v1356
        %v1467 = vpop.permute.xlu0 %1466
        %v1469 = vmul.f32 %v1458, %v1462
        %v1470 = vmul.f32 %v1458, %v1467
        %v1471 = vperm.slane %v1372, 1
        %1472 = vset.pattern.permute.xlu0 1
        %1473 = vperm.xlu0 %1472, %v1353
        %v1474 = vpop.permute.xlu0 %1473
        %1476 = vset.pattern.permute.xlu0 1
        %1477 = vperm.xlu0 %1476, %v1356
        %v1478 = vpop.permute.xlu0 %1477
        %v1480 = vmul.f32 %v1471, %v1474
        %v1481 = vmul.f32 %v1471, %v1478
        %v1482 = vperm.slane %v1372, 2
        %1483 = vset.pattern.permute.xlu0 2
        %1484 = vperm.xlu0 %1483, %v1353
        %v1485 = vpop.permute.xlu0 %1484
        %1487 = vset.pattern.permute.xlu0 2
        %1488 = vperm.xlu0 %1487, %v1356
        %v1489 = vpop.permute.xlu0 %1488
        %v1491 = vmul.f32 %v1482, %v1485
        %v1492 = vmul.f32 %v1482, %v1489
        %v1493 = vperm.slane %v1372, 3
        %1494 = vset.pattern.permute.xlu0 3
        %1495 = vperm.xlu0 %1494, %v1353
        %v1496 = vpop.permute.xlu0 %1495
        %1498 = vset.pattern.permute.xlu0 3
        %1499 = vperm.xlu0 %1498, %v1356
        %v1500 = vpop.permute.xlu0 %1499
        %v1502 = vmul.f32 %v1493, %v1496
        %v1503 = vmul.f32 %v1493, %v1500
        %v1504 = vperm.slane %v1372, 4
        %1505 = vset.pattern.permute.xlu0 4
        %1506 = vperm.xlu0 %1505, %v1353
        %v1507 = vpop.permute.xlu0 %1506
        %1509 = vset.pattern.permute.xlu0 4
        %1510 = vperm.xlu0 %1509, %v1356
        %v1511 = vpop.permute.xlu0 %1510
        %v1513 = vmul.f32 %v1504, %v1507
        %v1514 = vmul.f32 %v1504, %v1511
        %v1515 = vperm.slane %v1372, 5
        %1516 = vset.pattern.permute.xlu0 5
        %1517 = vperm.xlu0 %1516, %v1353
        %v1518 = vpop.permute.xlu0 %1517
        %1520 = vset.pattern.permute.xlu0 5
        %1521 = vperm.xlu0 %1520, %v1356
        %v1522 = vpop.permute.xlu0 %1521
        %v1524 = vmul.f32 %v1515, %v1518
        %v1525 = vmul.f32 %v1515, %v1522
        %v1526 = vperm.slane %v1372, 6
        %1527 = vset.pattern.permute.xlu0 6
        %1528 = vperm.xlu0 %1527, %v1353
        %v1529 = vpop.permute.xlu0 %1528
        %1531 = vset.pattern.permute.xlu0 6
        %1532 = vperm.xlu0 %1531, %v1356
        %v1533 = vpop.permute.xlu0 %1532
        %v1535 = vmul.f32 %v1526, %v1529
        %v1536 = vmul.f32 %v1526, %v1533
        %v1537 = vperm.slane %v1372, 7
        %1538 = vset.pattern.permute.xlu0 7
        %1539 = vperm.xlu0 %1538, %v1353
        %v1540 = vpop.permute.xlu0 %1539
        %1542 = vset.pattern.permute.xlu0 7
        %1543 = vperm.xlu0 %1542, %v1356
        %v1544 = vpop.permute.xlu0 %1543
        %v1546 = vmul.f32 %v1537, %v1540
        %v1547 = vmul.f32 %v1537, %v1544
        %v1548 = vperm.slane %v1373, 0
        %1549 = vset.pattern.permute.xlu0 8
        %1550 = vperm.xlu0 %1549, %v1353
        %v1551 = vpop.permute.xlu0 %1550
        %1553 = vset.pattern.permute.xlu0 8
        %1554 = vperm.xlu0 %1553, %v1356
        %v1555 = vpop.permute.xlu0 %1554
        %v1557 = vmul.f32 %v1548, %v1551
        %v1558 = vmul.f32 %v1548, %v1555
        %v1559 = vperm.slane %v1373, 1
        %1560 = vset.pattern.permute.xlu0 9
        %1561 = vperm.xlu0 %1560, %v1353
        %v1562 = vpop.permute.xlu0 %1561
        %1564 = vset.pattern.permute.xlu0 9
        %1565 = vperm.xlu0 %1564, %v1356
        %v1566 = vpop.permute.xlu0 %1565
        %v1568 = vmul.f32 %v1559, %v1562
        %v1569 = vmul.f32 %v1559, %v1566
        %v1570 = vperm.slane %v1373, 2
        %1571 = vset.pattern.permute.xlu0 10
        %1572 = vperm.xlu0 %1571, %v1353
        %v1573 = vpop.permute.xlu0 %1572
        %1575 = vset.pattern.permute.xlu0 10
        %1576 = vperm.xlu0 %1575, %v1356
        %v1577 = vpop.permute.xlu0 %1576
        %v1579 = vmul.f32 %v1570, %v1573
        %v1580 = vmul.f32 %v1570, %v1577
        %v1581 = vperm.slane %v1373, 3
        %1582 = vset.pattern.permute.xlu0 11
        %1583 = vperm.xlu0 %1582, %v1353
        %v1584 = vpop.permute.xlu0 %1583
        %1586 = vset.pattern.permute.xlu0 11
        %1587 = vperm.xlu0 %1586, %v1356
        %v1588 = vpop.permute.xlu0 %1587
        %v1590 = vmul.f32 %v1581, %v1584
        %v1591 = vmul.f32 %v1581, %v1588
        %v1592 = vmul.f32 %v1378, 0.0
        %v1593 = vmul.f32 %v1380, 0.0
        %v1594 = vadd.f32 %v1592, %v1469
        %v1595 = vadd.f32 %v1593, %v1470
        %1597 = vset.pattern.permute.xlu0 0
        %1598 = vperm.xlu0 %1597, %v1359
        %v1599 = vpop.permute.xlu0 %1598
        %1602 = vset.pattern.permute.xlu0 0
        %1603 = vperm.xlu0 %1602, %v1362
        %v1604 = vpop.permute.xlu0 %1603
        %v1606 = vmul.f32 %v1594, %v1599
        %v1607 = vmul.f32 %v1595, %v1604
        %v1608 = vsel %vm734, %v1606, 0.0
        %v1609 = vsel %vm734, %v1607, 0.0
        %v1610 = vadd.f32 %v1608, %v1609
        %v1611 = vrot.slane %v1610, 4
        %v1612 = vadd.f32 %v1610, %v1611
        %v1613 = vrot.slane %v1612, 2
        %v1614 = vadd.f32 %v1612, %v1613
        %v1615 = vrot.slane %v1614, 1
        %v1616 = vadd.f32 %v1614, %v1615
        %v1617 = vmul.f32 %v1594, %v1385
        %v1618 = vmul.f32 %v1595, %v1387
        %v1619 = vadd.f32 %v1617, %v1480
        %v1620 = vadd.f32 %v1618, %v1481
        %1621 = vset.pattern.permute.xlu0 1
        %1622 = vperm.xlu0 %1621, %v1359
        %v1623 = vpop.permute.xlu0 %1622
        %1625 = vset.pattern.permute.xlu0 1
        %1626 = vperm.xlu0 %1625, %v1362
        %v1627 = vpop.permute.xlu0 %1626
        %v1629 = vmul.f32 %v1619, %v1623
        %v1630 = vmul.f32 %v1620, %v1627
        %v1631 = vsel %vm734, %v1629, 0.0
        %v1632 = vsel %vm734, %v1630, 0.0
        %v1633 = vadd.f32 %v1631, %v1632
        %v1634 = vrot.slane %v1633, 4
        %v1635 = vadd.f32 %v1633, %v1634
        %v1636 = vrot.slane %v1635, 2
        %v1637 = vadd.f32 %v1635, %v1636
        %v1638 = vrot.slane %v1637, 1
        %v1639 = vadd.f32 %v1637, %v1638
        %v1640 = vmul.f32 %v1619, %v1392
        %v1641 = vmul.f32 %v1620, %v1394
        %v1642 = vadd.f32 %v1640, %v1491
        %v1643 = vadd.f32 %v1641, %v1492
        %1644 = vset.pattern.permute.xlu0 2
        %1645 = vperm.xlu0 %1644, %v1359
        %v1646 = vpop.permute.xlu0 %1645
        %1648 = vset.pattern.permute.xlu0 2
        %1649 = vperm.xlu0 %1648, %v1362
        %v1650 = vpop.permute.xlu0 %1649
        %v1652 = vmul.f32 %v1642, %v1646
        %v1653 = vmul.f32 %v1643, %v1650
        %v1654 = vsel %vm734, %v1652, 0.0
        %v1655 = vsel %vm734, %v1653, 0.0
        %v1656 = vadd.f32 %v1654, %v1655
        %v1657 = vrot.slane %v1656, 4
        %v1658 = vadd.f32 %v1656, %v1657
        %v1659 = vrot.slane %v1658, 2
        %v1660 = vadd.f32 %v1658, %v1659
        %v1661 = vrot.slane %v1660, 1
        %v1662 = vadd.f32 %v1660, %v1661
        %v1663 = vmul.f32 %v1642, %v1399
        %v1664 = vmul.f32 %v1643, %v1401
        %v1665 = vadd.f32 %v1663, %v1502
        %v1666 = vadd.f32 %v1664, %v1503
        %1667 = vset.pattern.permute.xlu0 3
        %1668 = vperm.xlu0 %1667, %v1359
        %v1669 = vpop.permute.xlu0 %1668
        %1671 = vset.pattern.permute.xlu0 3
        %1672 = vperm.xlu0 %1671, %v1362
        %v1673 = vpop.permute.xlu0 %1672
        %v1675 = vmul.f32 %v1665, %v1669
        %v1676 = vmul.f32 %v1666, %v1673
        %v1677 = vsel %vm734, %v1675, 0.0
        %v1678 = vsel %vm734, %v1676, 0.0
        %v1679 = vadd.f32 %v1677, %v1678
        %v1680 = vrot.slane %v1679, 4
        %v1681 = vadd.f32 %v1679, %v1680
        %v1682 = vrot.slane %v1681, 2
        %v1683 = vadd.f32 %v1681, %v1682
        %v1684 = vrot.slane %v1683, 1
        %v1685 = vadd.f32 %v1683, %v1684
        %v1686 = vmul.f32 %v1665, %v1406
        %v1687 = vmul.f32 %v1666, %v1408
        %v1688 = vadd.f32 %v1686, %v1513
        %v1689 = vadd.f32 %v1687, %v1514
        %1690 = vset.pattern.permute.xlu0 4
        %1691 = vperm.xlu0 %1690, %v1359
        %v1692 = vpop.permute.xlu0 %1691
        %1694 = vset.pattern.permute.xlu0 4
        %1695 = vperm.xlu0 %1694, %v1362
        %v1696 = vpop.permute.xlu0 %1695
        %v1698 = vmul.f32 %v1688, %v1692
        %v1699 = vmul.f32 %v1689, %v1696
        %v1700 = vsel %vm734, %v1698, 0.0
        %v1701 = vsel %vm734, %v1699, 0.0
        %v1702 = vadd.f32 %v1700, %v1701
        %v1703 = vrot.slane %v1702, 4
        %v1704 = vadd.f32 %v1702, %v1703
        %v1705 = vrot.slane %v1704, 2
        %v1706 = vadd.f32 %v1704, %v1705
        %v1707 = vrot.slane %v1706, 1
        %v1708 = vadd.f32 %v1706, %v1707
        %v1709 = vmul.f32 %v1688, %v1413
        %v1710 = vmul.f32 %v1689, %v1415
        %v1711 = vadd.f32 %v1709, %v1524
        %v1712 = vadd.f32 %v1710, %v1525
        %1713 = vset.pattern.permute.xlu0 5
        %1714 = vperm.xlu0 %1713, %v1359
        %v1715 = vpop.permute.xlu0 %1714
        %1717 = vset.pattern.permute.xlu0 5
        %1718 = vperm.xlu0 %1717, %v1362
        %v1719 = vpop.permute.xlu0 %1718
        %v1721 = vmul.f32 %v1711, %v1715
        %v1722 = vmul.f32 %v1712, %v1719
        %v1723 = vsel %vm734, %v1721, 0.0
        %v1724 = vsel %vm734, %v1722, 0.0
        %v1725 = vadd.f32 %v1723, %v1724
        %v1726 = vrot.slane %v1725, 4
        %v1727 = vadd.f32 %v1725, %v1726
        %v1728 = vrot.slane %v1727, 2
        %v1729 = vadd.f32 %v1727, %v1728
        %v1730 = vrot.slane %v1729, 1
        %v1731 = vadd.f32 %v1729, %v1730
        %v1732 = vmul.f32 %v1711, %v1420
        %v1733 = vmul.f32 %v1712, %v1422
        %v1734 = vadd.f32 %v1732, %v1535
        %v1735 = vadd.f32 %v1733, %v1536
        %1736 = vset.pattern.permute.xlu0 6
        %1737 = vperm.xlu0 %1736, %v1359
        %v1738 = vpop.permute.xlu0 %1737
        %1740 = vset.pattern.permute.xlu0 6
        %1741 = vperm.xlu0 %1740, %v1362
        %v1742 = vpop.permute.xlu0 %1741
        %v1744 = vmul.f32 %v1734, %v1738
        %v1745 = vmul.f32 %v1735, %v1742
        %v1746 = vsel %vm734, %v1744, 0.0
        %v1747 = vsel %vm734, %v1745, 0.0
        %v1748 = vadd.f32 %v1746, %v1747
        %v1749 = vrot.slane %v1748, 4
        %v1750 = vadd.f32 %v1748, %v1749
        %v1751 = vrot.slane %v1750, 2
        %v1752 = vadd.f32 %v1750, %v1751
        %v1753 = vrot.slane %v1752, 1
        %v1754 = vadd.f32 %v1752, %v1753
        %v1755 = vmul.f32 %v1734, %v1427
        %v1756 = vmul.f32 %v1735, %v1429
        %v1757 = vadd.f32 %v1755, %v1546
        %v1758 = vadd.f32 %v1756, %v1547
        %1759 = vset.pattern.permute.xlu0 7
        %1760 = vperm.xlu0 %1759, %v1359
        %v1761 = vpop.permute.xlu0 %1760
        %1763 = vset.pattern.permute.xlu0 7
        %1764 = vperm.xlu0 %1763, %v1362
        %v1765 = vpop.permute.xlu0 %1764
        %v1767 = vmul.f32 %v1757, %v1761
        %v1768 = vmul.f32 %v1758, %v1765
        %v1769 = vsel %vm734, %v1767, 0.0
        %v1770 = vsel %vm734, %v1768, 0.0
        %v1771 = vadd.f32 %v1769, %v1770
        %v1772 = vrot.slane %v1771, 4
        %v1773 = vadd.f32 %v1771, %v1772
        %v1774 = vrot.slane %v1773, 2
        %v1775 = vadd.f32 %v1773, %v1774
        %v1776 = vrot.slane %v1775, 1
        %v1777 = vadd.f32 %v1775, %v1776
        %v1778 = vmul.f32 %v1757, %v1434
        %v1779 = vmul.f32 %v1758, %v1436
        %v1780 = vadd.f32 %v1778, %v1557
        %v1781 = vadd.f32 %v1779, %v1558
        %1782 = vset.pattern.permute.xlu0 8
        %1783 = vperm.xlu0 %1782, %v1359
        %v1784 = vpop.permute.xlu0 %1783
        %1786 = vset.pattern.permute.xlu0 8
        %1787 = vperm.xlu0 %1786, %v1362
        %v1788 = vpop.permute.xlu0 %1787
        %v1790 = vmul.f32 %v1780, %v1784
        %v1791 = vmul.f32 %v1781, %v1788
        %v1792 = vsel %vm734, %v1790, 0.0
        %v1793 = vsel %vm734, %v1791, 0.0
        %v1794 = vadd.f32 %v1792, %v1793
        %v1795 = vrot.slane %v1794, 4
        %v1796 = vadd.f32 %v1794, %v1795
        %v1797 = vrot.slane %v1796, 2
        %v1798 = vadd.f32 %v1796, %v1797
        %v1799 = vrot.slane %v1798, 1
        %v1800 = vadd.f32 %v1798, %v1799
        %v1801 = vmul.f32 %v1780, %v1441
        %v1802 = vmul.f32 %v1781, %v1443
        %v1803 = vadd.f32 %v1801, %v1568
        %v1804 = vadd.f32 %v1802, %v1569
        %1805 = vset.pattern.permute.xlu0 9
        %1806 = vperm.xlu0 %1805, %v1359
        %v1807 = vpop.permute.xlu0 %1806
        %1809 = vset.pattern.permute.xlu0 9
        %1810 = vperm.xlu0 %1809, %v1362
        %v1811 = vpop.permute.xlu0 %1810
        %v1813 = vmul.f32 %v1803, %v1807
        %v1814 = vmul.f32 %v1804, %v1811
        %v1815 = vsel %vm734, %v1813, 0.0
        %v1816 = vsel %vm734, %v1814, 0.0
        %v1817 = vadd.f32 %v1815, %v1816
        %v1818 = vrot.slane %v1817, 4
        %v1819 = vadd.f32 %v1817, %v1818
        %v1820 = vrot.slane %v1819, 2
        %v1821 = vadd.f32 %v1819, %v1820
        %v1822 = vrot.slane %v1821, 1
        %v1823 = vadd.f32 %v1821, %v1822
        %v1824 = vmul.f32 %v1803, %v1448
        %v1825 = vmul.f32 %v1804, %v1450
        %v1826 = vadd.f32 %v1824, %v1579
        %v1827 = vadd.f32 %v1825, %v1580
        %1828 = vset.pattern.permute.xlu0 10
        %1829 = vperm.xlu0 %1828, %v1359
        %v1830 = vpop.permute.xlu0 %1829
        %1832 = vset.pattern.permute.xlu0 10
        %1833 = vperm.xlu0 %1832, %v1362
        %v1834 = vpop.permute.xlu0 %1833
        %v1836 = vmul.f32 %v1826, %v1830
        %v1837 = vmul.f32 %v1827, %v1834
        %v1838 = vsel %vm734, %v1836, 0.0
        %v1839 = vsel %vm734, %v1837, 0.0
        %v1840 = vadd.f32 %v1838, %v1839
        %v1841 = vrot.slane %v1840, 4
        %v1842 = vadd.f32 %v1840, %v1841
        %v1843 = vrot.slane %v1842, 2
        %v1844 = vadd.f32 %v1842, %v1843
        %v1845 = vrot.slane %v1844, 1
        %v1846 = vadd.f32 %v1844, %v1845
        %v1847 = vmul.f32 %v1826, %v1455
        %v1848 = vmul.f32 %v1827, %v1457
        %v1849 = vadd.f32 %v1847, %v1590
        %v1850 = vadd.f32 %v1848, %v1591
        %1851 = vset.pattern.permute.xlu0 11
        %1852 = vperm.xlu0 %1851, %v1359
        %v1853 = vpop.permute.xlu0 %1852
        %1855 = vset.pattern.permute.xlu0 11
        %1856 = vperm.xlu0 %1855, %v1362
        %v1857 = vpop.permute.xlu0 %1856
        %v1859 = vmul.f32 %v1849, %v1853
        %v1860 = vmul.f32 %v1850, %v1857
        %v1861 = vsel %vm734, %v1859, 0.0
        %v1862 = vsel %vm734, %v1860, 0.0
        %v1863 = vadd.f32 %v1861, %v1862
        %v1864 = vrot.slane %v1863, 4
        %v1865 = vadd.f32 %v1863, %v1864
        %v1866 = vrot.slane %v1865, 2
        %v1867 = vadd.f32 %v1865, %v1866
        %v1868 = vrot.slane %v1867, 1
        %v1869 = vadd.f32 %v1867, %v1868
        %v1870 = vsel %vm1135, %v1616, %v1639
        %v1871 = vsel %vm1147, %v1870, %v1662
        %v1872 = vsel %vm1159, %v1871, %v1685
        %v1873 = vsel %vm603, %v1872, %v1708
        %vm1874 = vcmask 1044480
        %v1875 = vsel %vm1874, %v1873, %v1731
        %vm1876 = vcmask 1045504
        %v1877 = vsel %vm1876, %v1875, %v1754
        %vm1878 = vcmask 1046528
        %v1879 = vsel %vm1878, %v1877, %v1777
        %v1880 = vsel %vm1135, %v1800, %v1823
        %v1881 = vsel %vm1147, %v1880, %v1846
        %v1882 = vsel %vm1159, %v1881, %v1869
        %v1883 = vperm.slane %v625, 4
        %v1884 = vmul.f32 %v1883, %v1212
        %v1885 = vmul.f32 %v1883, %v1213
        %v1886 = vadd.f32 %v1879, %v1884
        %v1887 = vadd.f32 %v1882, %v1885
        %v1888 = vxor.u32 %v727, 2147483648
        %v1889 = vxor.u32 %v730, 2147483648
        %v1890 = vmul.f32 %v1888, 1.442695
        %v1891 = vpow.pop %v1890
        %v1892 = vmul.f32 %v1889, 1.442695
        %v1893 = vpow.pop %v1892
        %v1894 = vadd.f32 %v1891, 1.0
        %v1895 = vadd.f32 %v1893, 1.0
        %v1896 = vrcp.pop %v1894
        %v1897 = vmul.f32 %v1894, %v1896
        %v1898 = vsub.f32 1.0, %v1897
        %v1899 = vmul.f32 %v1896, %v1898
        %v1900 = vadd.f32 %v1896, %v1899
        %vm1901 = vweird.f32 %v1894
        %vm1902 = vweird.f32 %v1896
        %vm1903 = vmor %vm1901, %vm1902
        %v1904 = vsel %vm1903, %v1896, %v1900
        %v1905 = vand.u32 2147483647, %v1894
        %vm1906 = vcmp.eq.f32.partialorder %v1905, 8.507059e+37
        %v1907 = vand.u32 %v1894, 2147483648
        %v1908 = vor.u32 1.1754944e-38, %v1907
        %v1909 = vsel %vm1906, %v1908, %v1904
        %v1910 = vmul.f32 1.0, %v1909
        %v1911 = vrcp.pop %v1895
        %v1912 = vmul.f32 %v1895, %v1911
        %v1913 = vsub.f32 1.0, %v1912
        %v1914 = vmul.f32 %v1911, %v1913
        %v1915 = vadd.f32 %v1911, %v1914
        %vm1916 = vweird.f32 %v1895
        %vm1917 = vweird.f32 %v1911
        %vm1918 = vmor %vm1916, %vm1917
        %v1919 = vsel %vm1918, %v1911, %v1915
        %v1920 = vand.u32 2147483647, %v1895
        %vm1921 = vcmp.eq.f32.partialorder %v1920, 8.507059e+37
        %v1922 = vand.u32 %v1895, 2147483648
        %v1923 = vor.u32 1.1754944e-38, %v1922
        %v1924 = vsel %vm1921, %v1923, %v1919
        %v1925 = vmul.f32 1.0, %v1924
        %v1926 = vmul.f32 %v727, %v1910
        %v1927 = vmul.f32 %v730, %v1925
        %v1928 = vmul.f32 %v1886, %v1926
        %v1929 = vmul.f32 %v1887, %v1927
        %v1930 = vmul.f32 %v1129, %v1129
        %v1931 = vmul.f32 %v1130, %v1130
        %v1932 = vsel %vm734, %v1930, 0.0
        %1933 = vadd.xlane.f32.xlu0 %v1932
        %v1934 = vpop.xlane.xlu0 %1933
        %vm1935 = vcmask 519168
        %v1936 = vsel %vm1935, %v1931, 0.0
        %1937 = vadd.xlane.f32.xlu0 %v1936
        %v1938 = vpop.xlane.xlu0 %1937
        %v1939 = vrcp.pop 64.0
        %v1940 = vmul.f32 64.0, %v1939
        %v1941 = vsub.f32 1.0, %v1940
        %v1942 = vmul.f32 %v1939, %v1941
        %v1943 = vadd.f32 %v1939, %v1942
        %vm1944 = vweird.f32 %v1939
        %v1945 = vsel %vm1944, %v1939, %v1943
        %v1946 = vmul.f32 %v1934, %v1945
        %v1947 = vmul.f32 %v1938, %v1945
        %v1948 = vadd.f32 %v1946, 1e-06
        %v1949 = vadd.f32 %v1947, 1e-06
        %v1950 = vrsqrt.pop %v1948
        %v1951 = vmul.f32 %v1950, %v1948
        %v1952 = vmul.f32 %v1951, %v1950
        %v1953 = vmul.f32 0.5, %v1952
        %v1954 = vsub.f32 1.5, %v1953
        %v1955 = vmul.f32 %v1950, %v1954
        %vm1956 = vweird.f32 %v1948
        %vm1957 = vweird.f32 %v1950
        %vm1958 = vmor %vm1956, %vm1957
        %v1959 = vsel %vm1958, %v1950, %v1955
        %v1960 = vrsqrt.pop %v1949
        %v1961 = vmul.f32 %v1960, %v1949
        %v1962 = vmul.f32 %v1961, %v1960
        %v1963 = vmul.f32 0.5, %v1962
        %v1964 = vsub.f32 1.5, %v1963
        %v1965 = vmul.f32 %v1960, %v1964
        %vm1966 = vweird.f32 %v1949
        %vm1967 = vweird.f32 %v1960
        %vm1968 = vmor %vm1966, %vm1967
        %v1969 = vsel %vm1968, %v1960, %v1965
        %v1970 = vmul.f32 %v1129, %v1959
        %v1971 = vmul.f32 %v1130, %v1969
        %v1972 = vperm.slane %v625, 5
        %v1973 = vmul.f32 %v1970, %v1972
        %v1974 = vmul.f32 %v1971, %v1972
        %v1975 = vmul.f32 %v1928, %v1928
        %v1976 = vmul.f32 %v1929, %v1929
        %v1977 = vsel %vm734, %v1975, 0.0
        %1978 = vadd.xlane.f32.xlu0 %v1977
        %v1979 = vpop.xlane.xlu0 %1978
        %v1980 = vsel %vm1935, %v1976, 0.0
        %1981 = vadd.xlane.f32.xlu0 %v1980
        %v1982 = vpop.xlane.xlu0 %1981
        %v1983 = vmul.f32 %v1979, %v1945
        %v1984 = vmul.f32 %v1982, %v1945
        %v1985 = vadd.f32 %v1983, 1e-06
        %v1986 = vadd.f32 %v1984, 1e-06
        %v1987 = vrsqrt.pop %v1985
        %v1988 = vmul.f32 %v1987, %v1985
        %v1989 = vmul.f32 %v1988, %v1987
        %v1990 = vmul.f32 0.5, %v1989
        %v1991 = vsub.f32 1.5, %v1990
        %v1992 = vmul.f32 %v1987, %v1991
        %vm1993 = vweird.f32 %v1985
        %vm1994 = vweird.f32 %v1987
        %vm1995 = vmor %vm1993, %vm1994
        %v1996 = vsel %vm1995, %v1987, %v1992
        %v1997 = vrsqrt.pop %v1986
        %v1998 = vmul.f32 %v1997, %v1986
        %v1999 = vmul.f32 %v1998, %v1997
        %v2000 = vmul.f32 0.5, %v1999
        %v2001 = vsub.f32 1.5, %v2000
        %v2002 = vmul.f32 %v1997, %v2001
        %vm2003 = vweird.f32 %v1986
        %vm2004 = vweird.f32 %v1997
        %vm2005 = vmor %vm2003, %vm2004
        %v2006 = vsel %vm2005, %v1997, %v2002
        %v2007 = vmul.f32 %v1928, %v1996
        %v2008 = vmul.f32 %v1929, %v2006
        %v2009 = vperm.slane %v625, 6
        %v2010 = vmul.f32 %v2007, %v2009
        %v2011 = vmul.f32 %v2008, %v2009
        %v2012 = vadd.f32 %v1973, %v2010
        %v2013 = vadd.f32 %v1974, %v2011
        %v2014 = vmul.f32 %v2012, 0.5
        %v2015 = vmul.f32 %v2013, 0.5
        %v2016 = vld [vmem:[%s15] sm:$0xff]
        %v2017 = vld [vmem:[%s15 + $0x8] sm:$0xff]
        %v2018 = vld [vmem:[%s15 + $0x10] sm:$0xff]
        %v2019 = vld [vmem:[%s15 + $0x18] sm:$0xff]
        %v2020 = vld [vmem:[%s15 + $0x20] sm:$0xff]
        %v2021 = vld [vmem:[%s15 + $0x28] sm:$0xff]
        %v2022 = vld [vmem:[%s15 + $0x30] sm:$0xff]
        %v2023 = vld [vmem:[%s15 + $0x38] sm:$0xff]
        %v2025 = vsel %vm734, %v2014, 0
        %v2028 = vsel %vm734, %v2015, 0
        %2030 = vmatpush.msra.mxu0 0.0
        %2031 = vmatpush.msra.mxu0 0.0
        %2032 = vmatpush.msra.mxu0 0.0
        %2033 = vmatpush.msra.mxu0 0.0
        %2034 = vmatpush.msra.mxu0 0.0
        %2035 = vmatpush.msra.mxu0 0.0
        %2036 = vmatpush.msra.mxu0 0.0
        %2037 = vmatpush.msra.mxu0 0.0
        %2038 = vmatpush.msra.mxu0 %v2023
        %2039 = vmatpush.msra.mxu0 %v2022
        %2040 = vmatpush.msra.mxu0 %v2021
        %2041 = vmatpush.msra.mxu0 %v2020
        %2042 = vmatpush.msra.mxu0 %v2019
        %2043 = vmatpush.msra.mxu0 %v2018
        %2044 = vmatpush.msra.mxu0 %v2017
        %2045 = vmatpush.msra.mxu0 %v2016
        %2046 = vmatmul.f32.gmra.mxu0 %v2025
        %v2047 = vpop.f32.mrf.mxu0
        %v2048 = vadd.f32 0.0, %v2047
        %2049 = vmatmul.f32.gmra.mxu0 %v2028
        %v2050 = vpop.f32.mrf.mxu0
        %v2051 = vadd.f32 0.0, %v2050
        %2052 = vdwg.mxu0
        %v2053 = vadd.f32 %v604, %v2048
        %v2054 = vadd.f32 %v601, %v2051
        %v2055 = vmul.f32 %v2053, %v2053
        %v2056 = vmul.f32 %v2054, %v2054
        %v2057 = vsel %vm628, %v2055, 0.0
        %2058 = vadd.xlane.f32.xlu0 %v2057
        %v2059 = vpop.xlane.xlu0 %2058
        %v2060 = vsel %vm632, %v2056, 0.0
        %2061 = vadd.xlane.f32.xlu0 %v2060
        %v2062 = vpop.xlane.xlu0 %2061
        %v2063 = vmul.f32 %v2059, %v642
        %v2064 = vmul.f32 %v2062, %v642
        %v2065 = vadd.f32 %v2063, 1e-06
        %v2066 = vadd.f32 %v2064, 1e-06
        %v2067 = vrsqrt.pop %v2065
        %v2068 = vmul.f32 %v2067, %v2065
        %v2069 = vmul.f32 %v2068, %v2067
        %v2070 = vmul.f32 0.5, %v2069
        %v2071 = vsub.f32 1.5, %v2070
        %v2072 = vmul.f32 %v2067, %v2071
        %vm2073 = vweird.f32 %v2065
        %vm2074 = vweird.f32 %v2067
        %vm2075 = vmor %vm2073, %vm2074
        %v2076 = vsel %vm2075, %v2067, %v2072
        %v2077 = vrsqrt.pop %v2066
        %v2078 = vmul.f32 %v2077, %v2066
        %v2079 = vmul.f32 %v2078, %v2077
        %v2080 = vmul.f32 0.5, %v2079
        %v2081 = vsub.f32 1.5, %v2080
        %v2082 = vmul.f32 %v2077, %v2081
        %vm2083 = vweird.f32 %v2066
        %vm2084 = vweird.f32 %v2077
        %vm2085 = vmor %vm2083, %vm2084
        %v2086 = vsel %vm2085, %v2077, %v2082
        %v2087 = vmul.f32 %v2053, %v2076
        %v2088 = vmul.f32 %v2054, %v2086
        %v2089 = vperm.slane %v625, 1
        %v2090 = vmul.f32 %v2087, %v2089
        %v2091 = vmul.f32 %v2088, %v2089
        %v2092 = vld [vmem:[%s16] sm:$0xff]
        %v2093 = vld [vmem:[%s16 + $0x8] sm:$0xff]
        %v2094 = vld [vmem:[%s16 + $0x10] sm:$0xff]
        %v2095 = vld [vmem:[%s16 + $0x18] sm:$0xff]
        %v2097 = vsel %vm628, %v2090, 0
        %v2100 = vsel %vm628, %v2091, 0
        %2102 = vmatpush.msra.mxu0 0.0
        %2103 = vmatpush.msra.mxu0 0.0
        %2104 = vmatpush.msra.mxu0 0.0
        %2105 = vmatpush.msra.mxu0 0.0
        %2106 = vmatpush.msra.mxu0 0.0
        %2107 = vmatpush.msra.mxu0 0.0
        %2108 = vmatpush.msra.mxu0 0.0
        %2109 = vmatpush.msra.mxu0 0.0
        %2110 = vmatpush.msra.mxu0 0.0
        %2111 = vmatpush.msra.mxu0 0.0
        %2112 = vmatpush.msra.mxu0 0.0
        %2113 = vmatpush.msra.mxu0 0.0
        %2114 = vmatpush.msra.mxu0 %v2095
        %2115 = vmatpush.msra.mxu0 %v2094
        %2116 = vmatpush.msra.mxu0 %v2093
        %2117 = vmatpush.msra.mxu0 %v2092
        %2118 = vmatmul.f32.gmra.mxu0 %v2097
        %v2119 = vpop.f32.mrf.mxu0
        %v2120 = vadd.f32 0.0, %v2119
        %2121 = vmatmul.f32.gmra.mxu0 %v2100
        %v2122 = vpop.f32.mrf.mxu0
        %v2123 = vadd.f32 0.0, %v2122
        %2124 = vdwg.mxu0
        %v2125 = vxor.u32 %v2120, 2147483648
        %v2126 = vxor.u32 %v2123, 2147483648
        %v2127 = vmul.f32 %v2125, 1.442695
        %v2128 = vpow.pop %v2127
        %v2129 = vmul.f32 %v2126, 1.442695
        %v2130 = vpow.pop %v2129
        %v2131 = vadd.f32 %v2128, 1.0
        %v2132 = vadd.f32 %v2130, 1.0
        %v2133 = vrcp.pop %v2131
        %v2134 = vmul.f32 %v2131, %v2133
        %v2135 = vsub.f32 1.0, %v2134
        %v2136 = vmul.f32 %v2133, %v2135
        %v2137 = vadd.f32 %v2133, %v2136
        %vm2138 = vweird.f32 %v2131
        %vm2139 = vweird.f32 %v2133
        %vm2140 = vmor %vm2138, %vm2139
        %v2141 = vsel %vm2140, %v2133, %v2137
        %v2142 = vand.u32 2147483647, %v2131
        %vm2143 = vcmp.eq.f32.partialorder %v2142, 8.507059e+37
        %v2144 = vand.u32 %v2131, 2147483648
        %v2145 = vor.u32 1.1754944e-38, %v2144
        %v2146 = vsel %vm2143, %v2145, %v2141
        %v2147 = vmul.f32 1.0, %v2146
        %v2148 = vrcp.pop %v2132
        %v2149 = vmul.f32 %v2132, %v2148
        %v2150 = vsub.f32 1.0, %v2149
        %v2151 = vmul.f32 %v2148, %v2150
        %v2152 = vadd.f32 %v2148, %v2151
        %vm2153 = vweird.f32 %v2132
        %vm2154 = vweird.f32 %v2148
        %vm2155 = vmor %vm2153, %vm2154
        %v2156 = vsel %vm2155, %v2148, %v2152
        %v2157 = vand.u32 2147483647, %v2132
        %vm2158 = vcmp.eq.f32.partialorder %v2157, 8.507059e+37
        %v2159 = vand.u32 %v2132, 2147483648
        %v2160 = vor.u32 1.1754944e-38, %v2159
        %v2161 = vsel %vm2158, %v2160, %v2156
        %v2162 = vmul.f32 1.0, %v2161
        %v2163 = vmul.f32 %v2120, %v2147
        %v2164 = vmul.f32 %v2123, %v2162
        %2167 = vrot.lane.b32.xlu0 %v2120, 64
        %v2168 = vpop.permute.xlu0 %2167
        %2169 = vrot.lane.b32.xlu0 %v2123, 64
        %v2170 = vpop.permute.xlu0 %2169
        %v2173 = vmul.f32 %v2163, %v2168
        %v2174 = vmul.f32 %v2164, %v2170
        %v2175 = vld [vmem:[%s17] sm:$0xff]
        %v2176 = vld [vmem:[%s17 + $0x8] sm:$0xff]
        %v2177 = vld [vmem:[%s17 + $0x10] sm:$0xff]
        %v2178 = vld [vmem:[%s17 + $0x18] sm:$0xff]
        %v2179 = vld [vmem:[%s17 + $0x20] sm:$0xff]
        %v2180 = vld [vmem:[%s17 + $0x28] sm:$0xff]
        %v2181 = vld [vmem:[%s17 + $0x30] sm:$0xff]
        %v2182 = vld [vmem:[%s17 + $0x38] sm:$0xff]
        %v2184 = vsel %vm734, %v2173, 0
        %v2187 = vsel %vm734, %v2174, 0
        %2189 = vmatpush.msra.mxu0 0.0
        %2190 = vmatpush.msra.mxu0 0.0
        %2191 = vmatpush.msra.mxu0 0.0
        %2192 = vmatpush.msra.mxu0 0.0
        %2193 = vmatpush.msra.mxu0 0.0
        %2194 = vmatpush.msra.mxu0 0.0
        %2195 = vmatpush.msra.mxu0 0.0
        %2196 = vmatpush.msra.mxu0 0.0
        %2197 = vmatpush.msra.mxu0 %v2182
        %2198 = vmatpush.msra.mxu0 %v2181
        %2199 = vmatpush.msra.mxu0 %v2180
        %2200 = vmatpush.msra.mxu0 %v2179
        %2201 = vmatpush.msra.mxu0 %v2178
        %2202 = vmatpush.msra.mxu0 %v2177
        %2203 = vmatpush.msra.mxu0 %v2176
        %2204 = vmatpush.msra.mxu0 %v2175
        %2205 = vmatmul.f32.gmra.mxu0 %v2184
        %v2206 = vpop.f32.mrf.mxu0
        %v2207 = vadd.f32 0.0, %v2206
        %2208 = vmatmul.f32.gmra.mxu0 %v2187
        %v2209 = vpop.f32.mrf.mxu0
        %v2210 = vadd.f32 0.0, %v2209
        %2211 = vdwg.mxu0
        %v2212 = vadd.f32 %v2053, %v2207
        %v2213 = vadd.f32 %v2054, %v2210
        %s2214 = scalar_lea.vmem %s18, 8
        %v2215 = vld [vmem:[%s2214] sm:$0xff]
        %v2216 = vmul.f32 %v2212, %v2212
        %v2217 = vmul.f32 %v2213, %v2213
        %v2218 = vsel %vm628, %v2216, 0.0
        %2219 = vadd.xlane.f32.xlu0 %v2218
        %v2220 = vpop.xlane.xlu0 %2219
        %v2221 = vsel %vm632, %v2217, 0.0
        %2222 = vadd.xlane.f32.xlu0 %v2221
        %v2223 = vpop.xlane.xlu0 %2222
        %v2224 = vmul.f32 %v2220, %v642
        %v2225 = vmul.f32 %v2223, %v642
        %v2226 = vadd.f32 %v2224, 1e-06
        %v2227 = vadd.f32 %v2225, 1e-06
        %v2228 = vrsqrt.pop %v2226
        %v2229 = vmul.f32 %v2228, %v2226
        %v2230 = vmul.f32 %v2229, %v2228
        %v2231 = vmul.f32 0.5, %v2230
        %v2232 = vsub.f32 1.5, %v2231
        %v2233 = vmul.f32 %v2228, %v2232
        %vm2234 = vweird.f32 %v2226
        %vm2235 = vweird.f32 %v2228
        %vm2236 = vmor %vm2234, %vm2235
        %v2237 = vsel %vm2236, %v2228, %v2233
        %v2238 = vrsqrt.pop %v2227
        %v2239 = vmul.f32 %v2238, %v2227
        %v2240 = vmul.f32 %v2239, %v2238
        %v2241 = vmul.f32 0.5, %v2240
        %v2242 = vsub.f32 1.5, %v2241
        %v2243 = vmul.f32 %v2238, %v2242
        %vm2244 = vweird.f32 %v2227
        %vm2245 = vweird.f32 %v2238
        %vm2246 = vmor %vm2244, %vm2245
        %v2247 = vsel %vm2246, %v2238, %v2243
        %v2248 = vmul.f32 %v2212, %v2237
        %v2249 = vmul.f32 %v2213, %v2247
        %v2250 = vperm.slane %v2215, 0
        %v2251 = vmul.f32 %v2248, %v2250
        %v2252 = vmul.f32 %v2249, %v2250
        %s2253 = scalar_lea.vmem %s9, 64
        %v2254 = vld [vmem:[%s2253] sm:$0xff]
        %v2255 = vld [vmem:[%s2253 + $0x8] sm:$0xff]
        %v2256 = vld [vmem:[%s2253 + $0x10] sm:$0xff]
        %v2257 = vld [vmem:[%s2253 + $0x18] sm:$0xff]
        %v2258 = vld [vmem:[%s2253 + $0x20] sm:$0xff]
        %v2259 = vld [vmem:[%s2253 + $0x28] sm:$0xff]
        %v2260 = vld [vmem:[%s2253 + $0x30] sm:$0xff]
        %v2261 = vld [vmem:[%s2253 + $0x38] sm:$0xff]
        %v2263 = vsel %vm628, %v2251, 0
        %v2266 = vsel %vm628, %v2252, 0
        %2268 = vmatpush.msra.mxu0 0.0
        %2269 = vmatpush.msra.mxu0 0.0
        %2270 = vmatpush.msra.mxu0 0.0
        %2271 = vmatpush.msra.mxu0 0.0
        %2272 = vmatpush.msra.mxu0 0.0
        %2273 = vmatpush.msra.mxu0 0.0
        %2274 = vmatpush.msra.mxu0 0.0
        %2275 = vmatpush.msra.mxu0 0.0
        %2276 = vmatpush.msra.mxu0 0.0
        %2277 = vmatpush.msra.mxu0 0.0
        %2278 = vmatpush.msra.mxu0 0.0
        %2279 = vmatpush.msra.mxu0 0.0
        %2280 = vmatpush.msra.mxu0 %v2260
        %2281 = vmatpush.msra.mxu0 %v2258
        %2282 = vmatpush.msra.mxu0 %v2256
        %2283 = vmatpush.msra.mxu0 %v2254
        %2284 = vmatmul.f32.gmra.mxu0 %v2263
        %v2285 = vpop.f32.mrf.mxu0
        %v2286 = vadd.f32 0.0, %v2285
        %2287 = vmatmul.f32.gmra.mxu0 %v2266
        %v2288 = vpop.f32.mrf.mxu0
        %v2289 = vadd.f32 0.0, %v2288
        %2290 = vdwg.mxu0
        %2291 = vmatpush.msra.mxu0 0.0
        %2292 = vmatpush.msra.mxu0 0.0
        %2293 = vmatpush.msra.mxu0 0.0
        %2294 = vmatpush.msra.mxu0 0.0
        %2295 = vmatpush.msra.mxu0 0.0
        %2296 = vmatpush.msra.mxu0 0.0
        %2297 = vmatpush.msra.mxu0 0.0
        %2298 = vmatpush.msra.mxu0 0.0
        %2299 = vmatpush.msra.mxu0 0.0
        %2300 = vmatpush.msra.mxu0 0.0
        %2301 = vmatpush.msra.mxu0 0.0
        %2302 = vmatpush.msra.mxu0 0.0
        %2303 = vmatpush.msra.mxu0 %v2261
        %2304 = vmatpush.msra.mxu0 %v2259
        %2305 = vmatpush.msra.mxu0 %v2257
        %2306 = vmatpush.msra.mxu0 %v2255
        %2307 = vmatmul.f32.gmra.mxu0 %v2263
        %v2308 = vpop.f32.mrf.mxu0
        %v2309 = vadd.f32 0.0, %v2308
        %2310 = vmatmul.f32.gmra.mxu0 %v2266
        %v2311 = vpop.f32.mrf.mxu0
        %v2312 = vadd.f32 0.0, %v2311
        %2313 = vdwg.mxu0
        %v2314 = vmul.f32 %v2286, %v605
        %v2315 = vmul.f32 %v2289, %v606
        %v2317 = vsel %vm734, %v2286, 0
        %v2320 = vsel %vm734, %v2289, 0
        %2322 = vmatpush.msra.mxu0 0.0
        %2323 = vmatpush.msra.mxu0 0.0
        %2324 = vmatpush.msra.mxu0 0.0
        %2325 = vmatpush.msra.mxu0 0.0
        %2326 = vmatpush.msra.mxu0 0.0
        %2327 = vmatpush.msra.mxu0 0.0
        %2328 = vmatpush.msra.mxu0 0.0
        %2329 = vmatpush.msra.mxu0 0.0
        %2330 = vmatpush.msra.mxu0 %v620
        %2331 = vmatpush.msra.mxu0 %v619
        %2332 = vmatpush.msra.mxu0 %v618
        %2333 = vmatpush.msra.mxu0 %v617
        %2334 = vmatpush.msra.mxu0 %v616
        %2335 = vmatpush.msra.mxu0 %v615
        %2336 = vmatpush.msra.mxu0 %v614
        %2337 = vmatpush.msra.mxu0 %v613
        %2338 = vmatmul.f32.gmra.mxu0 %v2317
        %v2339 = vpop.f32.mrf.mxu0
        %v2340 = vadd.f32 0.0, %v2339
        %2341 = vmatmul.f32.gmra.mxu0 %v2320
        %v2342 = vpop.f32.mrf.mxu0
        %v2343 = vadd.f32 0.0, %v2342
        %2344 = vdwg.mxu0
        %v2345 = vmul.f32 %v2340, %v607
        %v2346 = vmul.f32 %v2343, %v608
        %v2347 = vadd.f32 %v2314, %v2345
        %v2348 = vadd.f32 %v2315, %v2346
        %v2349 = vmul.f32 %v2286, %v771
        %v2350 = vmul.f32 %v2289, %v773
        %2351 = vrot.lane.b32.xlu0 %v2286, 64
        %v2352 = vpop.permute.xlu0 %2351
        %2353 = vrot.lane.b32.xlu0 %v2289, 64
        %v2354 = vpop.permute.xlu0 %2353
        %v2355 = vsel %vm628, %v2352, 0
        %v2357 = vsel %vm628, %v2354, 0
        %2359 = vmatpush.msra.mxu0 0.0
        %2360 = vmatpush.msra.mxu0 0.0
        %2361 = vmatpush.msra.mxu0 0.0
        %2362 = vmatpush.msra.mxu0 0.0
        %2363 = vmatpush.msra.mxu0 0.0
        %2364 = vmatpush.msra.mxu0 0.0
        %2365 = vmatpush.msra.mxu0 0.0
        %2366 = vmatpush.msra.mxu0 0.0
        %2367 = vmatpush.msra.mxu0 0.0
        %2368 = vmatpush.msra.mxu0 0.0
        %2369 = vmatpush.msra.mxu0 0.0
        %2370 = vmatpush.msra.mxu0 0.0
        %2371 = vmatpush.msra.mxu0 %v624
        %2372 = vmatpush.msra.mxu0 %v623
        %2373 = vmatpush.msra.mxu0 %v622
        %2374 = vmatpush.msra.mxu0 %v621
        %2375 = vmatmul.f32.gmra.mxu0 %v2355
        %v2376 = vpop.f32.mrf.mxu0
        %v2377 = vadd.f32 0.0, %v2376
        %2378 = vmatmul.f32.gmra.mxu0 %v2357
        %v2379 = vpop.f32.mrf.mxu0
        %v2380 = vadd.f32 0.0, %v2379
        %2381 = vdwg.mxu0
        %v2382 = vmul.f32 %v2377, %v611
        %v2383 = vmul.f32 %v2380, %v612
        %2386 = vrot.lane.b32.xlu0 %v2382, 64
        %v2387 = vpop.permute.xlu0 %2386
        %2388 = vrot.lane.b32.xlu0 %v2383, 64
        %v2389 = vpop.permute.xlu0 %2388
        %v2392 = vadd.f32 %v2349, %v2387
        %v2393 = vadd.f32 %v2350, %v2389
        %s2394 = scalar_lea.vmem %s2, 16
        %v2395 = vld [vmem:[%s2394] sm:$0xff]
        %v2396 = vld [vmem:[%s2394 + $0x8] sm:$0xf]
        %v2399 = vrot.slane %v2395, 4
        %v2400 = vrot.slane %v2396, 4
        %v2401 = vsel %vm603, %v2399, %v2400
        %v2404 = vsel %vm603, %v2396, %v2399
        %v2407 = vrot.slane %v2347, 4
        %v2408 = vrot.slane %v2348, 4
        %v2409 = vsel %vm603, %v2407, %v2408
        %2410 = vrot.lane.b32.xlu0 %v2407, 112
        %v2411 = vpop.permute.xlu0 %2410
        %2412 = vrot.lane.b32.xlu0 %v2409, 112
        %v2413 = vpop.permute.xlu0 %2412
        %v2415 = vsel %vm603, %v2348, %v2411
        %2418 = vrot.lane.b32.xlu0 %v2392, 64
        %v2419 = vpop.permute.xlu0 %2418
        %2420 = vrot.lane.b32.xlu0 %v2393, 64
        %v2421 = vpop.permute.xlu0 %2420
        %v2422 = vsel %vm848, %v2347, 0
        %v2425 = vsel %vm848, %v2415, 0
        %v2427 = vsel %vm848, %v2413, 0
        %v2429 = vsel %vm848, %v2419, 0
        %v2431 = vsel %vm848, %v2421, 0
        %2433 = vmatpush.xpose.msra.mxu0 0.0
        %2434 = vmatpush.xpose.msra.mxu0 0.0
        %2435 = vmatpush.xpose.msra.mxu0 0.0
        %2436 = vmatpush.xpose.msra.mxu0 0.0
        %2437 = vmatpush.xpose.msra.mxu0 0.0
        %2438 = vmatpush.xpose.msra.mxu0 0.0
        %2439 = vmatpush.xpose.msra.mxu0 0.0
        %2440 = vmatpush.xpose.msra.mxu0 0.0
        %2441 = vmatpush.xpose.msra.mxu0 0.0
        %2442 = vmatpush.xpose.msra.mxu0 0.0
        %2443 = vmatpush.xpose.msra.mxu0 0.0
        %2444 = vmatpush.xpose.msra.mxu0 0.0
        %2445 = vmatpush.xpose.msra.mxu0 0.0
        %2446 = vmatpush.xpose.msra.mxu0 0.0
        %2447 = vmatpush.xpose.msra.mxu0 %v2431
        %2448 = vmatpush.xpose.msra.mxu0 %v2429
        %2449 = vmatmul.f32.gmra.mxu0 %v2422
        %v2450 = vpop.f32.mrf.mxu0
        %v2451 = vadd.f32 0.0, %v2450
        %2452 = vmatmul.f32.gmra.mxu0 %v2425
        %v2453 = vpop.f32.mrf.mxu0
        %v2454 = vadd.f32 0.0, %v2453
        %2455 = vmatmul.f32.gmra.mxu0 %v2427
        %v2456 = vpop.f32.mrf.mxu0
        %v2457 = vadd.f32 0.0, %v2456
        %2458 = vdwg.mxu0
        %v2459 = vmul.f32 %v2451, 0.25
        %v2460 = vmul.f32 %v2454, 0.25
        %v2461 = vmul.f32 %v2457, 0.25
        %v2462 = vadd.f32 %v2459, %v2395
        %v2463 = vadd.f32 %v2460, %v2404
        %v2464 = vadd.f32 %v2461, %v2401
        %v2465 = vsel %vm892, %v2462, -inf
        %2466 = vmax.xlane.f32.xlu0 %v2465
        %v2467 = vpop.xlane.xlu0 %2466
        %v2468 = vsel %vm892, %v2463, -inf
        %2469 = vmax.xlane.f32.xlu0 %v2468
        %v2470 = vpop.xlane.xlu0 %2469
        %v2471 = vsel %vm892, %v2464, -inf
        %2472 = vmax.xlane.f32.xlu0 %v2471
        %v2473 = vpop.xlane.xlu0 %2472
        %v2474 = vsub.f32 %v2462, %v2467
        %v2475 = vsub.f32 %v2463, %v2470
        %v2476 = vsub.f32 %v2464, %v2473
        %v2477 = vmul.f32 %v2474, 1.442695
        %v2478 = vpow.pop %v2477
        %v2479 = vmul.f32 %v2475, 1.442695
        %v2480 = vpow.pop %v2479
        %v2481 = vmul.f32 %v2476, 1.442695
        %v2482 = vpow.pop %v2481
        %v2483 = vsel %vm892, %v2478, 0.0
        %2484 = vadd.xlane.f32.xlu0 %v2483
        %v2485 = vpop.xlane.xlu0 %2484
        %v2486 = vsel %vm892, %v2480, 0.0
        %2487 = vadd.xlane.f32.xlu0 %v2486
        %v2488 = vpop.xlane.xlu0 %2487
        %v2489 = vsel %vm892, %v2482, 0.0
        %2490 = vadd.xlane.f32.xlu0 %v2489
        %v2491 = vpop.xlane.xlu0 %2490
        %v2492 = vrcp.pop %v2485
        %v2493 = vrcp.pop %v2488
        %v2494 = vrcp.pop %v2491
        %v2495 = vmul.f32 %v2478, %v2492
        %v2496 = vmul.f32 %v2480, %v2493
        %v2497 = vmul.f32 %v2482, %v2494
        %2498 = vrot.lane.b32.xlu0 %v2286, 32
        %v2499 = vpop.permute.xlu0 %2498
        %2500 = vrot.lane.b32.xlu0 %v2289, 32
        %v2501 = vpop.permute.xlu0 %2500
        %v2504 = vsel %vm892, %v2495, 0
        %v2507 = vsel %vm892, %v2496, 0
        %v2510 = vsel %vm892, %v2497, 0
        %v2512 = vsel %vm603, %v2501, 0
        %2514 = vmatpush.msra.mxu0 0.0
        %2515 = vmatpush.msra.mxu0 0.0
        %2516 = vmatpush.msra.mxu0 0.0
        %2517 = vmatpush.msra.mxu0 0.0
        %2518 = vmatpush.msra.mxu0 0.0
        %2519 = vmatpush.msra.mxu0 0.0
        %2520 = vmatpush.msra.mxu0 0.0
        %2521 = vmatpush.msra.mxu0 0.0
        %2522 = vmatpush.msra.mxu0 0.0
        %2523 = vmatpush.msra.mxu0 0.0
        %2524 = vmatpush.msra.mxu0 0.0
        %2525 = vmatpush.msra.mxu0 0.0
        %2526 = vmatpush.msra.mxu0 0.0
        %2527 = vmatpush.msra.mxu0 0.0
        %2528 = vmatpush.msra.mxu0 %v2512
        %2529 = vmatpush.msra.mxu0 %v2499
        %2530 = vmatmul.f32.gmra.mxu0 %v2504
        %v2531 = vpop.f32.mrf.mxu0
        %v2532 = vadd.f32 0.0, %v2531
        %2533 = vmatmul.f32.gmra.mxu0 %v2507
        %v2534 = vpop.f32.mrf.mxu0
        %v2535 = vadd.f32 0.0, %v2534
        %2536 = vmatmul.f32.gmra.mxu0 %v2510
        %v2537 = vpop.f32.mrf.mxu0
        %v2538 = vadd.f32 0.0, %v2537
        %2539 = vdwg.mxu0
        %2540 = vrot.lane.b32.xlu0 %v2347, 96
        %v2541 = vpop.permute.xlu0 %2540
        %2542 = vrot.lane.b32.xlu0 %v2415, 96
        %v2543 = vpop.permute.xlu0 %2542
        %2544 = vrot.lane.b32.xlu0 %v2413, 96
        %v2545 = vpop.permute.xlu0 %2544
        %2546 = vrot.lane.b32.xlu0 %v2392, 48
        %v2547 = vpop.permute.xlu0 %2546
        %2548 = vrot.lane.b32.xlu0 %v2393, 48
        %v2549 = vpop.permute.xlu0 %2548
        %v2550 = vsel %vm848, %v2541, 0
        %v2552 = vsel %vm848, %v2543, 0
        %v2554 = vsel %vm848, %v2545, 0
        %v2556 = vsel %vm848, %v2547, 0
        %v2558 = vsel %vm848, %v2549, 0
        %2560 = vmatpush.xpose.msra.mxu0 0.0
        %2561 = vmatpush.xpose.msra.mxu0 0.0
        %2562 = vmatpush.xpose.msra.mxu0 0.0
        %2563 = vmatpush.xpose.msra.mxu0 0.0
        %2564 = vmatpush.xpose.msra.mxu0 0.0
        %2565 = vmatpush.xpose.msra.mxu0 0.0
        %2566 = vmatpush.xpose.msra.mxu0 0.0
        %2567 = vmatpush.xpose.msra.mxu0 0.0
        %2568 = vmatpush.xpose.msra.mxu0 0.0
        %2569 = vmatpush.xpose.msra.mxu0 0.0
        %2570 = vmatpush.xpose.msra.mxu0 0.0
        %2571 = vmatpush.xpose.msra.mxu0 0.0
        %2572 = vmatpush.xpose.msra.mxu0 0.0
        %2573 = vmatpush.xpose.msra.mxu0 0.0
        %2574 = vmatpush.xpose.msra.mxu0 %v2558
        %2575 = vmatpush.xpose.msra.mxu0 %v2556
        %2576 = vmatmul.f32.gmra.mxu0 %v2550
        %v2577 = vpop.f32.mrf.mxu0
        %v2578 = vadd.f32 0.0, %v2577
        %2579 = vmatmul.f32.gmra.mxu0 %v2552
        %v2580 = vpop.f32.mrf.mxu0
        %v2581 = vadd.f32 0.0, %v2580
        %2582 = vmatmul.f32.gmra.mxu0 %v2554
        %v2583 = vpop.f32.mrf.mxu0
        %v2584 = vadd.f32 0.0, %v2583
        %2585 = vdwg.mxu0
        %v2586 = vmul.f32 %v2578, 0.25
        %v2587 = vmul.f32 %v2581, 0.25
        %v2588 = vmul.f32 %v2584, 0.25
        %v2589 = vadd.f32 %v2586, %v2395
        %v2590 = vadd.f32 %v2587, %v2404
        %v2591 = vadd.f32 %v2588, %v2401
        %v2592 = vsel %vm892, %v2589, -inf
        %2593 = vmax.xlane.f32.xlu0 %v2592
        %v2594 = vpop.xlane.xlu0 %2593
        %v2595 = vsel %vm892, %v2590, -inf
        %2596 = vmax.xlane.f32.xlu0 %v2595
        %v2597 = vpop.xlane.xlu0 %2596
        %v2598 = vsel %vm892, %v2591, -inf
        %2599 = vmax.xlane.f32.xlu0 %v2598
        %v2600 = vpop.xlane.xlu0 %2599
        %v2601 = vsub.f32 %v2589, %v2594
        %v2602 = vsub.f32 %v2590, %v2597
        %v2603 = vsub.f32 %v2591, %v2600
        %v2604 = vmul.f32 %v2601, 1.442695
        %v2605 = vpow.pop %v2604
        %v2606 = vmul.f32 %v2602, 1.442695
        %v2607 = vpow.pop %v2606
        %v2608 = vmul.f32 %v2603, 1.442695
        %v2609 = vpow.pop %v2608
        %v2610 = vsel %vm892, %v2605, 0.0
        %2611 = vadd.xlane.f32.xlu0 %v2610
        %v2612 = vpop.xlane.xlu0 %2611
        %v2613 = vsel %vm892, %v2607, 0.0
        %2614 = vadd.xlane.f32.xlu0 %v2613
        %v2615 = vpop.xlane.xlu0 %2614
        %v2616 = vsel %vm892, %v2609, 0.0
        %2617 = vadd.xlane.f32.xlu0 %v2616
        %v2618 = vpop.xlane.xlu0 %2617
        %v2619 = vrcp.pop %v2612
        %v2620 = vrcp.pop %v2615
        %v2621 = vrcp.pop %v2618
        %v2622 = vmul.f32 %v2605, %v2619
        %v2623 = vmul.f32 %v2607, %v2620
        %v2624 = vmul.f32 %v2609, %v2621
        %2625 = vrot.lane.b32.xlu0 %v2286, 16
        %v2626 = vpop.permute.xlu0 %2625
        %2627 = vrot.lane.b32.xlu0 %v2289, 16
        %v2628 = vpop.permute.xlu0 %2627
        %v2631 = vsel %vm892, %v2622, 0
        %v2634 = vsel %vm892, %v2623, 0
        %v2637 = vsel %vm892, %v2624, 0
        %v2639 = vsel %vm603, %v2628, 0
        %2641 = vmatpush.msra.mxu0 0.0
        %2642 = vmatpush.msra.mxu0 0.0
        %2643 = vmatpush.msra.mxu0 0.0
        %2644 = vmatpush.msra.mxu0 0.0
        %2645 = vmatpush.msra.mxu0 0.0
        %2646 = vmatpush.msra.mxu0 0.0
        %2647 = vmatpush.msra.mxu0 0.0
        %2648 = vmatpush.msra.mxu0 0.0
        %2649 = vmatpush.msra.mxu0 0.0
        %2650 = vmatpush.msra.mxu0 0.0
        %2651 = vmatpush.msra.mxu0 0.0
        %2652 = vmatpush.msra.mxu0 0.0
        %2653 = vmatpush.msra.mxu0 0.0
        %2654 = vmatpush.msra.mxu0 0.0
        %2655 = vmatpush.msra.mxu0 %v2639
        %2656 = vmatpush.msra.mxu0 %v2626
        %2657 = vmatmul.f32.gmra.mxu0 %v2631
        %v2658 = vpop.f32.mrf.mxu0
        %v2659 = vadd.f32 0.0, %v2658
        %2660 = vmatmul.f32.gmra.mxu0 %v2634
        %v2661 = vpop.f32.mrf.mxu0
        %v2662 = vadd.f32 0.0, %v2661
        %2663 = vmatmul.f32.gmra.mxu0 %v2637
        %v2664 = vpop.f32.mrf.mxu0
        %v2665 = vadd.f32 0.0, %v2664
        %2666 = vdwg.mxu0
        %v2669 = vrot.slane %v2535, 4
        %v2670 = vrot.slane %v2538, 4
        %v2671 = vsel %vm603, %v2669, %v2670
        %2672 = vrot.lane.b32.xlu0 %v2671, 16
        %v2673 = vpop.permute.xlu0 %2672
        %2674 = vrot.lane.b32.xlu0 %v2670, 16
        %v2675 = vpop.permute.xlu0 %2674
        %2680 = vrot.lane.b32.xlu0 %v2659, 32
        %v2681 = vpop.permute.xlu0 %2680
        %2682 = vrot.lane.b32.xlu0 %v2662, 32
        %v2683 = vpop.permute.xlu0 %2682
        %v2687 = vrot.slane %v2662, 4
        %v2688 = vrot.slane %v2665, 4
        %v2689 = vsel %vm603, %v2687, %v2688
        %2690 = vrot.lane.b32.xlu0 %v2689, 48
        %v2691 = vpop.permute.xlu0 %2690
        %2692 = vrot.lane.b32.xlu0 %v2688, 48
        %v2693 = vpop.permute.xlu0 %2692
        %v2696 = vsel %vm848, %v2532, %v2673
        %v2697 = vsel %vm848, %v2535, %v2675
        %v2698 = vsel %vm628, %v2696, %v2681
        %v2699 = vsel %vm628, %v2697, %v2683
        %v2700 = vsel %vm1128, %v2698, %v2691
        %v2701 = vsel %vm1128, %v2699, %v2693
        %s2702 = scalar_lea.vmem %s10, 4
        %v2703 = vld [vmem:[%s2702] sm:$0xf]
        %v2704 = vperm.slane %v2703, 3
        %v2705 = vmul.f32 %v2286, %v2704
        %v2706 = vmul.f32 %v2289, %v2704
        %v2707 = vrot.slane %v2286, 7
        %v2708 = vrot.slane %v2289, 7
        %v2709 = vsel %vm1135, %v2707, %v2708
        %v2712 = vsel %vm1135, 0.0, %v2707
        %v2713 = vperm.slane %v2703, 2
        %v2714 = vmul.f32 %v2712, %v2713
        %v2715 = vmul.f32 %v2709, %v2713
        %v2716 = vadd.f32 %v2705, %v2714
        %v2717 = vadd.f32 %v2706, %v2715
        %v2718 = vrot.slane %v2286, 6
        %v2719 = vrot.slane %v2289, 6
        %v2720 = vsel %vm1147, %v2718, %v2719
        %v2723 = vsel %vm1147, 0.0, %v2718
        %v2724 = vperm.slane %v2703, 1
        %v2725 = vmul.f32 %v2723, %v2724
        %v2726 = vmul.f32 %v2720, %v2724
        %v2727 = vadd.f32 %v2716, %v2725
        %v2728 = vadd.f32 %v2717, %v2726
        %v2729 = vrot.slane %v2286, 5
        %v2730 = vrot.slane %v2289, 5
        %v2731 = vsel %vm1159, %v2729, %v2730
        %v2734 = vsel %vm1159, 0.0, %v2729
        %v2735 = vperm.slane %v2703, 0
        %v2736 = vmul.f32 %v2734, %v2735
        %v2737 = vmul.f32 %v2731, %v2735
        %v2738 = vadd.f32 %v2727, %v2736
        %v2739 = vadd.f32 %v2728, %v2737
        %v2740 = vperm.slane %v2215, 2
        %v2741 = vadd.f32 %v2738, %v2740
        %v2742 = vadd.f32 %v2739, %v2740
        %v2743 = vxor.u32 %v2741, 2147483648
        %v2744 = vxor.u32 %v2742, 2147483648
        %v2745 = vmul.f32 %v2743, 1.442695
        %v2746 = vpow.pop %v2745
        %v2747 = vmul.f32 %v2744, 1.442695
        %v2748 = vpow.pop %v2747
        %v2749 = vadd.f32 %v2746, 1.0
        %v2750 = vadd.f32 %v2748, 1.0
        %v2751 = vrcp.pop %v2749
        %v2752 = vmul.f32 %v2749, %v2751
        %v2753 = vsub.f32 1.0, %v2752
        %v2754 = vmul.f32 %v2751, %v2753
        %v2755 = vadd.f32 %v2751, %v2754
        %vm2756 = vweird.f32 %v2749
        %vm2757 = vweird.f32 %v2751
        %vm2758 = vmor %vm2756, %vm2757
        %v2759 = vsel %vm2758, %v2751, %v2755
        %v2760 = vand.u32 2147483647, %v2749
        %vm2761 = vcmp.eq.f32.partialorder %v2760, 8.507059e+37
        %v2762 = vand.u32 %v2749, 2147483648
        %v2763 = vor.u32 1.1754944e-38, %v2762
        %v2764 = vsel %vm2761, %v2763, %v2759
        %v2765 = vmul.f32 1.0, %v2764
        %v2766 = vrcp.pop %v2750
        %v2767 = vmul.f32 %v2750, %v2766
        %v2768 = vsub.f32 1.0, %v2767
        %v2769 = vmul.f32 %v2766, %v2768
        %v2770 = vadd.f32 %v2766, %v2769
        %vm2771 = vweird.f32 %v2750
        %vm2772 = vweird.f32 %v2766
        %vm2773 = vmor %vm2771, %vm2772
        %v2774 = vsel %vm2773, %v2766, %v2770
        %v2775 = vand.u32 2147483647, %v2750
        %vm2776 = vcmp.eq.f32.partialorder %v2775, 8.507059e+37
        %v2777 = vand.u32 %v2750, 2147483648
        %v2778 = vor.u32 1.1754944e-38, %v2777
        %v2779 = vsel %vm2776, %v2778, %v2774
        %v2780 = vmul.f32 1.0, %v2779
        %v2781 = vmul.f32 %v2741, %v2765
        %v2782 = vmul.f32 %v2742, %v2780
        %s2783 = scalar_lea.vmem %s11, 64
        %v2784 = vld [vmem:[%s2783] sm:$0xff]
        %v2785 = vld [vmem:[%s2783 + $0x8] sm:$0xff]
        %v2786 = vld [vmem:[%s2783 + $0x10] sm:$0xff]
        %v2787 = vld [vmem:[%s2783 + $0x18] sm:$0xff]
        %v2788 = vld [vmem:[%s2783 + $0x20] sm:$0xff]
        %v2789 = vld [vmem:[%s2783 + $0x28] sm:$0xff]
        %v2790 = vld [vmem:[%s2783 + $0x30] sm:$0xff]
        %v2791 = vld [vmem:[%s2783 + $0x38] sm:$0xff]
        %v2793 = vsel %vm734, %v2781, 0
        %v2796 = vsel %vm734, %v2782, 0
        %2798 = vmatpush.msra.mxu0 0.0
        %2799 = vmatpush.msra.mxu0 0.0
        %2800 = vmatpush.msra.mxu0 0.0
        %2801 = vmatpush.msra.mxu0 0.0
        %2802 = vmatpush.msra.mxu0 0.0
        %2803 = vmatpush.msra.mxu0 0.0
        %2804 = vmatpush.msra.mxu0 0.0
        %2805 = vmatpush.msra.mxu0 0.0
        %2806 = vmatpush.msra.mxu0 %v2791
        %2807 = vmatpush.msra.mxu0 %v2790
        %2808 = vmatpush.msra.mxu0 %v2789
        %2809 = vmatpush.msra.mxu0 %v2788
        %2810 = vmatpush.msra.mxu0 %v2787
        %2811 = vmatpush.msra.mxu0 %v2786
        %2812 = vmatpush.msra.mxu0 %v2785
        %2813 = vmatpush.msra.mxu0 %v2784
        %2814 = vmatmul.f32.gmra.mxu0 %v2793
        %v2815 = vpop.f32.mrf.mxu0
        %v2816 = vadd.f32 0.0, %v2815
        %2817 = vmatmul.f32.gmra.mxu0 %v2796
        %v2818 = vpop.f32.mrf.mxu0
        %v2819 = vadd.f32 0.0, %v2818
        %2820 = vdwg.mxu0
        %s2821 = scalar_lea.vmem %s13, 8
        %v2822 = vld [vmem:[%s2821] sm:$0xff]
        %v2823 = vperm.slane %v2215, 3
        %v2825 = vsel %vm1253, %v2816, 0
        %v2828 = vsel %vm1253, %v2819, 0
        %2830 = vmatpush.msra.mxu0 0.0
        %2831 = vmatpush.msra.mxu0 0.0
        %2832 = vmatpush.msra.mxu0 0.0
        %2833 = vmatpush.msra.mxu0 0.0
        %2834 = vmatpush.msra.mxu0 0.0
        %2835 = vmatpush.msra.mxu0 0.0
        %2836 = vmatpush.msra.mxu0 0.0
        %2837 = vmatpush.msra.mxu0 0.0
        %2838 = vmatpush.msra.mxu0 0.0
        %2839 = vmatpush.msra.mxu0 0.0
        %2840 = vmatpush.msra.mxu0 0.0
        %2841 = vmatpush.msra.mxu0 0.0
        %2842 = vmatpush.msra.mxu0 0.0
        %2843 = vmatpush.msra.mxu0 0.0
        %2844 = vmatpush.msra.mxu0 0.0
        %2845 = vmatpush.msra.mxu0 %v2822
        %2846 = vmatmul.f32.gmra.mxu0 %v2825
        %v2847 = vpop.f32.mrf.mxu0
        %v2848 = vadd.f32 %v2823, %v2847
        %2849 = vmatmul.f32.gmra.mxu0 %v2828
        %v2850 = vpop.f32.mrf.mxu0
        %v2851 = vadd.f32 %v2823, %v2850
        %2852 = vdwg.mxu0
        %v2853 = vmax.f32 %v2848, 0.0
        %v2854 = vmax.f32 %v2851, 0.0
        %vm2855 = vcmp.ne.f32.partialorder %v2848, %v2848
        %vm2856 = vcmp.ne.f32.partialorder %v2851, %v2851
        %v2857 = vadd.f32 %v2848, 0.0
        %v2858 = vadd.f32 %v2851, 0.0
        %v2859 = vand.u32 2147483647, %v2848
        %v2860 = vand.u32 2147483647, %v2851
        %v2861 = vsub.f32 0.0, %v2859
        %v2862 = vsub.f32 0.0, %v2860
        %v2863 = vmul.f32 %v2861, 1.442695
        %v2864 = vpow.pop %v2863
        %v2865 = vmul.f32 %v2862, 1.442695
        %v2866 = vpow.pop %v2865
        %v2867 = vadd.f32 %v2864, 1.0
        %v2868 = vlog2.pop %v2867
        %v2869 = vmul.f32 %v2868, 0.6931472
        %v2870 = vmul.f32 -0.5, %v2864
        %v2871 = vadd.f32 %v2870, 1.0
        %v2872 = vmul.f32 %v2871, %v2864
        %v2873 = vand.u32 2147483647, %v2864
        %vm2874 = vcmp.lt.f32.partialorder %v2873, 0.0004427343
        %v2875 = vsel %vm2874, %v2872, %v2869
        %v2876 = vadd.f32 %v2866, 1.0
        %v2877 = vlog2.pop %v2876
        %v2878 = vmul.f32 %v2877, 0.6931472
        %v2879 = vmul.f32 -0.5, %v2866
        %v2880 = vadd.f32 %v2879, 1.0
        %v2881 = vmul.f32 %v2880, %v2866
        %v2882 = vand.u32 2147483647, %v2866
        %vm2883 = vcmp.lt.f32.partialorder %v2882, 0.0004427343
        %v2884 = vsel %vm2883, %v2881, %v2878
        %v2885 = vadd.f32 %v2853, %v2875
        %v2886 = vadd.f32 %v2854, %v2884
        %v2887 = vsel %vm2855, %v2857, %v2885
        %v2888 = vsel %vm2856, %v2858, %v2886
        %s2889 = scalar_lea.vmem %s12, 32
        %v2890 = vld [vmem:[%s2889] sm:$0xff]
        %v2891 = vld [vmem:[%s2889 + $0x8] sm:$0xff]
        %v2892 = vld [vmem:[%s2889 + $0x10] sm:$0xff]
        %v2893 = vld [vmem:[%s2889 + $0x18] sm:$0xff]
        %v2895 = vsel %vm734, %v2890, 0
        %v2898 = vsel %vm734, %v2891, 0
        %v2901 = vsel %vm734, %v2892, 0
        %v2904 = vsel %vm734, %v2893, 0
        %2906 = vmatpush.xpose.msra.mxu0 0.0
        %2907 = vmatpush.xpose.msra.mxu0 0.0
        %2908 = vmatpush.xpose.msra.mxu0 0.0
        %2909 = vmatpush.xpose.msra.mxu0 0.0
        %2910 = vmatpush.xpose.msra.mxu0 0.0
        %2911 = vmatpush.xpose.msra.mxu0 0.0
        %2912 = vmatpush.xpose.msra.mxu0 0.0
        %2913 = vmatpush.xpose.msra.mxu0 0.0
        %2914 = vmatpush.xpose.msra.mxu0 0.0
        %2915 = vmatpush.xpose.msra.mxu0 0.0
        %2916 = vmatpush.xpose.msra.mxu0 0.0
        %2917 = vmatpush.xpose.msra.mxu0 0.0
        %2918 = vmatpush.xpose.msra.mxu0 0.0
        %2919 = vmatpush.xpose.msra.mxu0 0.0
        %2920 = vmatpush.xpose.msra.mxu0 %v2796
        %2921 = vmatpush.xpose.msra.mxu0 %v2793
        %2922 = vmatmul.f32.gmra.mxu0 %v2895
        %v2923 = vpop.f32.mrf.mxu0
        %v2924 = vadd.f32 0.0, %v2923
        %2925 = vmatmul.f32.gmra.mxu0 %v2898
        %v2926 = vpop.f32.mrf.mxu0
        %v2927 = vadd.f32 0.0, %v2926
        %2928 = vmatmul.f32.gmra.mxu0 %v2901
        %v2929 = vpop.f32.mrf.mxu0
        %v2930 = vadd.f32 0.0, %v2929
        %2931 = vmatmul.f32.gmra.mxu0 %v2904
        %v2932 = vpop.f32.mrf.mxu0
        %v2933 = vadd.f32 0.0, %v2932
        %2934 = vdwg.mxu0
        %s2935 = scalar_lea.vmem %s14, 16
        %v2936 = vld [vmem:[%s2935] sm:$0xff]
        %v2937 = vld [vmem:[%s2935 + $0x8] sm:$0xff]
        %v2938 = vmul.f32 %v2936, 1.442695
        %v2939 = vpow.pop %v2938
        %v2940 = vmul.f32 %v2937, 1.442695
        %v2941 = vpow.pop %v2940
        %v2942 = vsub.f32 0.0, %v2939
        %v2943 = vsub.f32 0.0, %v2941
        %v2944 = vmul.f32 %v2887, %v2781
        %v2945 = vmul.f32 %v2888, %v2782
        %v2946 = vperm.slane %v2887, 0
        %v2947 = vmul.f32 %v2946, %v2942
        %v2948 = vmul.f32 %v2946, %v2943
        %v2949 = vmul.f32 %v2947, 1.442695
        %v2950 = vpow.pop %v2949
        %v2951 = vmul.f32 %v2948, 1.442695
        %v2952 = vpow.pop %v2951
        %v2953 = vperm.slane %v2887, 1
        %v2954 = vmul.f32 %v2953, %v2942
        %v2955 = vmul.f32 %v2953, %v2943
        %v2956 = vmul.f32 %v2954, 1.442695
        %v2957 = vpow.pop %v2956
        %v2958 = vmul.f32 %v2955, 1.442695
        %v2959 = vpow.pop %v2958
        %v2960 = vperm.slane %v2887, 2
        %v2961 = vmul.f32 %v2960, %v2942
        %v2962 = vmul.f32 %v2960, %v2943
        %v2963 = vmul.f32 %v2961, 1.442695
        %v2964 = vpow.pop %v2963
        %v2965 = vmul.f32 %v2962, 1.442695
        %v2966 = vpow.pop %v2965
        %v2967 = vperm.slane %v2887, 3
        %v2968 = vmul.f32 %v2967, %v2942
        %v2969 = vmul.f32 %v2967, %v2943
        %v2970 = vmul.f32 %v2968, 1.442695
        %v2971 = vpow.pop %v2970
        %v2972 = vmul.f32 %v2969, 1.442695
        %v2973 = vpow.pop %v2972
        %v2974 = vperm.slane %v2887, 4
        %v2975 = vmul.f32 %v2974, %v2942
        %v2976 = vmul.f32 %v2974, %v2943
        %v2977 = vmul.f32 %v2975, 1.442695
        %v2978 = vpow.pop %v2977
        %v2979 = vmul.f32 %v2976, 1.442695
        %v2980 = vpow.pop %v2979
        %v2981 = vperm.slane %v2887, 5
        %v2982 = vmul.f32 %v2981, %v2942
        %v2983 = vmul.f32 %v2981, %v2943
        %v2984 = vmul.f32 %v2982, 1.442695
        %v2985 = vpow.pop %v2984
        %v2986 = vmul.f32 %v2983, 1.442695
        %v2987 = vpow.pop %v2986
        %v2988 = vperm.slane %v2887, 6
        %v2989 = vmul.f32 %v2988, %v2942
        %v2990 = vmul.f32 %v2988, %v2943
        %v2991 = vmul.f32 %v2989, 1.442695
        %v2992 = vpow.pop %v2991
        %v2993 = vmul.f32 %v2990, 1.442695
        %v2994 = vpow.pop %v2993
        %v2995 = vperm.slane %v2887, 7
        %v2996 = vmul.f32 %v2995, %v2942
        %v2997 = vmul.f32 %v2995, %v2943
        %v2998 = vmul.f32 %v2996, 1.442695
        %v2999 = vpow.pop %v2998
        %v3000 = vmul.f32 %v2997, 1.442695
        %v3001 = vpow.pop %v3000
        %v3002 = vperm.slane %v2888, 0
        %v3003 = vmul.f32 %v3002, %v2942
        %v3004 = vmul.f32 %v3002, %v2943
        %v3005 = vmul.f32 %v3003, 1.442695
        %v3006 = vpow.pop %v3005
        %v3007 = vmul.f32 %v3004, 1.442695
        %v3008 = vpow.pop %v3007
        %v3009 = vperm.slane %v2888, 1
        %v3010 = vmul.f32 %v3009, %v2942
        %v3011 = vmul.f32 %v3009, %v2943
        %v3012 = vmul.f32 %v3010, 1.442695
        %v3013 = vpow.pop %v3012
        %v3014 = vmul.f32 %v3011, 1.442695
        %v3015 = vpow.pop %v3014
        %v3016 = vperm.slane %v2888, 2
        %v3017 = vmul.f32 %v3016, %v2942
        %v3018 = vmul.f32 %v3016, %v2943
        %v3019 = vmul.f32 %v3017, 1.442695
        %v3020 = vpow.pop %v3019
        %v3021 = vmul.f32 %v3018, 1.442695
        %v3022 = vpow.pop %v3021
        %v3023 = vperm.slane %v2888, 3
        %v3024 = vmul.f32 %v3023, %v2942
        %v3025 = vmul.f32 %v3023, %v2943
        %v3026 = vmul.f32 %v3024, 1.442695
        %v3027 = vpow.pop %v3026
        %v3028 = vmul.f32 %v3025, 1.442695
        %v3029 = vpow.pop %v3028
        %v3030 = vperm.slane %v2944, 0
        %3032 = vset.pattern.permute.xlu0 0
        %3033 = vperm.xlu0 %3032, %v2924
        %v3034 = vpop.permute.xlu0 %3033
        %3037 = vset.pattern.permute.xlu0 0
        %3038 = vperm.xlu0 %3037, %v2927
        %v3039 = vpop.permute.xlu0 %3038
        %v3041 = vmul.f32 %v3030, %v3034
        %v3042 = vmul.f32 %v3030, %v3039
        %v3043 = vperm.slane %v2944, 1
        %3044 = vset.pattern.permute.xlu0 1
        %3045 = vperm.xlu0 %3044, %v2924
        %v3046 = vpop.permute.xlu0 %3045
        %3048 = vset.pattern.permute.xlu0 1
        %3049 = vperm.xlu0 %3048, %v2927
        %v3050 = vpop.permute.xlu0 %3049
        %v3052 = vmul.f32 %v3043, %v3046
        %v3053 = vmul.f32 %v3043, %v3050
        %v3054 = vperm.slane %v2944, 2
        %3055 = vset.pattern.permute.xlu0 2
        %3056 = vperm.xlu0 %3055, %v2924
        %v3057 = vpop.permute.xlu0 %3056
        %3059 = vset.pattern.permute.xlu0 2
        %3060 = vperm.xlu0 %3059, %v2927
        %v3061 = vpop.permute.xlu0 %3060
        %v3063 = vmul.f32 %v3054, %v3057
        %v3064 = vmul.f32 %v3054, %v3061
        %v3065 = vperm.slane %v2944, 3
        %3066 = vset.pattern.permute.xlu0 3
        %3067 = vperm.xlu0 %3066, %v2924
        %v3068 = vpop.permute.xlu0 %3067
        %3070 = vset.pattern.permute.xlu0 3
        %3071 = vperm.xlu0 %3070, %v2927
        %v3072 = vpop.permute.xlu0 %3071
        %v3074 = vmul.f32 %v3065, %v3068
        %v3075 = vmul.f32 %v3065, %v3072
        %v3076 = vperm.slane %v2944, 4
        %3077 = vset.pattern.permute.xlu0 4
        %3078 = vperm.xlu0 %3077, %v2924
        %v3079 = vpop.permute.xlu0 %3078
        %3081 = vset.pattern.permute.xlu0 4
        %3082 = vperm.xlu0 %3081, %v2927
        %v3083 = vpop.permute.xlu0 %3082
        %v3085 = vmul.f32 %v3076, %v3079
        %v3086 = vmul.f32 %v3076, %v3083
        %v3087 = vperm.slane %v2944, 5
        %3088 = vset.pattern.permute.xlu0 5
        %3089 = vperm.xlu0 %3088, %v2924
        %v3090 = vpop.permute.xlu0 %3089
        %3092 = vset.pattern.permute.xlu0 5
        %3093 = vperm.xlu0 %3092, %v2927
        %v3094 = vpop.permute.xlu0 %3093
        %v3096 = vmul.f32 %v3087, %v3090
        %v3097 = vmul.f32 %v3087, %v3094
        %v3098 = vperm.slane %v2944, 6
        %3099 = vset.pattern.permute.xlu0 6
        %3100 = vperm.xlu0 %3099, %v2924
        %v3101 = vpop.permute.xlu0 %3100
        %3103 = vset.pattern.permute.xlu0 6
        %3104 = vperm.xlu0 %3103, %v2927
        %v3105 = vpop.permute.xlu0 %3104
        %v3107 = vmul.f32 %v3098, %v3101
        %v3108 = vmul.f32 %v3098, %v3105
        %v3109 = vperm.slane %v2944, 7
        %3110 = vset.pattern.permute.xlu0 7
        %3111 = vperm.xlu0 %3110, %v2924
        %v3112 = vpop.permute.xlu0 %3111
        %3114 = vset.pattern.permute.xlu0 7
        %3115 = vperm.xlu0 %3114, %v2927
        %v3116 = vpop.permute.xlu0 %3115
        %v3118 = vmul.f32 %v3109, %v3112
        %v3119 = vmul.f32 %v3109, %v3116
        %v3120 = vperm.slane %v2945, 0
        %3121 = vset.pattern.permute.xlu0 8
        %3122 = vperm.xlu0 %3121, %v2924
        %v3123 = vpop.permute.xlu0 %3122
        %3125 = vset.pattern.permute.xlu0 8
        %3126 = vperm.xlu0 %3125, %v2927
        %v3127 = vpop.permute.xlu0 %3126
        %v3129 = vmul.f32 %v3120, %v3123
        %v3130 = vmul.f32 %v3120, %v3127
        %v3131 = vperm.slane %v2945, 1
        %3132 = vset.pattern.permute.xlu0 9
        %3133 = vperm.xlu0 %3132, %v2924
        %v3134 = vpop.permute.xlu0 %3133
        %3136 = vset.pattern.permute.xlu0 9
        %3137 = vperm.xlu0 %3136, %v2927
        %v3138 = vpop.permute.xlu0 %3137
        %v3140 = vmul.f32 %v3131, %v3134
        %v3141 = vmul.f32 %v3131, %v3138
        %v3142 = vperm.slane %v2945, 2
        %3143 = vset.pattern.permute.xlu0 10
        %3144 = vperm.xlu0 %3143, %v2924
        %v3145 = vpop.permute.xlu0 %3144
        %3147 = vset.pattern.permute.xlu0 10
        %3148 = vperm.xlu0 %3147, %v2927
        %v3149 = vpop.permute.xlu0 %3148
        %v3151 = vmul.f32 %v3142, %v3145
        %v3152 = vmul.f32 %v3142, %v3149
        %v3153 = vperm.slane %v2945, 3
        %3154 = vset.pattern.permute.xlu0 11
        %3155 = vperm.xlu0 %3154, %v2924
        %v3156 = vpop.permute.xlu0 %3155
        %3158 = vset.pattern.permute.xlu0 11
        %3159 = vperm.xlu0 %3158, %v2927
        %v3160 = vpop.permute.xlu0 %3159
        %v3162 = vmul.f32 %v3153, %v3156
        %v3163 = vmul.f32 %v3153, %v3160
        %v3164 = vmul.f32 %v2950, 0.0
        %v3165 = vmul.f32 %v2952, 0.0
        %v3166 = vadd.f32 %v3164, %v3041
        %v3167 = vadd.f32 %v3165, %v3042
        %3169 = vset.pattern.permute.xlu0 0
        %3170 = vperm.xlu0 %3169, %v2930
        %v3171 = vpop.permute.xlu0 %3170
        %3174 = vset.pattern.permute.xlu0 0
        %3175 = vperm.xlu0 %3174, %v2933
        %v3176 = vpop.permute.xlu0 %3175
        %v3178 = vmul.f32 %v3166, %v3171
        %v3179 = vmul.f32 %v3167, %v3176
        %v3180 = vsel %vm734, %v3178, 0.0
        %v3181 = vsel %vm734, %v3179, 0.0
        %v3182 = vadd.f32 %v3180, %v3181
        %v3183 = vrot.slane %v3182, 4
        %v3184 = vadd.f32 %v3182, %v3183
        %v3185 = vrot.slane %v3184, 2
        %v3186 = vadd.f32 %v3184, %v3185
        %v3187 = vrot.slane %v3186, 1
        %v3188 = vadd.f32 %v3186, %v3187
        %v3189 = vmul.f32 %v3166, %v2957
        %v3190 = vmul.f32 %v3167, %v2959
        %v3191 = vadd.f32 %v3189, %v3052
        %v3192 = vadd.f32 %v3190, %v3053
        %3193 = vset.pattern.permute.xlu0 1
        %3194 = vperm.xlu0 %3193, %v2930
        %v3195 = vpop.permute.xlu0 %3194
        %3197 = vset.pattern.permute.xlu0 1
        %3198 = vperm.xlu0 %3197, %v2933
        %v3199 = vpop.permute.xlu0 %3198
        %v3201 = vmul.f32 %v3191, %v3195
        %v3202 = vmul.f32 %v3192, %v3199
        %v3203 = vsel %vm734, %v3201, 0.0
        %v3204 = vsel %vm734, %v3202, 0.0
        %v3205 = vadd.f32 %v3203, %v3204
        %v3206 = vrot.slane %v3205, 4
        %v3207 = vadd.f32 %v3205, %v3206
        %v3208 = vrot.slane %v3207, 2
        %v3209 = vadd.f32 %v3207, %v3208
        %v3210 = vrot.slane %v3209, 1
        %v3211 = vadd.f32 %v3209, %v3210
        %v3212 = vmul.f32 %v3191, %v2964
        %v3213 = vmul.f32 %v3192, %v2966
        %v3214 = vadd.f32 %v3212, %v3063
        %v3215 = vadd.f32 %v3213, %v3064
        %3216 = vset.pattern.permute.xlu0 2
        %3217 = vperm.xlu0 %3216, %v2930
        %v3218 = vpop.permute.xlu0 %3217
        %3220 = vset.pattern.permute.xlu0 2
        %3221 = vperm.xlu0 %3220, %v2933
        %v3222 = vpop.permute.xlu0 %3221
        %v3224 = vmul.f32 %v3214, %v3218
        %v3225 = vmul.f32 %v3215, %v3222
        %v3226 = vsel %vm734, %v3224, 0.0
        %v3227 = vsel %vm734, %v3225, 0.0
        %v3228 = vadd.f32 %v3226, %v3227
        %v3229 = vrot.slane %v3228, 4
        %v3230 = vadd.f32 %v3228, %v3229
        %v3231 = vrot.slane %v3230, 2
        %v3232 = vadd.f32 %v3230, %v3231
        %v3233 = vrot.slane %v3232, 1
        %v3234 = vadd.f32 %v3232, %v3233
        %v3235 = vmul.f32 %v3214, %v2971
        %v3236 = vmul.f32 %v3215, %v2973
        %v3237 = vadd.f32 %v3235, %v3074
        %v3238 = vadd.f32 %v3236, %v3075
        %3239 = vset.pattern.permute.xlu0 3
        %3240 = vperm.xlu0 %3239, %v2930
        %v3241 = vpop.permute.xlu0 %3240
        %3243 = vset.pattern.permute.xlu0 3
        %3244 = vperm.xlu0 %3243, %v2933
        %v3245 = vpop.permute.xlu0 %3244
        %v3247 = vmul.f32 %v3237, %v3241
        %v3248 = vmul.f32 %v3238, %v3245
        %v3249 = vsel %vm734, %v3247, 0.0
        %v3250 = vsel %vm734, %v3248, 0.0
        %v3251 = vadd.f32 %v3249, %v3250
        %v3252 = vrot.slane %v3251, 4
        %v3253 = vadd.f32 %v3251, %v3252
        %v3254 = vrot.slane %v3253, 2
        %v3255 = vadd.f32 %v3253, %v3254
        %v3256 = vrot.slane %v3255, 1
        %v3257 = vadd.f32 %v3255, %v3256
        %v3258 = vmul.f32 %v3237, %v2978
        %v3259 = vmul.f32 %v3238, %v2980
        %v3260 = vadd.f32 %v3258, %v3085
        %v3261 = vadd.f32 %v3259, %v3086
        %3262 = vset.pattern.permute.xlu0 4
        %3263 = vperm.xlu0 %3262, %v2930
        %v3264 = vpop.permute.xlu0 %3263
        %3266 = vset.pattern.permute.xlu0 4
        %3267 = vperm.xlu0 %3266, %v2933
        %v3268 = vpop.permute.xlu0 %3267
        %v3270 = vmul.f32 %v3260, %v3264
        %v3271 = vmul.f32 %v3261, %v3268
        %v3272 = vsel %vm734, %v3270, 0.0
        %v3273 = vsel %vm734, %v3271, 0.0
        %v3274 = vadd.f32 %v3272, %v3273
        %v3275 = vrot.slane %v3274, 4
        %v3276 = vadd.f32 %v3274, %v3275
        %v3277 = vrot.slane %v3276, 2
        %v3278 = vadd.f32 %v3276, %v3277
        %v3279 = vrot.slane %v3278, 1
        %v3280 = vadd.f32 %v3278, %v3279
        %v3281 = vmul.f32 %v3260, %v2985
        %v3282 = vmul.f32 %v3261, %v2987
        %v3283 = vadd.f32 %v3281, %v3096
        %v3284 = vadd.f32 %v3282, %v3097
        %3285 = vset.pattern.permute.xlu0 5
        %3286 = vperm.xlu0 %3285, %v2930
        %v3287 = vpop.permute.xlu0 %3286
        %3289 = vset.pattern.permute.xlu0 5
        %3290 = vperm.xlu0 %3289, %v2933
        %v3291 = vpop.permute.xlu0 %3290
        %v3293 = vmul.f32 %v3283, %v3287
        %v3294 = vmul.f32 %v3284, %v3291
        %v3295 = vsel %vm734, %v3293, 0.0
        %v3296 = vsel %vm734, %v3294, 0.0
        %v3297 = vadd.f32 %v3295, %v3296
        %v3298 = vrot.slane %v3297, 4
        %v3299 = vadd.f32 %v3297, %v3298
        %v3300 = vrot.slane %v3299, 2
        %v3301 = vadd.f32 %v3299, %v3300
        %v3302 = vrot.slane %v3301, 1
        %v3303 = vadd.f32 %v3301, %v3302
        %v3304 = vmul.f32 %v3283, %v2992
        %v3305 = vmul.f32 %v3284, %v2994
        %v3306 = vadd.f32 %v3304, %v3107
        %v3307 = vadd.f32 %v3305, %v3108
        %3308 = vset.pattern.permute.xlu0 6
        %3309 = vperm.xlu0 %3308, %v2930
        %v3310 = vpop.permute.xlu0 %3309
        %3312 = vset.pattern.permute.xlu0 6
        %3313 = vperm.xlu0 %3312, %v2933
        %v3314 = vpop.permute.xlu0 %3313
        %v3316 = vmul.f32 %v3306, %v3310
        %v3317 = vmul.f32 %v3307, %v3314
        %v3318 = vsel %vm734, %v3316, 0.0
        %v3319 = vsel %vm734, %v3317, 0.0
        %v3320 = vadd.f32 %v3318, %v3319
        %v3321 = vrot.slane %v3320, 4
        %v3322 = vadd.f32 %v3320, %v3321
        %v3323 = vrot.slane %v3322, 2
        %v3324 = vadd.f32 %v3322, %v3323
        %v3325 = vrot.slane %v3324, 1
        %v3326 = vadd.f32 %v3324, %v3325
        %v3327 = vmul.f32 %v3306, %v2999
        %v3328 = vmul.f32 %v3307, %v3001
        %v3329 = vadd.f32 %v3327, %v3118
        %v3330 = vadd.f32 %v3328, %v3119
        %3331 = vset.pattern.permute.xlu0 7
        %3332 = vperm.xlu0 %3331, %v2930
        %v3333 = vpop.permute.xlu0 %3332
        %3335 = vset.pattern.permute.xlu0 7
        %3336 = vperm.xlu0 %3335, %v2933
        %v3337 = vpop.permute.xlu0 %3336
        %v3339 = vmul.f32 %v3329, %v3333
        %v3340 = vmul.f32 %v3330, %v3337
        %v3341 = vsel %vm734, %v3339, 0.0
        %v3342 = vsel %vm734, %v3340, 0.0
        %v3343 = vadd.f32 %v3341, %v3342
        %v3344 = vrot.slane %v3343, 4
        %v3345 = vadd.f32 %v3343, %v3344
        %v3346 = vrot.slane %v3345, 2
        %v3347 = vadd.f32 %v3345, %v3346
        %v3348 = vrot.slane %v3347, 1
        %v3349 = vadd.f32 %v3347, %v3348
        %v3350 = vmul.f32 %v3329, %v3006
        %v3351 = vmul.f32 %v3330, %v3008
        %v3352 = vadd.f32 %v3350, %v3129
        %v3353 = vadd.f32 %v3351, %v3130
        %3354 = vset.pattern.permute.xlu0 8
        %3355 = vperm.xlu0 %3354, %v2930
        %v3356 = vpop.permute.xlu0 %3355
        %3358 = vset.pattern.permute.xlu0 8
        %3359 = vperm.xlu0 %3358, %v2933
        %v3360 = vpop.permute.xlu0 %3359
        %v3362 = vmul.f32 %v3352, %v3356
        %v3363 = vmul.f32 %v3353, %v3360
        %v3364 = vsel %vm734, %v3362, 0.0
        %v3365 = vsel %vm734, %v3363, 0.0
        %v3366 = vadd.f32 %v3364, %v3365
        %v3367 = vrot.slane %v3366, 4
        %v3368 = vadd.f32 %v3366, %v3367
        %v3369 = vrot.slane %v3368, 2
        %v3370 = vadd.f32 %v3368, %v3369
        %v3371 = vrot.slane %v3370, 1
        %v3372 = vadd.f32 %v3370, %v3371
        %v3373 = vmul.f32 %v3352, %v3013
        %v3374 = vmul.f32 %v3353, %v3015
        %v3375 = vadd.f32 %v3373, %v3140
        %v3376 = vadd.f32 %v3374, %v3141
        %3377 = vset.pattern.permute.xlu0 9
        %3378 = vperm.xlu0 %3377, %v2930
        %v3379 = vpop.permute.xlu0 %3378
        %3381 = vset.pattern.permute.xlu0 9
        %3382 = vperm.xlu0 %3381, %v2933
        %v3383 = vpop.permute.xlu0 %3382
        %v3385 = vmul.f32 %v3375, %v3379
        %v3386 = vmul.f32 %v3376, %v3383
        %v3387 = vsel %vm734, %v3385, 0.0
        %v3388 = vsel %vm734, %v3386, 0.0
        %v3389 = vadd.f32 %v3387, %v3388
        %v3390 = vrot.slane %v3389, 4
        %v3391 = vadd.f32 %v3389, %v3390
        %v3392 = vrot.slane %v3391, 2
        %v3393 = vadd.f32 %v3391, %v3392
        %v3394 = vrot.slane %v3393, 1
        %v3395 = vadd.f32 %v3393, %v3394
        %v3396 = vmul.f32 %v3375, %v3020
        %v3397 = vmul.f32 %v3376, %v3022
        %v3398 = vadd.f32 %v3396, %v3151
        %v3399 = vadd.f32 %v3397, %v3152
        %3400 = vset.pattern.permute.xlu0 10
        %3401 = vperm.xlu0 %3400, %v2930
        %v3402 = vpop.permute.xlu0 %3401
        %3404 = vset.pattern.permute.xlu0 10
        %3405 = vperm.xlu0 %3404, %v2933
        %v3406 = vpop.permute.xlu0 %3405
        %v3408 = vmul.f32 %v3398, %v3402
        %v3409 = vmul.f32 %v3399, %v3406
        %v3410 = vsel %vm734, %v3408, 0.0
        %v3411 = vsel %vm734, %v3409, 0.0
        %v3412 = vadd.f32 %v3410, %v3411
        %v3413 = vrot.slane %v3412, 4
        %v3414 = vadd.f32 %v3412, %v3413
        %v3415 = vrot.slane %v3414, 2
        %v3416 = vadd.f32 %v3414, %v3415
        %v3417 = vrot.slane %v3416, 1
        %v3418 = vadd.f32 %v3416, %v3417
        %v3419 = vmul.f32 %v3398, %v3027
        %v3420 = vmul.f32 %v3399, %v3029
        %v3421 = vadd.f32 %v3419, %v3162
        %v3422 = vadd.f32 %v3420, %v3163
        %3423 = vset.pattern.permute.xlu0 11
        %3424 = vperm.xlu0 %3423, %v2930
        %v3425 = vpop.permute.xlu0 %3424
        %3427 = vset.pattern.permute.xlu0 11
        %3428 = vperm.xlu0 %3427, %v2933
        %v3429 = vpop.permute.xlu0 %3428
        %v3431 = vmul.f32 %v3421, %v3425
        %v3432 = vmul.f32 %v3422, %v3429
        %v3433 = vsel %vm734, %v3431, 0.0
        %v3434 = vsel %vm734, %v3432, 0.0
        %v3435 = vadd.f32 %v3433, %v3434
        %v3436 = vrot.slane %v3435, 4
        %v3437 = vadd.f32 %v3435, %v3436
        %v3438 = vrot.slane %v3437, 2
        %v3439 = vadd.f32 %v3437, %v3438
        %v3440 = vrot.slane %v3439, 1
        %v3441 = vadd.f32 %v3439, %v3440
        %v3442 = vsel %vm1135, %v3188, %v3211
        %v3443 = vsel %vm1147, %v3442, %v3234
        %v3444 = vsel %vm1159, %v3443, %v3257
        %v3445 = vsel %vm603, %v3444, %v3280
        %v3446 = vsel %vm1874, %v3445, %v3303
        %v3447 = vsel %vm1876, %v3446, %v3326
        %v3448 = vsel %vm1878, %v3447, %v3349
        %v3449 = vsel %vm1135, %v3372, %v3395
        %v3450 = vsel %vm1147, %v3449, %v3418
        %v3451 = vsel %vm1159, %v3450, %v3441
        %v3452 = vperm.slane %v2215, 4
        %v3453 = vmul.f32 %v3452, %v2781
        %v3454 = vmul.f32 %v3452, %v2782
        %v3455 = vadd.f32 %v3448, %v3453
        %v3456 = vadd.f32 %v3451, %v3454
        %v3457 = vxor.u32 %v2309, 2147483648
        %v3458 = vxor.u32 %v2312, 2147483648
        %v3459 = vmul.f32 %v3457, 1.442695
        %v3460 = vpow.pop %v3459
        %v3461 = vmul.f32 %v3458, 1.442695
        %v3462 = vpow.pop %v3461
        %v3463 = vadd.f32 %v3460, 1.0
        %v3464 = vadd.f32 %v3462, 1.0
        %v3465 = vrcp.pop %v3463
        %v3466 = vmul.f32 %v3463, %v3465
        %v3467 = vsub.f32 1.0, %v3466
        %v3468 = vmul.f32 %v3465, %v3467
        %v3469 = vadd.f32 %v3465, %v3468
        %vm3470 = vweird.f32 %v3463
        %vm3471 = vweird.f32 %v3465
        %vm3472 = vmor %vm3470, %vm3471
        %v3473 = vsel %vm3472, %v3465, %v3469
        %v3474 = vand.u32 2147483647, %v3463
        %vm3475 = vcmp.eq.f32.partialorder %v3474, 8.507059e+37
        %v3476 = vand.u32 %v3463, 2147483648
        %v3477 = vor.u32 1.1754944e-38, %v3476
        %v3478 = vsel %vm3475, %v3477, %v3473
        %v3479 = vmul.f32 1.0, %v3478
        %v3480 = vrcp.pop %v3464
        %v3481 = vmul.f32 %v3464, %v3480
        %v3482 = vsub.f32 1.0, %v3481
        %v3483 = vmul.f32 %v3480, %v3482
        %v3484 = vadd.f32 %v3480, %v3483
        %vm3485 = vweird.f32 %v3464
        %vm3486 = vweird.f32 %v3480
        %vm3487 = vmor %vm3485, %vm3486
        %v3488 = vsel %vm3487, %v3480, %v3484
        %v3489 = vand.u32 2147483647, %v3464
        %vm3490 = vcmp.eq.f32.partialorder %v3489, 8.507059e+37
        %v3491 = vand.u32 %v3464, 2147483648
        %v3492 = vor.u32 1.1754944e-38, %v3491
        %v3493 = vsel %vm3490, %v3492, %v3488
        %v3494 = vmul.f32 1.0, %v3493
        %v3495 = vmul.f32 %v2309, %v3479
        %v3496 = vmul.f32 %v2312, %v3494
        %v3497 = vmul.f32 %v3455, %v3495
        %v3498 = vmul.f32 %v3456, %v3496
        %v3499 = vmul.f32 %v2700, %v2700
        %v3500 = vmul.f32 %v2701, %v2701
        %v3501 = vsel %vm734, %v3499, 0.0
        %3502 = vadd.xlane.f32.xlu0 %v3501
        %v3503 = vpop.xlane.xlu0 %3502
        %v3504 = vsel %vm1935, %v3500, 0.0
        %3505 = vadd.xlane.f32.xlu0 %v3504
        %v3506 = vpop.xlane.xlu0 %3505
        %v3507 = vmul.f32 %v3503, %v1945
        %v3508 = vmul.f32 %v3506, %v1945
        %v3509 = vadd.f32 %v3507, 1e-06
        %v3510 = vadd.f32 %v3508, 1e-06
        %v3511 = vrsqrt.pop %v3509
        %v3512 = vmul.f32 %v3511, %v3509
        %v3513 = vmul.f32 %v3512, %v3511
        %v3514 = vmul.f32 0.5, %v3513
        %v3515 = vsub.f32 1.5, %v3514
        %v3516 = vmul.f32 %v3511, %v3515
        %vm3517 = vweird.f32 %v3509
        %vm3518 = vweird.f32 %v3511
        %vm3519 = vmor %vm3517, %vm3518
        %v3520 = vsel %vm3519, %v3511, %v3516
        %v3521 = vrsqrt.pop %v3510
        %v3522 = vmul.f32 %v3521, %v3510
        %v3523 = vmul.f32 %v3522, %v3521
        %v3524 = vmul.f32 0.5, %v3523
        %v3525 = vsub.f32 1.5, %v3524
        %v3526 = vmul.f32 %v3521, %v3525
        %vm3527 = vweird.f32 %v3510
        %vm3528 = vweird.f32 %v3521
        %vm3529 = vmor %vm3527, %vm3528
        %v3530 = vsel %vm3529, %v3521, %v3526
        %v3531 = vmul.f32 %v2700, %v3520
        %v3532 = vmul.f32 %v2701, %v3530
        %v3533 = vperm.slane %v2215, 5
        %v3534 = vmul.f32 %v3531, %v3533
        %v3535 = vmul.f32 %v3532, %v3533
        %v3536 = vmul.f32 %v3497, %v3497
        %v3537 = vmul.f32 %v3498, %v3498
        %v3538 = vsel %vm734, %v3536, 0.0
        %3539 = vadd.xlane.f32.xlu0 %v3538
        %v3540 = vpop.xlane.xlu0 %3539
        %v3541 = vsel %vm1935, %v3537, 0.0
        %3542 = vadd.xlane.f32.xlu0 %v3541
        %v3543 = vpop.xlane.xlu0 %3542
        %v3544 = vmul.f32 %v3540, %v1945
        %v3545 = vmul.f32 %v3543, %v1945
        %v3546 = vadd.f32 %v3544, 1e-06
        %v3547 = vadd.f32 %v3545, 1e-06
        %v3548 = vrsqrt.pop %v3546
        %v3549 = vmul.f32 %v3548, %v3546
        %v3550 = vmul.f32 %v3549, %v3548
        %v3551 = vmul.f32 0.5, %v3550
        %v3552 = vsub.f32 1.5, %v3551
        %v3553 = vmul.f32 %v3548, %v3552
        %vm3554 = vweird.f32 %v3546
        %vm3555 = vweird.f32 %v3548
        %vm3556 = vmor %vm3554, %vm3555
        %v3557 = vsel %vm3556, %v3548, %v3553
        %v3558 = vrsqrt.pop %v3547
        %v3559 = vmul.f32 %v3558, %v3547
        %v3560 = vmul.f32 %v3559, %v3558
        %v3561 = vmul.f32 0.5, %v3560
        %v3562 = vsub.f32 1.5, %v3561
        %v3563 = vmul.f32 %v3558, %v3562
        %vm3564 = vweird.f32 %v3547
        %vm3565 = vweird.f32 %v3558
        %vm3566 = vmor %vm3564, %vm3565
        %v3567 = vsel %vm3566, %v3558, %v3563
        %v3568 = vmul.f32 %v3497, %v3557
        %v3569 = vmul.f32 %v3498, %v3567
        %v3570 = vperm.slane %v2215, 6
        %v3571 = vmul.f32 %v3568, %v3570
        %v3572 = vmul.f32 %v3569, %v3570
        %v3573 = vadd.f32 %v3534, %v3571
        %v3574 = vadd.f32 %v3535, %v3572
        %v3575 = vmul.f32 %v3573, 0.5
        %v3576 = vmul.f32 %v3574, 0.5
        %s3577 = scalar_lea.vmem %s15, 64
        %v3578 = vld [vmem:[%s3577] sm:$0xff]
        %v3579 = vld [vmem:[%s3577 + $0x8] sm:$0xff]
        %v3580 = vld [vmem:[%s3577 + $0x10] sm:$0xff]
        %v3581 = vld [vmem:[%s3577 + $0x18] sm:$0xff]
        %v3582 = vld [vmem:[%s3577 + $0x20] sm:$0xff]
        %v3583 = vld [vmem:[%s3577 + $0x28] sm:$0xff]
        %v3584 = vld [vmem:[%s3577 + $0x30] sm:$0xff]
        %v3585 = vld [vmem:[%s3577 + $0x38] sm:$0xff]
        %v3587 = vsel %vm734, %v3575, 0
        %v3590 = vsel %vm734, %v3576, 0
        %3592 = vmatpush.msra.mxu0 0.0
        %3593 = vmatpush.msra.mxu0 0.0
        %3594 = vmatpush.msra.mxu0 0.0
        %3595 = vmatpush.msra.mxu0 0.0
        %3596 = vmatpush.msra.mxu0 0.0
        %3597 = vmatpush.msra.mxu0 0.0
        %3598 = vmatpush.msra.mxu0 0.0
        %3599 = vmatpush.msra.mxu0 0.0
        %3600 = vmatpush.msra.mxu0 %v3585
        %3601 = vmatpush.msra.mxu0 %v3584
        %3602 = vmatpush.msra.mxu0 %v3583
        %3603 = vmatpush.msra.mxu0 %v3582
        %3604 = vmatpush.msra.mxu0 %v3581
        %3605 = vmatpush.msra.mxu0 %v3580
        %3606 = vmatpush.msra.mxu0 %v3579
        %3607 = vmatpush.msra.mxu0 %v3578
        %3608 = vmatmul.f32.gmra.mxu0 %v3587
        %v3609 = vpop.f32.mrf.mxu0
        %v3610 = vadd.f32 0.0, %v3609
        %3611 = vmatmul.f32.gmra.mxu0 %v3590
        %v3612 = vpop.f32.mrf.mxu0
        %v3613 = vadd.f32 0.0, %v3612
        %3614 = vdwg.mxu0
        %v3615 = vadd.f32 %v2212, %v3610
        %v3616 = vadd.f32 %v2213, %v3613
        %v3617 = vmul.f32 %v3615, %v3615
        %v3618 = vmul.f32 %v3616, %v3616
        %v3619 = vsel %vm628, %v3617, 0.0
        %3620 = vadd.xlane.f32.xlu0 %v3619
        %v3621 = vpop.xlane.xlu0 %3620
        %v3622 = vsel %vm632, %v3618, 0.0
        %3623 = vadd.xlane.f32.xlu0 %v3622
        %v3624 = vpop.xlane.xlu0 %3623
        %v3625 = vmul.f32 %v3621, %v642
        %v3626 = vmul.f32 %v3624, %v642
        %v3627 = vadd.f32 %v3625, 1e-06
        %v3628 = vadd.f32 %v3626, 1e-06
        %v3629 = vrsqrt.pop %v3627
        %v3630 = vmul.f32 %v3629, %v3627
        %v3631 = vmul.f32 %v3630, %v3629
        %v3632 = vmul.f32 0.5, %v3631
        %v3633 = vsub.f32 1.5, %v3632
        %v3634 = vmul.f32 %v3629, %v3633
        %vm3635 = vweird.f32 %v3627
        %vm3636 = vweird.f32 %v3629
        %vm3637 = vmor %vm3635, %vm3636
        %v3638 = vsel %vm3637, %v3629, %v3634
        %v3639 = vrsqrt.pop %v3628
        %v3640 = vmul.f32 %v3639, %v3628
        %v3641 = vmul.f32 %v3640, %v3639
        %v3642 = vmul.f32 0.5, %v3641
        %v3643 = vsub.f32 1.5, %v3642
        %v3644 = vmul.f32 %v3639, %v3643
        %vm3645 = vweird.f32 %v3628
        %vm3646 = vweird.f32 %v3639
        %vm3647 = vmor %vm3645, %vm3646
        %v3648 = vsel %vm3647, %v3639, %v3644
        %v3649 = vmul.f32 %v3615, %v3638
        %v3650 = vmul.f32 %v3616, %v3648
        %v3651 = vperm.slane %v2215, 1
        %v3652 = vmul.f32 %v3649, %v3651
        %v3653 = vmul.f32 %v3650, %v3651
        %s3654 = scalar_lea.vmem %s16, 32
        %v3655 = vld [vmem:[%s3654] sm:$0xff]
        %v3656 = vld [vmem:[%s3654 + $0x8] sm:$0xff]
        %v3657 = vld [vmem:[%s3654 + $0x10] sm:$0xff]
        %v3658 = vld [vmem:[%s3654 + $0x18] sm:$0xff]
        %v3660 = vsel %vm628, %v3652, 0
        %v3663 = vsel %vm628, %v3653, 0
        %3665 = vmatpush.msra.mxu0 0.0
        %3666 = vmatpush.msra.mxu0 0.0
        %3667 = vmatpush.msra.mxu0 0.0
        %3668 = vmatpush.msra.mxu0 0.0
        %3669 = vmatpush.msra.mxu0 0.0
        %3670 = vmatpush.msra.mxu0 0.0
        %3671 = vmatpush.msra.mxu0 0.0
        %3672 = vmatpush.msra.mxu0 0.0
        %3673 = vmatpush.msra.mxu0 0.0
        %3674 = vmatpush.msra.mxu0 0.0
        %3675 = vmatpush.msra.mxu0 0.0
        %3676 = vmatpush.msra.mxu0 0.0
        %3677 = vmatpush.msra.mxu0 %v3658
        %3678 = vmatpush.msra.mxu0 %v3657
        %3679 = vmatpush.msra.mxu0 %v3656
        %3680 = vmatpush.msra.mxu0 %v3655
        %3681 = vmatmul.f32.gmra.mxu0 %v3660
        %v3682 = vpop.f32.mrf.mxu0
        %v3683 = vadd.f32 0.0, %v3682
        %3684 = vmatmul.f32.gmra.mxu0 %v3663
        %v3685 = vpop.f32.mrf.mxu0
        %v3686 = vadd.f32 0.0, %v3685
        %3687 = vdwg.mxu0
        %v3688 = vxor.u32 %v3683, 2147483648
        %v3689 = vxor.u32 %v3686, 2147483648
        %v3690 = vmul.f32 %v3688, 1.442695
        %v3691 = vpow.pop %v3690
        %v3692 = vmul.f32 %v3689, 1.442695
        %v3693 = vpow.pop %v3692
        %v3694 = vadd.f32 %v3691, 1.0
        %v3695 = vadd.f32 %v3693, 1.0
        %v3696 = vrcp.pop %v3694
        %v3697 = vmul.f32 %v3694, %v3696
        %v3698 = vsub.f32 1.0, %v3697
        %v3699 = vmul.f32 %v3696, %v3698
        %v3700 = vadd.f32 %v3696, %v3699
        %vm3701 = vweird.f32 %v3694
        %vm3702 = vweird.f32 %v3696
        %vm3703 = vmor %vm3701, %vm3702
        %v3704 = vsel %vm3703, %v3696, %v3700
        %v3705 = vand.u32 2147483647, %v3694
        %vm3706 = vcmp.eq.f32.partialorder %v3705, 8.507059e+37
        %v3707 = vand.u32 %v3694, 2147483648
        %v3708 = vor.u32 1.1754944e-38, %v3707
        %v3709 = vsel %vm3706, %v3708, %v3704
        %v3710 = vmul.f32 1.0, %v3709
        %v3711 = vrcp.pop %v3695
        %v3712 = vmul.f32 %v3695, %v3711
        %v3713 = vsub.f32 1.0, %v3712
        %v3714 = vmul.f32 %v3711, %v3713
        %v3715 = vadd.f32 %v3711, %v3714
        %vm3716 = vweird.f32 %v3695
        %vm3717 = vweird.f32 %v3711
        %vm3718 = vmor %vm3716, %vm3717
        %v3719 = vsel %vm3718, %v3711, %v3715
        %v3720 = vand.u32 2147483647, %v3695
        %vm3721 = vcmp.eq.f32.partialorder %v3720, 8.507059e+37
        %v3722 = vand.u32 %v3695, 2147483648
        %v3723 = vor.u32 1.1754944e-38, %v3722
        %v3724 = vsel %vm3721, %v3723, %v3719
        %v3725 = vmul.f32 1.0, %v3724
        %v3726 = vmul.f32 %v3683, %v3710
        %v3727 = vmul.f32 %v3686, %v3725
        %3730 = vrot.lane.b32.xlu0 %v3683, 64
        %v3731 = vpop.permute.xlu0 %3730
        %3732 = vrot.lane.b32.xlu0 %v3686, 64
        %v3733 = vpop.permute.xlu0 %3732
        %v3736 = vmul.f32 %v3726, %v3731
        %v3737 = vmul.f32 %v3727, %v3733
        %s3738 = scalar_lea.vmem %s17, 64
        %v3739 = vld [vmem:[%s3738] sm:$0xff]
        %v3740 = vld [vmem:[%s3738 + $0x8] sm:$0xff]
        %v3741 = vld [vmem:[%s3738 + $0x10] sm:$0xff]
        %v3742 = vld [vmem:[%s3738 + $0x18] sm:$0xff]
        %v3743 = vld [vmem:[%s3738 + $0x20] sm:$0xff]
        %v3744 = vld [vmem:[%s3738 + $0x28] sm:$0xff]
        %v3745 = vld [vmem:[%s3738 + $0x30] sm:$0xff]
        %v3746 = vld [vmem:[%s3738 + $0x38] sm:$0xff]
        %v3748 = vsel %vm734, %v3736, 0
        %v3751 = vsel %vm734, %v3737, 0
        %3753 = vmatpush.msra.mxu0 0.0
        %3754 = vmatpush.msra.mxu0 0.0
        %3755 = vmatpush.msra.mxu0 0.0
        %3756 = vmatpush.msra.mxu0 0.0
        %3757 = vmatpush.msra.mxu0 0.0
        %3758 = vmatpush.msra.mxu0 0.0
        %3759 = vmatpush.msra.mxu0 0.0
        %3760 = vmatpush.msra.mxu0 0.0
        %3761 = vmatpush.msra.mxu0 %v3746
        %3762 = vmatpush.msra.mxu0 %v3745
        %3763 = vmatpush.msra.mxu0 %v3744
        %3764 = vmatpush.msra.mxu0 %v3743
        %3765 = vmatpush.msra.mxu0 %v3742
        %3766 = vmatpush.msra.mxu0 %v3741
        %3767 = vmatpush.msra.mxu0 %v3740
        %3768 = vmatpush.msra.mxu0 %v3739
        %3769 = vmatmul.f32.gmra.mxu0 %v3748
        %v3770 = vpop.f32.mrf.mxu0
        %v3771 = vadd.f32 0.0, %v3770
        %3772 = vmatmul.f32.gmra.mxu0 %v3751
        %v3773 = vpop.f32.mrf.mxu0
        %v3774 = vadd.f32 0.0, %v3773
        %3775 = vdwg.mxu0
        %v3776 = vadd.f32 %v3615, %v3771
        %v3777 = vadd.f32 %v3616, %v3774
        %vm3778 = vcmask 261124
        %3779 = vst.msk [vmem:[%s593 - $0x4] sm:$0xf0] %vm3778, %v3776
        %3780 = vst.msk [vmem:[%s593 + $0x4] sm:$0xf] %vm632, %v3777
        %s3781 = sand.u32 %s445, 1
        %s3782 = scalar_lea.sflag [#allocation3], %s3781
        %s3783 = sand.u32 %s445, 1
        %s3784 = smul.addr %s3783, 8
        %s3785 = scalar_lea.vmem [#allocation2], %s3784
        // Predicated region
        $region97: #{simplified_hymba.1} parent=95 // pred_check
          %p3786 = pneg %p455
        $region98: #{simplified_hymba.1} parent=95 // pred_check_branch
          %3788 = sbr.rel (%p3786) target = $region100
        $region99: #{simplified_hymba.1} parent=95 // pred_region
          %3790 = vsyncadd %s3782, 0
          %s3791 = smul.addr %s33, 8
          %s3792 = scalar_lea.hbm %s19, %s3791
          %s3794 = sshll.u32 %s3785, 4
          %s3795 = int_to_ptr.vmem [resolvable:$true] %s3794
          %s3796 = sshll.u32 %s3792, 4
          %s3797 = int_to_ptr.hbm [resolvable:$true] %s3796
          %3799 = dma.vmem_to_hbm [thread:$0]  %s3795, 128, %s3797, %s3782
        $region100: #{simplified_hymba.1} parent=95 // pred_fallthru
          _
      $region96: #{simplified_hymba.1} parent=5 // pred_fallthru
        _
      %p3800 = scmp.le.s32.totalorder 2, %s28
      // Predicated region
      $region101: #{simplified_hymba.1} parent=5 // pred_check
        %p3801 = pneg %p3800
      $region102: #{simplified_hymba.1} parent=5 // pred_check_branch
        %3803 = sbr.rel (%p3801) target = $region104
      $region103: #{simplified_hymba.1} parent=5 // pred_region
        %s3804 = ssub.s32 %s28, 2
        // Predicated region
        $region105: #{simplified_hymba.1} parent=103 // pred_check
          %p3805 = pneg %p461
        $region106: #{simplified_hymba.1} parent=103 // pred_check_branch
          %3807 = sbr.rel (%p3805) target = $region108
        $region107: #{simplified_hymba.1} parent=103 // pred_region
          %s3808 = sand.u32 %s446, 1
          %s3809 = scalar_lea.sflag [#allocation3], %s3808
          %s3810 = sand.u32 %s446, 1
          %s3811 = smul.addr %s3810, 8
          %s3812 = scalar_lea.vmem [#allocation2], %s3811
          %3814 = dma.done %s3809, 128
        $region108: #{simplified_hymba.1} parent=103 // pred_fallthru
          _
      $region104: #{simplified_hymba.1} parent=5 // pred_fallthru
        _
    $region6: #{simplified_hymba.1} parent=1 // loop_footer
      %s32 = sadd.s32 1, %s28
    $region7: #{simplified_hymba.1} parent=1 // loop_footer_branch
      %27 = sbr.rel target = $region3
    $region8: #{simplified_hymba.1} parent=1 // loop_exit
      _
    %3815 = vsyncpa [#allocation3], 1
    %s3816 = scalar_lea.sflag [#allocation3], 1
    %3817 = vsyncpa %s3816, 1

</llo_original>
